<compile_context>
chip_gen: v7x
topology: tpu7x:2x2x1
jax: 0.10.0
libtpu: 0.0.40
codegen_flags: <defaults>
</compile_context>

<pallas_src>
import functools
import math

import jax
import jax.numpy as jnp
import numpy as np
from jax import lax
from jax.experimental import pallas as pl
from jax.experimental.pallas import tpu as pltpu


def _serial_predictor_kernel(x_ref, w1_ref, b1_ref, w2_ref, b2_ref,
                             o_ref, win_ref, xtm_ref, otm_ref,
                             *, init, unroll):
    # x_ref:   (Bb, TC, F)   natural-layout input chunk (may contain NaN)
    # w1_ref:  (SS*F, H)     fused first-layer weight, bf16
    # b1_ref:  (1, H)        f32
    # w2_ref:  (H, F)        bf16
    # b2_ref:  (1, F)        f32
    # o_ref:   (Bb, TC, F)   imputed output chunk (natural layout)
    # win_ref: (Bb, SS*F)    rolling window, persists across chunk grid steps
    # xtm_ref: (TC, Bb, F)   time-major input staging scratch
    # otm_ref: (TC, Bb, F)   time-major output staging scratch
    bb, tc, f = x_ref.shape
    hdim = b1_ref.shape[1]
    ss = win_ref.shape[1] // f
    split = ss > 1

    # --- fold the (B, T, F) -> time-major relayout into the kernel -----------
    # (replaces two wrapper-side XLA transposes = 4 extra full HBM passes).
    # Only static indexing is used, so this always lowers.
    # TODO(synk): a pltpu.einshape relayout would use fewer masked stores.
    for b in range(bb):                       # static Python loop, bb is small
        xtm_ref[:, b, :] = x_ref[b]

    # Initialize the rolling window on the first chunk of each batch shard.
    @pl.when(pl.program_id(1) == 0)
    def _():
        win_ref[...] = jnp.full(win_ref.shape, init, dtype=win_ref.dtype)

    # Hoist weight loads / bias broadcasts out of the serial loop
    # (JAX does not CSE broadcast_in_dim inside the loop body).
    if split:
        w1_old = w1_ref[:(ss - 1) * f, :]     # ((SS-1)*F, H) bf16, off critical path
    w1_new = w1_ref[(ss - 1) * f:, :]         # (F, H)        bf16, dependent slice
    w2 = w2_ref[...]                          # (H, F)        bf16
    b1 = jnp.broadcast_to(b1_ref[...], (bb, hdim))   # (Bb, H) f32
    b2 = jnp.broadcast_to(b2_ref[...], (bb, f))      # (Bb, F) f32

    def step(j, carry):
        if split:
            win_old, prev = carry
            # Contribution of the SS-1 older rows: independent of the row produced
            # on the previous iteration, so with unrolling it can overlap the
            # previous step's dependent chain.
            pre = jnp.dot(win_old.astype(jnp.bfloat16), w1_old,
                          preferred_element_type=jnp.float32)
            # Serial critical path: only the newest row's K = F slice.
            pre = pre + jnp.dot(prev.astype(jnp.bfloat16), w1_new,
                                preferred_element_type=jnp.float32) + b1
        else:
            prev = carry
            pre = jnp.dot(prev.astype(jnp.bfloat16), w1_new,
                          preferred_element_type=jnp.float32) + b1
        hid = jnp.tanh(pre)
        pred = jnp.dot(hid.astype(jnp.bfloat16), w2,
                       preferred_element_type=jnp.float32) + b2       # (Bb, F)

        row = xtm_ref[j]                                              # (Bb, F)
        # pred is finite for finite weights/biases, so the reference's trailing
        # NaN scrub is a no-op and is dropped from the serial chain.
        filled = jnp.where(jnp.isnan(row), pred, row)
        otm_ref[j] = filled

        if split:
            new_old = prev if ss == 2 else jnp.concatenate(
                [win_old[:, f:], prev], axis=-1)
            return new_old, filled
        return filled

    if split:
        carry0 = (win_ref[:, :(ss - 1) * f], win_ref[:, (ss - 1) * f:])
        win_old, prev = lax.fori_loop(0, tc, step, carry0, unroll=unroll)
        win_ref[...] = jnp.concatenate([win_old, prev], axis=-1)
    else:
        win_ref[...] = lax.fori_loop(0, tc, step, win_ref[...], unroll=unroll)

    # time-major staging -> natural-layout output block
    for b in range(bb):
        o_ref[b] = otm_ref[:, b, :]


def serial_predictor_forward(x, w1, b1, w2, b2, *, init=-1.0, t_chunk=512,
                             batch_shards=None):
    """x: (B, T, F) float (NaN = missing). Returns imputed (B, T, F) float32."""
    B, T, F = x.shape
    SS, Fw, H = w1.shape
    assert Fw == F and w2.shape == (H, F)
    assert b1.shape == (1, H) and b2.shape == (1, F)

    init = float(init)
    if math.isnan(init):
        init = -1.0          # reference semantics scrub window NaNs to -1

    unroll = 8

    # Batch sharding across TensorCores (v7x has 2 TCs/chip). On 1-TC chips the
    # extra grid axis stays size 1 (splitting there would only serialize work).
    if batch_shards is None:
        batch_shards = int(getattr(jax.devices()[0], "num_cores", 1) or 1)
    nb = batch_shards if (batch_shards > 1 and B % batch_shards == 0) else 1
    Bb = B // nb

    x = x.astype(jnp.float32)
    # Fuse the SS per-position weights into one (SS*F, H) contraction weight and
    # ship both weight matrices in bf16 (single-pass MXU matmuls); f32 accumulate.
    w1_flat = jnp.reshape(w1.astype(jnp.float32), (SS * F, H)).astype(jnp.bfloat16)
    w2_bf = w2.astype(jnp.bfloat16)
    b1 = b1.astype(jnp.float32)
    b2 = b2.astype(jnp.float32)

    # Chunk size: multiple of the unroll factor (keeps the time dim of the x/out
    # blocks sublane-aligned). Sized against a VMEM budget that is safe on v7x
    # (64 MiB physical VMEM) as well as v5e/v6e.
    tc = max(unroll, min(int(t_chunk), T))
    tc = -(-tc // unroll) * unroll
    bytes_per_t = Bb * F * 4
    weight_bytes = 2 * ((SS * F * H + H * F) * 2 + (H + F) * 4)   # double-buffered
    vmem_budget = 40 * 1024 * 1024
    # footprint ~= 2x in blocks + 2x out blocks + 2 time-major staging scratches
    while tc > unroll and 6 * tc * bytes_per_t + weight_bytes > vmem_budget:
        tc -= unroll
    n_chunks = -(-T // tc)
    T_pad = n_chunks * tc
    if T_pad != T:
        x = jnp.pad(x, ((0, 0), (0, T_pad - T), (0, 0)))   # finite (0.0) pad
    footprint = 6 * tc * bytes_per_t + weight_bytes + Bb * SS * F * 4
    vmem_limit = int(min(max(footprint + (4 << 20), 16 * 1024 * 1024),
                         64 * 1024 * 1024))

    kernel = functools.partial(_serial_predictor_kernel, init=init, unroll=unroll)

    out = pl.pallas_call(
        kernel,
        out_shape=jax.ShapeDtypeStruct((B, T_pad, F), jnp.float32),
        grid_spec=pltpu.PrefetchScalarGridSpec(
            num_scalar_prefetch=0,
            grid=(nb, n_chunks),
            in_specs=[
                pl.BlockSpec((Bb, tc, F), lambda b, t: (b, t, 0)),   # x (streamed)
                pl.BlockSpec((SS * F, H), lambda b, t: (0, 0)),      # fused w1 (bf16)
                pl.BlockSpec((1, H), lambda b, t: (0, 0)),           # b1
                pl.BlockSpec((H, F), lambda b, t: (0, 0)),           # w2 (bf16)
                pl.BlockSpec((1, F), lambda b, t: (0, 0)),           # b2
            ],
            out_specs=pl.BlockSpec((Bb, tc, F), lambda b, t: (b, t, 0)),
            scratch_shapes=[
                pltpu.VMEM((Bb, SS * F), jnp.float32),   # rolling window (carried)
                pltpu.VMEM((tc, Bb, F), jnp.float32),    # time-major input staging
                pltpu.VMEM((tc, Bb, F), jnp.float32),    # time-major output staging
            ],
        ),
        compiler_params=pltpu.CompilerParams(
            dimension_semantics=("parallel", "arbitrary"),
            vmem_limit_bytes=vmem_limit,
        ),
    )(x, w1_flat, b1, w2_bf, b2)

    return out[:, :T, :]


def _reference(x, w1, b1, w2, b2, *, init=-1.0):
    """Pure-JAX f32 reference of the fast_forward semantics (for verification)."""
    B, T, F = x.shape
    SS, _, H = w1.shape
    state = jnp.concatenate(
        [jnp.full((B, SS, F), init, dtype=jnp.float32), x.astype(jnp.float32)],
        axis=1)
    outs = []
    for i in range(T):
        window = state[:, i:i + SS, :]
        window = jnp.where(jnp.isnan(window), -1.0, window)
        h = jnp.tanh(jnp.einsum('bsf,sfh->bh', window, w1) + b1)
        pred = h @ w2 + b2
        row = x[:, i, :]
        filled = jnp.where(jnp.isnan(row), pred, row)
        filled = jnp.where(jnp.isnan(filled), -1.0, filled)
        state = state.at[:, i + SS, :].set(filled)
        outs.append(filled)
    return jnp.stack(outs, axis=1)


if __name__ == "__main__":
    B, T, F = 8, 22, 128          # batch, sequence length, features
    SS, H = 4, 128                # size_subsequent, predictor hidden width

    key = jax.random.PRNGKey(0)
    kx, kmask, kw1, kw2 = jax.random.split(key, 4)

    x = jax.random.normal(kx, (B, T, F), dtype=jnp.float32)
    # Inject missing values (NaNs) deterministically.
    nan_mask = jax.random.uniform(kmask, (B, T, F)) < 0.15
    x = jnp.where(nan_mask, jnp.nan, x)

    # Deterministic synthetic predictor parameters.
    w1 = jax.random.normal(kw1, (SS, F, H), dtype=jnp.float32) / np.sqrt(SS * F)
    b1 = jnp.zeros((1, H), dtype=jnp.float32)
    w2 = jax.random.normal(kw2, (H, F), dtype=jnp.float32) / np.sqrt(H)
    b2 = jnp.zeros((1, F), dtype=jnp.float32)

    ref = _reference(x, w1, b1, w2, b2, init=-1.0)

    # Small chunk so the test exercises multi-chunk streaming, the cross-chunk
    # window carry, and the padded final chunk (T=22, tc=8 -> 3 chunks).
    # Tolerance reflects bf16 MXU inputs vs the f32 reference.
    out = serial_predictor_forward(x, w1, b1, w2, b2, init=-1.0, t_chunk=8)
    out = jax.block_until_ready(out)
    np.testing.assert_allclose(np.asarray(out), np.asarray(ref),
                               rtol=5e-2, atol=5e-2)
    assert out.shape == (B, T, F)
    assert not bool(jnp.isnan(out).any())

    # Also exercise the batch-sharded (v7x-targeted) grid path explicitly.
    out2 = serial_predictor_forward(x, w1, b1, w2, b2, init=-1.0, t_chunk=8,
                                    batch_shards=2)
    out2 = jax.block_until_ready(out2)
    np.testing.assert_allclose(np.asarray(out2), np.asarray(ref),
                               rtol=5e-2, atol=5e-2)

    print("KERNEL_OK")
</pallas_src>

<mosaic_0001>
module attributes {stable_mosaic.version = 11 : i64} {
  func.func @_serial_predictor_kernel(%arg0: i32, %arg1: i32, %arg2: memref<8x8x128xf32, #tpu.memory_space<vmem>>, %arg3: memref<512x128xbf16, #tpu.memory_space<vmem>>, %arg4: memref<1x128xf32, #tpu.memory_space<vmem>>, %arg5: memref<128x128xbf16, #tpu.memory_space<vmem>>, %arg6: memref<1x128xf32, #tpu.memory_space<vmem>>, %arg7: memref<8x8x128xf32, #tpu.memory_space<vmem>>, %arg8: memref<8x512xf32, #tpu.memory_space<vmem>>, %arg9: memref<8x8x128xf32, #tpu.memory_space<vmem>>, %arg10: memref<8x8x128xf32, #tpu.memory_space<vmem>>) attributes {dimension_semantics = [#tpu.dimension_semantics<parallel>, #tpu.dimension_semantics<arbitrary>], iteration_bounds = array<i64: 1, 3>, scalar_prefetch = 0 : i64, scratch_operands = 3 : i64, tpu.core_type = #tpu.core_type<tc>, window_params = [{transform_indices = @transform_0, window_bounds = array<i64: 8, 8, 128>}, {pipeline_mode = #tpu.pipeline_mode<synchronous>, transform_indices = @transform_1, window_bounds = array<i64: 512, 128>}, {pipeline_mode = #tpu.pipeline_mode<synchronous>, transform_indices = @transform_2, window_bounds = array<i64: 1, 128>}, {pipeline_mode = #tpu.pipeline_mode<synchronous>, transform_indices = @transform_3, window_bounds = array<i64: 128, 128>}, {pipeline_mode = #tpu.pipeline_mode<synchronous>, transform_indices = @transform_4, window_bounds = array<i64: 1, 128>}, {transform_indices = @transform_5, window_bounds = array<i64: 8, 8, 128>}]} {
    %c0 = arith.constant 0 : index
    %c0_0 = arith.constant 0 : index
    %c0_1 = arith.constant 0 : index
    %0 = vector.load %arg2[%c0, %c0_0, %c0_1] : memref<8x8x128xf32, #tpu.memory_space<vmem>>, vector<1x8x128xf32>
    %1 = vector.shape_cast %0 : vector<1x8x128xf32> to vector<8x128xf32>
    %c0_2 = arith.constant 0 : index
    %c0_3 = arith.constant 0 : index
    %c0_4 = arith.constant 0 : index
    %2 = vector.load %arg9[%c0_2, %c0_3, %c0_4] : memref<8x8x128xf32, #tpu.memory_space<vmem>>, vector<8x1x128xf32>
    %3 = vector.shape_cast %2 : vector<8x1x128xf32> to vector<8x128xf32>
    %4 = vector.shape_cast %1 : vector<8x128xf32> to vector<8x1x128xf32>
    tpu.vector_store %arg9[%c0_2, %c0_3, %c0_4], %4 {strides = array<i32>} : memref<8x8x128xf32, #tpu.memory_space<vmem>>, vector<8x1x128xf32>,
    %c1 = arith.constant 1 : index
    %c0_5 = arith.constant 0 : index
    %c0_6 = arith.constant 0 : index
    %5 = vector.load %arg2[%c1, %c0_5, %c0_6] : memref<8x8x128xf32, #tpu.memory_space<vmem>>, vector<1x8x128xf32>
    %6 = vector.shape_cast %5 : vector<1x8x128xf32> to vector<8x128xf32>
    %c0_7 = arith.constant 0 : index
    %c1_8 = arith.constant 1 : index
    %c0_9 = arith.constant 0 : index
    %7 = vector.load %arg9[%c0_7, %c1_8, %c0_9] : memref<8x8x128xf32, #tpu.memory_space<vmem>>, vector<8x1x128xf32>
    %8 = vector.shape_cast %7 : vector<8x1x128xf32> to vector<8x128xf32>
    %9 = vector.shape_cast %6 : vector<8x128xf32> to vector<8x1x128xf32>
    tpu.vector_store %arg9[%c0_7, %c1_8, %c0_9], %9 {strides = array<i32>} : memref<8x8x128xf32, #tpu.memory_space<vmem>>, vector<8x1x128xf32>,
    %c2 = arith.constant 2 : index
    %c0_10 = arith.constant 0 : index
    %c0_11 = arith.constant 0 : index
    %10 = vector.load %arg2[%c2, %c0_10, %c0_11] : memref<8x8x128xf32, #tpu.memory_space<vmem>>, vector<1x8x128xf32>
    %11 = vector.shape_cast %10 : vector<1x8x128xf32> to vector<8x128xf32>
    %c0_12 = arith.constant 0 : index
    %c2_13 = arith.constant 2 : index
    %c0_14 = arith.constant 0 : index
    %12 = vector.load %arg9[%c0_12, %c2_13, %c0_14] : memref<8x8x128xf32, #tpu.memory_space<vmem>>, vector<8x1x128xf32>
    %13 = vector.shape_cast %12 : vector<8x1x128xf32> to vector<8x128xf32>
    %14 = vector.shape_cast %11 : vector<8x128xf32> to vector<8x1x128xf32>
    tpu.vector_store %arg9[%c0_12, %c2_13, %c0_14], %14 {strides = array<i32>} : memref<8x8x128xf32, #tpu.memory_space<vmem>>, vector<8x1x128xf32>,
    %c3 = arith.constant 3 : index
    %c0_15 = arith.constant 0 : index
    %c0_16 = arith.constant 0 : index
    %15 = vector.load %arg2[%c3, %c0_15, %c0_16] : memref<8x8x128xf32, #tpu.memory_space<vmem>>, vector<1x8x128xf32>
    %16 = vector.shape_cast %15 : vector<1x8x128xf32> to vector<8x128xf32>
    %c0_17 = arith.constant 0 : index
    %c3_18 = arith.constant 3 : index
    %c0_19 = arith.constant 0 : index
    %17 = vector.load %arg9[%c0_17, %c3_18, %c0_19] : memref<8x8x128xf32, #tpu.memory_space<vmem>>, vector<8x1x128xf32>
    %18 = vector.shape_cast %17 : vector<8x1x128xf32> to vector<8x128xf32>
    %19 = vector.shape_cast %16 : vector<8x128xf32> to vector<8x1x128xf32>
    tpu.vector_store %arg9[%c0_17, %c3_18, %c0_19], %19 {strides = array<i32>} : memref<8x8x128xf32, #tpu.memory_space<vmem>>, vector<8x1x128xf32>,
    %c4 = arith.constant 4 : index
    %c0_20 = arith.constant 0 : index
    %c0_21 = arith.constant 0 : index
    %20 = vector.load %arg2[%c4, %c0_20, %c0_21] : memref<8x8x128xf32, #tpu.memory_space<vmem>>, vector<1x8x128xf32>
    %21 = vector.shape_cast %20 : vector<1x8x128xf32> to vector<8x128xf32>
    %c0_22 = arith.constant 0 : index
    %c4_23 = arith.constant 4 : index
    %c0_24 = arith.constant 0 : index
    %22 = vector.load %arg9[%c0_22, %c4_23, %c0_24] : memref<8x8x128xf32, #tpu.memory_space<vmem>>, vector<8x1x128xf32>
    %23 = vector.shape_cast %22 : vector<8x1x128xf32> to vector<8x128xf32>
    %24 = vector.shape_cast %21 : vector<8x128xf32> to vector<8x1x128xf32>
    tpu.vector_store %arg9[%c0_22, %c4_23, %c0_24], %24 {strides = array<i32>} : memref<8x8x128xf32, #tpu.memory_space<vmem>>, vector<8x1x128xf32>,
    %c5 = arith.constant 5 : index
    %c0_25 = arith.constant 0 : index
    %c0_26 = arith.constant 0 : index
    %25 = vector.load %arg2[%c5, %c0_25, %c0_26] : memref<8x8x128xf32, #tpu.memory_space<vmem>>, vector<1x8x128xf32>
    %26 = vector.shape_cast %25 : vector<1x8x128xf32> to vector<8x128xf32>
    %c0_27 = arith.constant 0 : index
    %c5_28 = arith.constant 5 : index
    %c0_29 = arith.constant 0 : index
    %27 = vector.load %arg9[%c0_27, %c5_28, %c0_29] : memref<8x8x128xf32, #tpu.memory_space<vmem>>, vector<8x1x128xf32>
    %28 = vector.shape_cast %27 : vector<8x1x128xf32> to vector<8x128xf32>
    %29 = vector.shape_cast %26 : vector<8x128xf32> to vector<8x1x128xf32>
    tpu.vector_store %arg9[%c0_27, %c5_28, %c0_29], %29 {strides = array<i32>} : memref<8x8x128xf32, #tpu.memory_space<vmem>>, vector<8x1x128xf32>,
    %c6 = arith.constant 6 : index
    %c0_30 = arith.constant 0 : index
    %c0_31 = arith.constant 0 : index
    %30 = vector.load %arg2[%c6, %c0_30, %c0_31] : memref<8x8x128xf32, #tpu.memory_space<vmem>>, vector<1x8x128xf32>
    %31 = vector.shape_cast %30 : vector<1x8x128xf32> to vector<8x128xf32>
    %c0_32 = arith.constant 0 : index
    %c6_33 = arith.constant 6 : index
    %c0_34 = arith.constant 0 : index
    %32 = vector.load %arg9[%c0_32, %c6_33, %c0_34] : memref<8x8x128xf32, #tpu.memory_space<vmem>>, vector<8x1x128xf32>
    %33 = vector.shape_cast %32 : vector<8x1x128xf32> to vector<8x128xf32>
    %34 = vector.shape_cast %31 : vector<8x128xf32> to vector<8x1x128xf32>
    tpu.vector_store %arg9[%c0_32, %c6_33, %c0_34], %34 {strides = array<i32>} : memref<8x8x128xf32, #tpu.memory_space<vmem>>, vector<8x1x128xf32>,
    %c7 = arith.constant 7 : index
    %c0_35 = arith.constant 0 : index
    %c0_36 = arith.constant 0 : index
    %35 = vector.load %arg2[%c7, %c0_35, %c0_36] : memref<8x8x128xf32, #tpu.memory_space<vmem>>, vector<1x8x128xf32>
    %36 = vector.shape_cast %35 : vector<1x8x128xf32> to vector<8x128xf32>
    %c0_37 = arith.constant 0 : index
    %c7_38 = arith.constant 7 : index
    %c0_39 = arith.constant 0 : index
    %37 = vector.load %arg9[%c0_37, %c7_38, %c0_39] : memref<8x8x128xf32, #tpu.memory_space<vmem>>, vector<8x1x128xf32>
    %38 = vector.shape_cast %37 : vector<8x1x128xf32> to vector<8x128xf32>
    %39 = vector.shape_cast %36 : vector<8x128xf32> to vector<8x1x128xf32>
    tpu.vector_store %arg9[%c0_37, %c7_38, %c0_39], %39 {strides = array<i32>} : memref<8x8x128xf32, #tpu.memory_space<vmem>>, vector<8x1x128xf32>,
    %c0_i32 = arith.constant 0 : i32
    %40 = arith.cmpi eq, %arg1, %c0_i32 : i32
    %41 = arith.extui %40 : i1 to i32
    %c0_i32_40 = arith.constant 0 : i32
    %42 = arith.cmpi ne, %41, %c0_i32_40 : i32
    scf.if %42 {
      %cst_160 = arith.constant -1.000000e+00 : f32
      %264 = vector.broadcast %cst_160 : f32 to vector<8x512xf32>
      %c0_161 = arith.constant 0 : index
      %c0_162 = arith.constant 0 : index
      %265 = vector.load %arg8[%c0_161, %c0_162] : memref<8x512xf32, #tpu.memory_space<vmem>>, vector<8x512xf32>
      tpu.vector_store %arg8[%c0_161, %c0_162], %264 {strides = array<i32>} : memref<8x512xf32, #tpu.memory_space<vmem>>, vector<8x512xf32>,
    } else {
    }
    %c0_41 = arith.constant 0 : index
    %c0_42 = arith.constant 0 : index
    %43 = vector.load %arg3[%c0_41, %c0_42] : memref<512x128xbf16, #tpu.memory_space<vmem>>, vector<384x128xbf16>
    %c384 = arith.constant 384 : index
    %c0_43 = arith.constant 0 : index
    %44 = vector.load %arg3[%c384, %c0_43] : memref<512x128xbf16, #tpu.memory_space<vmem>>, vector<128x128xbf16>
    %c0_44 = arith.constant 0 : index
    %c0_45 = arith.constant 0 : index
    %45 = vector.load %arg5[%c0_44, %c0_45] : memref<128x128xbf16, #tpu.memory_space<vmem>>, vector<128x128xbf16>
    %c0_46 = arith.constant 0 : index
    %c0_47 = arith.constant 0 : index
    %46 = vector.load %arg4[%c0_46, %c0_47] : memref<1x128xf32, #tpu.memory_space<vmem>>, vector<1x128xf32>
    %47 = vector.shape_cast %46 : vector<1x128xf32> to vector<1x128xf32>
    %48 = vector.broadcast %47 : vector<1x128xf32> to vector<8x128xf32>
    %c0_48 = arith.constant 0 : index
    %c0_49 = arith.constant 0 : index
    %49 = vector.load %arg6[%c0_48, %c0_49] : memref<1x128xf32, #tpu.memory_space<vmem>>, vector<1x128xf32>
    %50 = vector.shape_cast %49 : vector<1x128xf32> to vector<1x128xf32>
    %51 = vector.broadcast %50 : vector<1x128xf32> to vector<8x128xf32>
    %c0_50 = arith.constant 0 : index
    %c0_51 = arith.constant 0 : index
    %52 = vector.load %arg8[%c0_50, %c0_51] : memref<8x512xf32, #tpu.memory_space<vmem>>, vector<8x384xf32>
    %c0_52 = arith.constant 0 : index
    %c384_53 = arith.constant 384 : index
    %53 = vector.load %arg8[%c0_52, %c384_53] : memref<8x512xf32, #tpu.memory_space<vmem>>, vector<8x128xf32>
    %c0_i32_54 = arith.constant 0 : i32
    %54 = arith.truncf %52 : vector<8x384xf32> to vector<8x384xbf16>
    %cst = arith.constant dense<0.000000e+00> : vector<8x128xf32>
    %55 = tpu.matmul %54, %43, %cst {dimension_numbers = #tpu.dot_dimension_numbers<[1], [0], [0], [1], [0, 0, 1, 1], [], []>} : vector<8x384xbf16>, vector<384x128xbf16>, vector<8x128xf32> -> vector<8x128xf32>
    %56 = arith.truncf %53 : vector<8x128xf32> to vector<8x128xbf16>
    %cst_55 = arith.constant dense<0.000000e+00> : vector<8x128xf32>
    %57 = tpu.matmul %56, %44, %cst_55 {dimension_numbers = #tpu.dot_dimension_numbers<[1], [0], [0], [1], [0, 0, 1, 1], [], []>} : vector<8x128xbf16>, vector<128x128xbf16>, vector<8x128xf32> -> vector<8x128xf32>
    %58 = arith.addf %55, %57 : vector<8x128xf32>
    %59 = arith.addf %58, %48 : vector<8x128xf32>
    %60 = math.tanh %59 : vector<8x128xf32>
    %61 = arith.truncf %60 : vector<8x128xf32> to vector<8x128xbf16>
    %cst_56 = arith.constant dense<0.000000e+00> : vector<8x128xf32>
    %62 = tpu.matmul %61, %45, %cst_56 {dimension_numbers = #tpu.dot_dimension_numbers<[1], [0], [0], [1], [0, 0, 1, 1], [], []>} : vector<8x128xbf16>, vector<128x128xbf16>, vector<8x128xf32> -> vector<8x128xf32>
    %63 = arith.addf %62, %51 : vector<8x128xf32>
    %64 = arith.index_cast %c0_i32_54 : i32 to index
    %c0_57 = arith.constant 0 : index
    %c0_58 = arith.constant 0 : index
    %65 = vector.load %arg9[%64, %c0_57, %c0_58] : memref<8x8x128xf32, #tpu.memory_space<vmem>>, vector<1x8x128xf32>
    %66 = vector.shape_cast %65 : vector<1x8x128xf32> to vector<8x128xf32>
    %67 = arith.cmpf one, %66, %66 : vector<8x128xf32>
    %68 = arith.select %67, %63, %66 : vector<8x128xi1>, vector<8x128xf32>
    %69 = arith.index_cast %c0_i32_54 : i32 to index
    %c0_59 = arith.constant 0 : index
    %c0_60 = arith.constant 0 : index
    %70 = vector.load %arg10[%69, %c0_59, %c0_60] : memref<8x8x128xf32, #tpu.memory_space<vmem>>, vector<1x8x128xf32>
    %71 = vector.shape_cast %70 : vector<1x8x128xf32> to vector<8x128xf32>
    %72 = vector.shape_cast %68 : vector<8x128xf32> to vector<1x8x128xf32>
    tpu.vector_store %arg10[%69, %c0_59, %c0_60], %72 {strides = array<i32>} : memref<8x8x128xf32, #tpu.memory_space<vmem>>, vector<1x8x128xf32>,
    %73 = vector.extract_strided_slice %52 {offsets = [0, 128], sizes = [8, 256], strides = [1, 1]} : vector<8x384xf32> to vector<8x256xf32>
    %74 = tpu.concatenate %73, %53 in 1 : vector<8x256xf32>, vector<8x128xf32> -> vector<8x384xf32>
    %c1_i32 = arith.constant 1 : i32
    %75 = arith.truncf %74 : vector<8x384xf32> to vector<8x384xbf16>
    %cst_61 = arith.constant dense<0.000000e+00> : vector<8x128xf32>
    %76 = tpu.matmul %75, %43, %cst_61 {dimension_numbers = #tpu.dot_dimension_numbers<[1], [0], [0], [1], [0, 0, 1, 1], [], []>} : vector<8x384xbf16>, vector<384x128xbf16>, vector<8x128xf32> -> vector<8x128xf32>
    %77 = arith.truncf %68 : vector<8x128xf32> to vector<8x128xbf16>
    %cst_62 = arith.constant dense<0.000000e+00> : vector<8x128xf32>
    %78 = tpu.matmul %77, %44, %cst_62 {dimension_numbers = #tpu.dot_dimension_numbers<[1], [0], [0], [1], [0, 0, 1, 1], [], []>} : vector<8x128xbf16>, vector<128x128xbf16>, vector<8x128xf32> -> vector<8x128xf32>
    %79 = arith.addf %76, %78 : vector<8x128xf32>
    %80 = arith.addf %79, %48 : vector<8x128xf32>
    %81 = math.tanh %80 : vector<8x128xf32>
    %82 = arith.truncf %81 : vector<8x128xf32> to vector<8x128xbf16>
    %cst_63 = arith.constant dense<0.000000e+00> : vector<8x128xf32>
    %83 = tpu.matmul %82, %45, %cst_63 {dimension_numbers = #tpu.dot_dimension_numbers<[1], [0], [0], [1], [0, 0, 1, 1], [], []>} : vector<8x128xbf16>, vector<128x128xbf16>, vector<8x128xf32> -> vector<8x128xf32>
    %84 = arith.addf %83, %51 : vector<8x128xf32>
    %85 = arith.index_cast %c1_i32 : i32 to index
    %c0_64 = arith.constant 0 : index
    %c0_65 = arith.constant 0 : index
    %86 = vector.load %arg9[%85, %c0_64, %c0_65] : memref<8x8x128xf32, #tpu.memory_space<vmem>>, vector<1x8x128xf32>
    %87 = vector.shape_cast %86 : vector<1x8x128xf32> to vector<8x128xf32>
    %88 = arith.cmpf one, %87, %87 : vector<8x128xf32>
    %89 = arith.select %88, %84, %87 : vector<8x128xi1>, vector<8x128xf32>
    %90 = arith.index_cast %c1_i32 : i32 to index
    %c0_66 = arith.constant 0 : index
    %c0_67 = arith.constant 0 : index
    %91 = vector.load %arg10[%90, %c0_66, %c0_67] : memref<8x8x128xf32, #tpu.memory_space<vmem>>, vector<1x8x128xf32>
    %92 = vector.shape_cast %91 : vector<1x8x128xf32> to vector<8x128xf32>
    %93 = vector.shape_cast %89 : vector<8x128xf32> to vector<1x8x128xf32>
    tpu.vector_store %arg10[%90, %c0_66, %c0_67], %93 {strides = array<i32>} : memref<8x8x128xf32, #tpu.memory_space<vmem>>, vector<1x8x128xf32>,
    %94 = vector.extract_strided_slice %74 {offsets = [0, 128], sizes = [8, 256], strides = [1, 1]} : vector<8x384xf32> to vector<8x256xf32>
    %95 = tpu.concatenate %94, %68 in 1 : vector<8x256xf32>, vector<8x128xf32> -> vector<8x384xf32>
    %c2_i32 = arith.constant 2 : i32
    %96 = arith.truncf %95 : vector<8x384xf32> to vector<8x384xbf16>
    %cst_68 = arith.constant dense<0.000000e+00> : vector<8x128xf32>
    %97 = tpu.matmul %96, %43, %cst_68 {dimension_numbers = #tpu.dot_dimension_numbers<[1], [0], [0], [1], [0, 0, 1, 1], [], []>} : vector<8x384xbf16>, vector<384x128xbf16>, vector<8x128xf32> -> vector<8x128xf32>
    %98 = arith.truncf %89 : vector<8x128xf32> to vector<8x128xbf16>
    %cst_69 = arith.constant dense<0.000000e+00> : vector<8x128xf32>
    %99 = tpu.matmul %98, %44, %cst_69 {dimension_numbers = #tpu.dot_dimension_numbers<[1], [0], [0], [1], [0, 0, 1, 1], [], []>} : vector<8x128xbf16>, vector<128x128xbf16>, vector<8x128xf32> -> vector<8x128xf32>
    %100 = arith.addf %97, %99 : vector<8x128xf32>
    %101 = arith.addf %100, %48 : vector<8x128xf32>
    %102 = math.tanh %101 : vector<8x128xf32>
    %103 = arith.truncf %102 : vector<8x128xf32> to vector<8x128xbf16>
    %cst_70 = arith.constant dense<0.000000e+00> : vector<8x128xf32>
    %104 = tpu.matmul %103, %45, %cst_70 {dimension_numbers = #tpu.dot_dimension_numbers<[1], [0], [0], [1], [0, 0, 1, 1], [], []>} : vector<8x128xbf16>, vector<128x128xbf16>, vector<8x128xf32> -> vector<8x128xf32>
    %105 = arith.addf %104, %51 : vector<8x128xf32>
    %106 = arith.index_cast %c2_i32 : i32 to index
    %c0_71 = arith.constant 0 : index
    %c0_72 = arith.constant 0 : index
    %107 = vector.load %arg9[%106, %c0_71, %c0_72] : memref<8x8x128xf32, #tpu.memory_space<vmem>>, vector<1x8x128xf32>
    %108 = vector.shape_cast %107 : vector<1x8x128xf32> to vector<8x128xf32>
    %109 = arith.cmpf one, %108, %108 : vector<8x128xf32>
    %110 = arith.select %109, %105, %108 : vector<8x128xi1>, vector<8x128xf32>
    %111 = arith.index_cast %c2_i32 : i32 to index
    %c0_73 = arith.constant 0 : index
    %c0_74 = arith.constant 0 : index
    %112 = vector.load %arg10[%111, %c0_73, %c0_74] : memref<8x8x128xf32, #tpu.memory_space<vmem>>, vector<1x8x128xf32>
    %113 = vector.shape_cast %112 : vector<1x8x128xf32> to vector<8x128xf32>
    %114 = vector.shape_cast %110 : vector<8x128xf32> to vector<1x8x128xf32>
    tpu.vector_store %arg10[%111, %c0_73, %c0_74], %114 {strides = array<i32>} : memref<8x8x128xf32, #tpu.memory_space<vmem>>, vector<1x8x128xf32>,
    %115 = vector.extract_strided_slice %95 {offsets = [0, 128], sizes = [8, 256], strides = [1, 1]} : vector<8x384xf32> to vector<8x256xf32>
    %116 = tpu.concatenate %115, %89 in 1 : vector<8x256xf32>, vector<8x128xf32> -> vector<8x384xf32>
    %c3_i32 = arith.constant 3 : i32
    %117 = arith.truncf %116 : vector<8x384xf32> to vector<8x384xbf16>
    %cst_75 = arith.constant dense<0.000000e+00> : vector<8x128xf32>
    %118 = tpu.matmul %117, %43, %cst_75 {dimension_numbers = #tpu.dot_dimension_numbers<[1], [0], [0], [1], [0, 0, 1, 1], [], []>} : vector<8x384xbf16>, vector<384x128xbf16>, vector<8x128xf32> -> vector<8x128xf32>
    %119 = arith.truncf %110 : vector<8x128xf32> to vector<8x128xbf16>
    %cst_76 = arith.constant dense<0.000000e+00> : vector<8x128xf32>
    %120 = tpu.matmul %119, %44, %cst_76 {dimension_numbers = #tpu.dot_dimension_numbers<[1], [0], [0], [1], [0, 0, 1, 1], [], []>} : vector<8x128xbf16>, vector<128x128xbf16>, vector<8x128xf32> -> vector<8x128xf32>
    %121 = arith.addf %118, %120 : vector<8x128xf32>
    %122 = arith.addf %121, %48 : vector<8x128xf32>
    %123 = math.tanh %122 : vector<8x128xf32>
    %124 = arith.truncf %123 : vector<8x128xf32> to vector<8x128xbf16>
    %cst_77 = arith.constant dense<0.000000e+00> : vector<8x128xf32>
    %125 = tpu.matmul %124, %45, %cst_77 {dimension_numbers = #tpu.dot_dimension_numbers<[1], [0], [0], [1], [0, 0, 1, 1], [], []>} : vector<8x128xbf16>, vector<128x128xbf16>, vector<8x128xf32> -> vector<8x128xf32>
    %126 = arith.addf %125, %51 : vector<8x128xf32>
    %127 = arith.index_cast %c3_i32 : i32 to index
    %c0_78 = arith.constant 0 : index
    %c0_79 = arith.constant 0 : index
    %128 = vector.load %arg9[%127, %c0_78, %c0_79] : memref<8x8x128xf32, #tpu.memory_space<vmem>>, vector<1x8x128xf32>
    %129 = vector.shape_cast %128 : vector<1x8x128xf32> to vector<8x128xf32>
    %130 = arith.cmpf one, %129, %129 : vector<8x128xf32>
    %131 = arith.select %130, %126, %129 : vector<8x128xi1>, vector<8x128xf32>
    %132 = arith.index_cast %c3_i32 : i32 to index
    %c0_80 = arith.constant 0 : index
    %c0_81 = arith.constant 0 : index
    %133 = vector.load %arg10[%132, %c0_80, %c0_81] : memref<8x8x128xf32, #tpu.memory_space<vmem>>, vector<1x8x128xf32>
    %134 = vector.shape_cast %133 : vector<1x8x128xf32> to vector<8x128xf32>
    %135 = vector.shape_cast %131 : vector<8x128xf32> to vector<1x8x128xf32>
    tpu.vector_store %arg10[%132, %c0_80, %c0_81], %135 {strides = array<i32>} : memref<8x8x128xf32, #tpu.memory_space<vmem>>, vector<1x8x128xf32>,
    %136 = vector.extract_strided_slice %116 {offsets = [0, 128], sizes = [8, 256], strides = [1, 1]} : vector<8x384xf32> to vector<8x256xf32>
    %137 = tpu.concatenate %136, %110 in 1 : vector<8x256xf32>, vector<8x128xf32> -> vector<8x384xf32>
    %c4_i32 = arith.constant 4 : i32
    %138 = arith.truncf %137 : vector<8x384xf32> to vector<8x384xbf16>
    %cst_82 = arith.constant dense<0.000000e+00> : vector<8x128xf32>
    %139 = tpu.matmul %138, %43, %cst_82 {dimension_numbers = #tpu.dot_dimension_numbers<[1], [0], [0], [1], [0, 0, 1, 1], [], []>} : vector<8x384xbf16>, vector<384x128xbf16>, vector<8x128xf32> -> vector<8x128xf32>
    %140 = arith.truncf %131 : vector<8x128xf32> to vector<8x128xbf16>
    %cst_83 = arith.constant dense<0.000000e+00> : vector<8x128xf32>
    %141 = tpu.matmul %140, %44, %cst_83 {dimension_numbers = #tpu.dot_dimension_numbers<[1], [0], [0], [1], [0, 0, 1, 1], [], []>} : vector<8x128xbf16>, vector<128x128xbf16>, vector<8x128xf32> -> vector<8x128xf32>
    %142 = arith.addf %139, %141 : vector<8x128xf32>
    %143 = arith.addf %142, %48 : vector<8x128xf32>
    %144 = math.tanh %143 : vector<8x128xf32>
    %145 = arith.truncf %144 : vector<8x128xf32> to vector<8x128xbf16>
    %cst_84 = arith.constant dense<0.000000e+00> : vector<8x128xf32>
    %146 = tpu.matmul %145, %45, %cst_84 {dimension_numbers = #tpu.dot_dimension_numbers<[1], [0], [0], [1], [0, 0, 1, 1], [], []>} : vector<8x128xbf16>, vector<128x128xbf16>, vector<8x128xf32> -> vector<8x128xf32>
    %147 = arith.addf %146, %51 : vector<8x128xf32>
    %148 = arith.index_cast %c4_i32 : i32 to index
    %c0_85 = arith.constant 0 : index
    %c0_86 = arith.constant 0 : index
    %149 = vector.load %arg9[%148, %c0_85, %c0_86] : memref<8x8x128xf32, #tpu.memory_space<vmem>>, vector<1x8x128xf32>
    %150 = vector.shape_cast %149 : vector<1x8x128xf32> to vector<8x128xf32>
    %151 = arith.cmpf one, %150, %150 : vector<8x128xf32>
    %152 = arith.select %151, %147, %150 : vector<8x128xi1>, vector<8x128xf32>
    %153 = arith.index_cast %c4_i32 : i32 to index
    %c0_87 = arith.constant 0 : index
    %c0_88 = arith.constant 0 : index
    %154 = vector.load %arg10[%153, %c0_87, %c0_88] : memref<8x8x128xf32, #tpu.memory_space<vmem>>, vector<1x8x128xf32>
    %155 = vector.shape_cast %154 : vector<1x8x128xf32> to vector<8x128xf32>
    %156 = vector.shape_cast %152 : vector<8x128xf32> to vector<1x8x128xf32>
    tpu.vector_store %arg10[%153, %c0_87, %c0_88], %156 {strides = array<i32>} : memref<8x8x128xf32, #tpu.memory_space<vmem>>, vector<1x8x128xf32>,
    %157 = vector.extract_strided_slice %137 {offsets = [0, 128], sizes = [8, 256], strides = [1, 1]} : vector<8x384xf32> to vector<8x256xf32>
    %158 = tpu.concatenate %157, %131 in 1 : vector<8x256xf32>, vector<8x128xf32> -> vector<8x384xf32>
    %c5_i32 = arith.constant 5 : i32
    %159 = arith.truncf %158 : vector<8x384xf32> to vector<8x384xbf16>
    %cst_89 = arith.constant dense<0.000000e+00> : vector<8x128xf32>
    %160 = tpu.matmul %159, %43, %cst_89 {dimension_numbers = #tpu.dot_dimension_numbers<[1], [0], [0], [1], [0, 0, 1, 1], [], []>} : vector<8x384xbf16>, vector<384x128xbf16>, vector<8x128xf32> -> vector<8x128xf32>
    %161 = arith.truncf %152 : vector<8x128xf32> to vector<8x128xbf16>
    %cst_90 = arith.constant dense<0.000000e+00> : vector<8x128xf32>
    %162 = tpu.matmul %161, %44, %cst_90 {dimension_numbers = #tpu.dot_dimension_numbers<[1], [0], [0], [1], [0, 0, 1, 1], [], []>} : vector<8x128xbf16>, vector<128x128xbf16>, vector<8x128xf32> -> vector<8x128xf32>
    %163 = arith.addf %160, %162 : vector<8x128xf32>
    %164 = arith.addf %163, %48 : vector<8x128xf32>
    %165 = math.tanh %164 : vector<8x128xf32>
    %166 = arith.truncf %165 : vector<8x128xf32> to vector<8x128xbf16>
    %cst_91 = arith.constant dense<0.000000e+00> : vector<8x128xf32>
    %167 = tpu.matmul %166, %45, %cst_91 {dimension_numbers = #tpu.dot_dimension_numbers<[1], [0], [0], [1], [0, 0, 1, 1], [], []>} : vector<8x128xbf16>, vector<128x128xbf16>, vector<8x128xf32> -> vector<8x128xf32>
    %168 = arith.addf %167, %51 : vector<8x128xf32>
    %169 = arith.index_cast %c5_i32 : i32 to index
    %c0_92 = arith.constant 0 : index
    %c0_93 = arith.constant 0 : index
    %170 = vector.load %arg9[%169, %c0_92, %c0_93] : memref<8x8x128xf32, #tpu.memory_space<vmem>>, vector<1x8x128xf32>
    %171 = vector.shape_cast %170 : vector<1x8x128xf32> to vector<8x128xf32>
    %172 = arith.cmpf one, %171, %171 : vector<8x128xf32>
    %173 = arith.select %172, %168, %171 : vector<8x128xi1>, vector<8x128xf32>
    %174 = arith.index_cast %c5_i32 : i32 to index
    %c0_94 = arith.constant 0 : index
    %c0_95 = arith.constant 0 : index
    %175 = vector.load %arg10[%174, %c0_94, %c0_95] : memref<8x8x128xf32, #tpu.memory_space<vmem>>, vector<1x8x128xf32>
    %176 = vector.shape_cast %175 : vector<1x8x128xf32> to vector<8x128xf32>
    %177 = vector.shape_cast %173 : vector<8x128xf32> to vector<1x8x128xf32>
    tpu.vector_store %arg10[%174, %c0_94, %c0_95], %177 {strides = array<i32>} : memref<8x8x128xf32, #tpu.memory_space<vmem>>, vector<1x8x128xf32>,
    %178 = vector.extract_strided_slice %158 {offsets = [0, 128], sizes = [8, 256], strides = [1, 1]} : vector<8x384xf32> to vector<8x256xf32>
    %179 = tpu.concatenate %178, %152 in 1 : vector<8x256xf32>, vector<8x128xf32> -> vector<8x384xf32>
    %c6_i32 = arith.constant 6 : i32
    %180 = arith.truncf %179 : vector<8x384xf32> to vector<8x384xbf16>
    %cst_96 = arith.constant dense<0.000000e+00> : vector<8x128xf32>
    %181 = tpu.matmul %180, %43, %cst_96 {dimension_numbers = #tpu.dot_dimension_numbers<[1], [0], [0], [1], [0, 0, 1, 1], [], []>} : vector<8x384xbf16>, vector<384x128xbf16>, vector<8x128xf32> -> vector<8x128xf32>
    %182 = arith.truncf %173 : vector<8x128xf32> to vector<8x128xbf16>
    %cst_97 = arith.constant dense<0.000000e+00> : vector<8x128xf32>
    %183 = tpu.matmul %182, %44, %cst_97 {dimension_numbers = #tpu.dot_dimension_numbers<[1], [0], [0], [1], [0, 0, 1, 1], [], []>} : vector<8x128xbf16>, vector<128x128xbf16>, vector<8x128xf32> -> vector<8x128xf32>
    %184 = arith.addf %181, %183 : vector<8x128xf32>
    %185 = arith.addf %184, %48 : vector<8x128xf32>
    %186 = math.tanh %185 : vector<8x128xf32>
    %187 = arith.truncf %186 : vector<8x128xf32> to vector<8x128xbf16>
    %cst_98 = arith.constant dense<0.000000e+00> : vector<8x128xf32>
    %188 = tpu.matmul %187, %45, %cst_98 {dimension_numbers = #tpu.dot_dimension_numbers<[1], [0], [0], [1], [0, 0, 1, 1], [], []>} : vector<8x128xbf16>, vector<128x128xbf16>, vector<8x128xf32> -> vector<8x128xf32>
    %189 = arith.addf %188, %51 : vector<8x128xf32>
    %190 = arith.index_cast %c6_i32 : i32 to index
    %c0_99 = arith.constant 0 : index
    %c0_100 = arith.constant 0 : index
    %191 = vector.load %arg9[%190, %c0_99, %c0_100] : memref<8x8x128xf32, #tpu.memory_space<vmem>>, vector<1x8x128xf32>
    %192 = vector.shape_cast %191 : vector<1x8x128xf32> to vector<8x128xf32>
    %193 = arith.cmpf one, %192, %192 : vector<8x128xf32>
    %194 = arith.select %193, %189, %192 : vector<8x128xi1>, vector<8x128xf32>
    %195 = arith.index_cast %c6_i32 : i32 to index
    %c0_101 = arith.constant 0 : index
    %c0_102 = arith.constant 0 : index
    %196 = vector.load %arg10[%195, %c0_101, %c0_102] : memref<8x8x128xf32, #tpu.memory_space<vmem>>, vector<1x8x128xf32>
    %197 = vector.shape_cast %196 : vector<1x8x128xf32> to vector<8x128xf32>
    %198 = vector.shape_cast %194 : vector<8x128xf32> to vector<1x8x128xf32>
    tpu.vector_store %arg10[%195, %c0_101, %c0_102], %198 {strides = array<i32>} : memref<8x8x128xf32, #tpu.memory_space<vmem>>, vector<1x8x128xf32>,
    %199 = vector.extract_strided_slice %179 {offsets = [0, 128], sizes = [8, 256], strides = [1, 1]} : vector<8x384xf32> to vector<8x256xf32>
    %200 = tpu.concatenate %199, %173 in 1 : vector<8x256xf32>, vector<8x128xf32> -> vector<8x384xf32>
    %c7_i32 = arith.constant 7 : i32
    %201 = arith.truncf %200 : vector<8x384xf32> to vector<8x384xbf16>
    %cst_103 = arith.constant dense<0.000000e+00> : vector<8x128xf32>
    %202 = tpu.matmul %201, %43, %cst_103 {dimension_numbers = #tpu.dot_dimension_numbers<[1], [0], [0], [1], [0, 0, 1, 1], [], []>} : vector<8x384xbf16>, vector<384x128xbf16>, vector<8x128xf32> -> vector<8x128xf32>
    %203 = arith.truncf %194 : vector<8x128xf32> to vector<8x128xbf16>
    %cst_104 = arith.constant dense<0.000000e+00> : vector<8x128xf32>
    %204 = tpu.matmul %203, %44, %cst_104 {dimension_numbers = #tpu.dot_dimension_numbers<[1], [0], [0], [1], [0, 0, 1, 1], [], []>} : vector<8x128xbf16>, vector<128x128xbf16>, vector<8x128xf32> -> vector<8x128xf32>
    %205 = arith.addf %202, %204 : vector<8x128xf32>
    %206 = arith.addf %205, %48 : vector<8x128xf32>
    %207 = math.tanh %206 : vector<8x128xf32>
    %208 = arith.truncf %207 : vector<8x128xf32> to vector<8x128xbf16>
    %cst_105 = arith.constant dense<0.000000e+00> : vector<8x128xf32>
    %209 = tpu.matmul %208, %45, %cst_105 {dimension_numbers = #tpu.dot_dimension_numbers<[1], [0], [0], [1], [0, 0, 1, 1], [], []>} : vector<8x128xbf16>, vector<128x128xbf16>, vector<8x128xf32> -> vector<8x128xf32>
    %210 = arith.addf %209, %51 : vector<8x128xf32>
    %211 = arith.index_cast %c7_i32 : i32 to index
    %c0_106 = arith.constant 0 : index
    %c0_107 = arith.constant 0 : index
    %212 = vector.load %arg9[%211, %c0_106, %c0_107] : memref<8x8x128xf32, #tpu.memory_space<vmem>>, vector<1x8x128xf32>
    %213 = vector.shape_cast %212 : vector<1x8x128xf32> to vector<8x128xf32>
    %214 = arith.cmpf one, %213, %213 : vector<8x128xf32>
    %215 = arith.select %214, %210, %213 : vector<8x128xi1>, vector<8x128xf32>
    %216 = arith.index_cast %c7_i32 : i32 to index
    %c0_108 = arith.constant 0 : index
    %c0_109 = arith.constant 0 : index
    %217 = vector.load %arg10[%216, %c0_108, %c0_109] : memref<8x8x128xf32, #tpu.memory_space<vmem>>, vector<1x8x128xf32>
    %218 = vector.shape_cast %217 : vector<1x8x128xf32> to vector<8x128xf32>
    %219 = vector.shape_cast %215 : vector<8x128xf32> to vector<1x8x128xf32>
    tpu.vector_store %arg10[%216, %c0_108, %c0_109], %219 {strides = array<i32>} : memref<8x8x128xf32, #tpu.memory_space<vmem>>, vector<1x8x128xf32>,
    %220 = vector.extract_strided_slice %200 {offsets = [0, 128], sizes = [8, 256], strides = [1, 1]} : vector<8x384xf32> to vector<8x256xf32>
    %221 = tpu.concatenate %220, %194 in 1 : vector<8x256xf32>, vector<8x128xf32> -> vector<8x384xf32>
    %c8_i32 = arith.constant 8 : i32
    %222 = tpu.concatenate %221, %215 in 1 : vector<8x384xf32>, vector<8x128xf32> -> vector<8x512xf32>
    %c0_110 = arith.constant 0 : index
    %c0_111 = arith.constant 0 : index
    %223 = vector.load %arg8[%c0_110, %c0_111] : memref<8x512xf32, #tpu.memory_space<vmem>>, vector<8x512xf32>
    tpu.vector_store %arg8[%c0_110, %c0_111], %222 {strides = array<i32>} : memref<8x512xf32, #tpu.memory_space<vmem>>, vector<8x512xf32>,
    %c0_112 = arith.constant 0 : index
    %c0_113 = arith.constant 0 : index
    %c0_114 = arith.constant 0 : index
    %224 = vector.load %arg10[%c0_112, %c0_113, %c0_114] : memref<8x8x128xf32, #tpu.memory_space<vmem>>, vector<8x1x128xf32>
    %225 = vector.shape_cast %224 : vector<8x1x128xf32> to vector<8x128xf32>
    %c0_115 = arith.constant 0 : index
    %c0_116 = arith.constant 0 : index
    %c0_117 = arith.constant 0 : index
    %226 = vector.load %arg7[%c0_115, %c0_116, %c0_117] : memref<8x8x128xf32, #tpu.memory_space<vmem>>, vector<1x8x128xf32>
    %227 = vector.shape_cast %226 : vector<1x8x128xf32> to vector<8x128xf32>
    %228 = vector.shape_cast %225 : vector<8x128xf32> to vector<1x8x128xf32>
    tpu.vector_store %arg7[%c0_115, %c0_116, %c0_117], %228 {strides = array<i32>} : memref<8x8x128xf32, #tpu.memory_space<vmem>>, vector<1x8x128xf32>,
    %c0_118 = arith.constant 0 : index
    %c1_119 = arith.constant 1 : index
    %c0_120 = arith.constant 0 : index
    %229 = vector.load %arg10[%c0_118, %c1_119, %c0_120] : memref<8x8x128xf32, #tpu.memory_space<vmem>>, vector<8x1x128xf32>
    %230 = vector.shape_cast %229 : vector<8x1x128xf32> to vector<8x128xf32>
    %c1_121 = arith.constant 1 : index
    %c0_122 = arith.constant 0 : index
    %c0_123 = arith.constant 0 : index
    %231 = vector.load %arg7[%c1_121, %c0_122, %c0_123] : memref<8x8x128xf32, #tpu.memory_space<vmem>>, vector<1x8x128xf32>
    %232 = vector.shape_cast %231 : vector<1x8x128xf32> to vector<8x128xf32>
    %233 = vector.shape_cast %230 : vector<8x128xf32> to vector<1x8x128xf32>
    tpu.vector_store %arg7[%c1_121, %c0_122, %c0_123], %233 {strides = array<i32>} : memref<8x8x128xf32, #tpu.memory_space<vmem>>, vector<1x8x128xf32>,
    %c0_124 = arith.constant 0 : index
    %c2_125 = arith.constant 2 : index
    %c0_126 = arith.constant 0 : index
    %234 = vector.load %arg10[%c0_124, %c2_125, %c0_126] : memref<8x8x128xf32, #tpu.memory_space<vmem>>, vector<8x1x128xf32>
    %235 = vector.shape_cast %234 : vector<8x1x128xf32> to vector<8x128xf32>
    %c2_127 = arith.constant 2 : index
    %c0_128 = arith.constant 0 : index
    %c0_129 = arith.constant 0 : index
    %236 = vector.load %arg7[%c2_127, %c0_128, %c0_129] : memref<8x8x128xf32, #tpu.memory_space<vmem>>, vector<1x8x128xf32>
    %237 = vector.shape_cast %236 : vector<1x8x128xf32> to vector<8x128xf32>
    %238 = vector.shape_cast %235 : vector<8x128xf32> to vector<1x8x128xf32>
    tpu.vector_store %arg7[%c2_127, %c0_128, %c0_129], %238 {strides = array<i32>} : memref<8x8x128xf32, #tpu.memory_space<vmem>>, vector<1x8x128xf32>,
    %c0_130 = arith.constant 0 : index
    %c3_131 = arith.constant 3 : index
    %c0_132 = arith.constant 0 : index
    %239 = vector.load %arg10[%c0_130, %c3_131, %c0_132] : memref<8x8x128xf32, #tpu.memory_space<vmem>>, vector<8x1x128xf32>
    %240 = vector.shape_cast %239 : vector<8x1x128xf32> to vector<8x128xf32>
    %c3_133 = arith.constant 3 : index
    %c0_134 = arith.constant 0 : index
    %c0_135 = arith.constant 0 : index
    %241 = vector.load %arg7[%c3_133, %c0_134, %c0_135] : memref<8x8x128xf32, #tpu.memory_space<vmem>>, vector<1x8x128xf32>
    %242 = vector.shape_cast %241 : vector<1x8x128xf32> to vector<8x128xf32>
    %243 = vector.shape_cast %240 : vector<8x128xf32> to vector<1x8x128xf32>
    tpu.vector_store %arg7[%c3_133, %c0_134, %c0_135], %243 {strides = array<i32>} : memref<8x8x128xf32, #tpu.memory_space<vmem>>, vector<1x8x128xf32>,
    %c0_136 = arith.constant 0 : index
    %c4_137 = arith.constant 4 : index
    %c0_138 = arith.constant 0 : index
    %244 = vector.load %arg10[%c0_136, %c4_137, %c0_138] : memref<8x8x128xf32, #tpu.memory_space<vmem>>, vector<8x1x128xf32>
    %245 = vector.shape_cast %244 : vector<8x1x128xf32> to vector<8x128xf32>
    %c4_139 = arith.constant 4 : index
    %c0_140 = arith.constant 0 : index
    %c0_141 = arith.constant 0 : index
    %246 = vector.load %arg7[%c4_139, %c0_140, %c0_141] : memref<8x8x128xf32, #tpu.memory_space<vmem>>, vector<1x8x128xf32>
    %247 = vector.shape_cast %246 : vector<1x8x128xf32> to vector<8x128xf32>
    %248 = vector.shape_cast %245 : vector<8x128xf32> to vector<1x8x128xf32>
    tpu.vector_store %arg7[%c4_139, %c0_140, %c0_141], %248 {strides = array<i32>} : memref<8x8x128xf32, #tpu.memory_space<vmem>>, vector<1x8x128xf32>,
    %c0_142 = arith.constant 0 : index
    %c5_143 = arith.constant 5 : index
    %c0_144 = arith.constant 0 : index
    %249 = vector.load %arg10[%c0_142, %c5_143, %c0_144] : memref<8x8x128xf32, #tpu.memory_space<vmem>>, vector<8x1x128xf32>
    %250 = vector.shape_cast %249 : vector<8x1x128xf32> to vector<8x128xf32>
    %c5_145 = arith.constant 5 : index
    %c0_146 = arith.constant 0 : index
    %c0_147 = arith.constant 0 : index
    %251 = vector.load %arg7[%c5_145, %c0_146, %c0_147] : memref<8x8x128xf32, #tpu.memory_space<vmem>>, vector<1x8x128xf32>
    %252 = vector.shape_cast %251 : vector<1x8x128xf32> to vector<8x128xf32>
    %253 = vector.shape_cast %250 : vector<8x128xf32> to vector<1x8x128xf32>
    tpu.vector_store %arg7[%c5_145, %c0_146, %c0_147], %253 {strides = array<i32>} : memref<8x8x128xf32, #tpu.memory_space<vmem>>, vector<1x8x128xf32>,
    %c0_148 = arith.constant 0 : index
    %c6_149 = arith.constant 6 : index
    %c0_150 = arith.constant 0 : index
    %254 = vector.load %arg10[%c0_148, %c6_149, %c0_150] : memref<8x8x128xf32, #tpu.memory_space<vmem>>, vector<8x1x128xf32>
    %255 = vector.shape_cast %254 : vector<8x1x128xf32> to vector<8x128xf32>
    %c6_151 = arith.constant 6 : index
    %c0_152 = arith.constant 0 : index
    %c0_153 = arith.constant 0 : index
    %256 = vector.load %arg7[%c6_151, %c0_152, %c0_153] : memref<8x8x128xf32, #tpu.memory_space<vmem>>, vector<1x8x128xf32>
    %257 = vector.shape_cast %256 : vector<1x8x128xf32> to vector<8x128xf32>
    %258 = vector.shape_cast %255 : vector<8x128xf32> to vector<1x8x128xf32>
    tpu.vector_store %arg7[%c6_151, %c0_152, %c0_153], %258 {strides = array<i32>} : memref<8x8x128xf32, #tpu.memory_space<vmem>>, vector<1x8x128xf32>,
    %c0_154 = arith.constant 0 : index
    %c7_155 = arith.constant 7 : index
    %c0_156 = arith.constant 0 : index
    %259 = vector.load %arg10[%c0_154, %c7_155, %c0_156] : memref<8x8x128xf32, #tpu.memory_space<vmem>>, vector<8x1x128xf32>
    %260 = vector.shape_cast %259 : vector<8x1x128xf32> to vector<8x128xf32>
    %c7_157 = arith.constant 7 : index
    %c0_158 = arith.constant 0 : index
    %c0_159 = arith.constant 0 : index
    %261 = vector.load %arg7[%c7_157, %c0_158, %c0_159] : memref<8x8x128xf32, #tpu.memory_space<vmem>>, vector<1x8x128xf32>
    %262 = vector.shape_cast %261 : vector<1x8x128xf32> to vector<8x128xf32>
    %263 = vector.shape_cast %260 : vector<8x128xf32> to vector<1x8x128xf32>
    tpu.vector_store %arg7[%c7_157, %c0_158, %c0_159], %263 {strides = array<i32>} : memref<8x8x128xf32, #tpu.memory_space<vmem>>, vector<1x8x128xf32>,
    return
  }
  func.func @transform_0(%arg0: i32, %arg1: i32) -> (i32, i32, i32) {
    %c0_i32 = arith.constant 0 : i32
    %c0_i32_0 = arith.constant 0 : i32
    return %arg0, %arg1, %c0_i32 : i32, i32, i32
  }
  func.func @transform_1(%arg0: i32, %arg1: i32) -> (i32, i32) {
    %c0_i32 = arith.constant 0 : i32
    %c0_i32_0 = arith.constant 0 : i32
    %c0_i32_1 = arith.constant 0 : i32
    return %c0_i32, %c0_i32_0 : i32, i32
  }
  func.func @transform_2(%arg0: i32, %arg1: i32) -> (i32, i32) {
    %c0_i32 = arith.constant 0 : i32
    %c0_i32_0 = arith.constant 0 : i32
    %c0_i32_1 = arith.constant 0 : i32
    return %c0_i32, %c0_i32_0 : i32, i32
  }
  func.func @transform_3(%arg0: i32, %arg1: i32) -> (i32, i32) {
    %c0_i32 = arith.constant 0 : i32
    %c0_i32_0 = arith.constant 0 : i32
    %c0_i32_1 = arith.constant 0 : i32
    return %c0_i32, %c0_i32_0 : i32, i32
  }
  func.func @transform_4(%arg0: i32, %arg1: i32) -> (i32, i32) {
    %c0_i32 = arith.constant 0 : i32
    %c0_i32_0 = arith.constant 0 : i32
    %c0_i32_1 = arith.constant 0 : i32
    return %c0_i32, %c0_i32_0 : i32, i32
  }
  func.func @transform_5(%arg0: i32, %arg1: i32) -> (i32, i32, i32) {
    %c0_i32 = arith.constant 0 : i32
    %c0_i32_0 = arith.constant 0 : i32
    return %arg0, %arg1, %c0_i32 : i32, i32, i32
  }
}

</mosaic_0001>

<llo_original>
// kernel: tpu_custom_call.1
$region0: #{tpu_custom_call.1}
  #allocation0 [shape = 'u32[]', space=smem, size = 0x4, offset = 0x4, fixed_abs, tag = 'smem constant byte address 0x4 - core index']
  #allocation1 [shape = 'u32[144,128]{1,0:T(1,128)}', space=vmem, size = 0x12000, scoped, tag = 'internal scratch']
  #allocation2 [shape = 'f32[8,512]{1,0:T(8,128)}', space=vmem, size = 0x4000, scoped, tag = 'scratch operand']
  #allocation3 [shape = 'f32[8,8,128]{2,1,0:T(8,128)}', space=vmem, size = 0x8000, scoped, tag = 'scratch operand']
  #allocation4 [shape = 'f32[8,8,128]{2,1,0:T(8,128)}', space=vmem, size = 0x8000, scoped, tag = 'scratch operand']
  %s0 = inlined_call_operand.hbm [shape: f32[8,24,128], index: 0, kind: input, shape index: {}]
  %s1 = inlined_call_operand.hbm [shape: bf16[512,128], index: 1, kind: input, shape index: {}]
  %s2 = inlined_call_operand.vmem [shape: f32[1,128], index: 2, kind: input, shape index: {}]
  %s3 = inlined_call_operand.hbm [shape: bf16[128,128], index: 3, kind: input, shape index: {}]
  %s4 = inlined_call_operand.vmem [shape: f32[1,128], index: 4, kind: input, shape index: {}]
  %s5 = inlined_call_operand.hbm [shape: f32[8,24,128], index: 5, kind: output, shape index: {}]
  %s6 = sld [smem:[#allocation0]]
  $region69: #{tpu_custom_call.1} parent=0
    _
  %s8 = ssub.s32 1, %s6
  %s9 = scalar_select 0, %s8, %s6
  $region1: #{tpu_custom_call.1} parent=0
    #allocation5 [shape = 'u8[65536]{0}', space=vmem, size = 0x10000, scoped, tag = 'input window, operand 0']
    #allocation6 [shape = 's32[2]{0}', space=sflag, size = 0x8, scoped, tag = 'scoped memory for tpu_custom_call.1']
    #allocation7 [shape = 's32[2]{0}', space=sflag, size = 0x8, scoped, tag = 'scoped memory for tpu_custom_call.1']
    #allocation8 [shape = 'u8[131072]{0}', space=vmem, size = 0x20000, scoped, tag = 'input window, operand 1, single buffered']
    #allocation9 [shape = 's32[1]{0}', space=sflag, size = 0x4, scoped, tag = 'scoped memory for tpu_custom_call.1']
    #allocation10 [shape = 'u8[32768]{0}', space=vmem, size = 0x8000, scoped, tag = 'input window, operand 3, single buffered']
    #allocation11 [shape = 'u8[65536]{0}', space=vmem, size = 0x10000, scoped, tag = 'output window, operand 0']
    %10 = vsyncpa [#allocation6], 0
    %s11 = scalar_lea.sflag [#allocation6], 1
    %12 = vsyncpa %s11, 0
    %13 = vsyncpa [#allocation9], 0
    %14 = vsyncpa [#allocation7], 0
    %s15 = scalar_lea.sflag [#allocation7], 1
    %16 = vsyncpa %s15, 0
    loop: start=0, step=1, limit=5
    $region2: #{tpu_custom_call.1} parent=1 // loop_pre_header
      _
    $region3: #{tpu_custom_call.1} parent=1 // loop_header
      %s18 = sphi 0, %s22
      %p19 = scmp.ge.s32.totalorder %s18, 5
      %s25 = sphi 0, %s37
      %s26 = sphi 0, %s33
      %s27 = sphi 0, %s25
      %s28 = sphi 0, %s26
      %s29 = sphi 0, %s27
      %s30 = sphi 0, %s28
      %s42 = sphi 0, %s44
      %s45 = sphi 0, %s42
      %s46 = sphi 0, %s45
      %s62 = sphi 0, %s46
      %s66 = sphi 0, %s66
      %s68 = sphi 0, %s66
      %s69 = sphi 0, %s68
      %s83 = sphi 0, %s69
      %s87 = sphi 0, %s87
      %s89 = sphi 0, %s87
      %s90 = sphi 0, %s89
      %s104 = sphi 0, %s90
      %s108 = sphi 0, %s108
      %s110 = sphi 0, %s108
      %s111 = sphi 0, %s110
      %s125 = sphi 0, %s111
      %s129 = sphi 0, %s129
      %s131 = sphi 0, %s129
      %s132 = sphi 0, %s131
      %s146 = sphi 0, %s132
      %s154 = sphi 0, %s156
      %s157 = sphi 0, %s154
      %s158 = sphi 0, %s157
      %s174 = sphi 0, %s158
    $region4: #{tpu_custom_call.1} parent=1 // loop_header_branch
      %21 = sbr.rel (%p19) target = $region8
    $region5: #{tpu_custom_call.1} parent=1 // loop_body
      %s23 = ssub.s32 %s18, 1
      %s24 = ssub.s32 %s18, 2
      %s31 = sadd.s32 1, %s26
      %p32 = scmp.ge.s32.totalorder %s31, 3
      %s33 = scalar_select %p32, 0, %s31
      %s34 = sadd.s32 1, %s25
      %s35 = scalar_select %p32, %s34, %s25
      %p36 = scmp.ge.s32.totalorder %s35, 1
      %s37 = scalar_select %p36, 0, %s35
      %s38 = ssub.s32 %s25, %s37
      %s39 = ssub.s32 %s26, %s33
      %s40 = sor.u32 %s38, %s39
      %p41 = scmp.eq.s32.totalorder %s40, 0
      %s43 = sadd.s32 %s42, 1
      %s44 = scalar_select %p41, %s42, %s43
      %p47 = pneg %p41
      %p48 = scmp.eq.s32.totalorder %s18, 2
      %p49 = por %p47, %p48
      %p50 = scmp.ne.s32.totalorder %s42, %s45
      %p51 = scmp.eq.s32.totalorder %s18, 0
      %p52 = por %p50, %p51
      %p53 = scmp.ne.s32.totalorder %s42, %s45
      %p54 = scmp.eq.s32.totalorder %s23, 2
      %p55 = por %p53, %p54
      %p56 = scmp.ne.s32.totalorder %s45, %s46
      %p57 = scmp.eq.s32.totalorder %s23, 0
      %p58 = por %p56, %p57
      %p59 = scmp.ne.s32.totalorder %s45, %s46
      %p60 = scmp.eq.s32.totalorder %s24, 2
      %p61 = por %p59, %p60
      %p63 = scmp.ne.s32.totalorder %s46, %s62
      %p64 = scmp.eq.s32.totalorder %s24, 0
      %p65 = por %p63, %p64
      %s67 = sadd.s32 %s66, 1
      %p70 = scmp.eq.s32.totalorder %s18, 2
      %p71 = scmp.ne.s32.totalorder %s66, %s68
      %p72 = scmp.eq.s32.totalorder %s18, 0
      %p73 = por %p71, %p72
      %p74 = scmp.ne.s32.totalorder %s66, %s68
      %p75 = scmp.eq.s32.totalorder %s23, 2
      %p76 = por %p74, %p75
      %p77 = scmp.ne.s32.totalorder %s68, %s69
      %p78 = scmp.eq.s32.totalorder %s23, 0
      %p79 = por %p77, %p78
      %p80 = scmp.ne.s32.totalorder %s68, %s69
      %p81 = scmp.eq.s32.totalorder %s24, 2
      %p82 = por %p80, %p81
      %p84 = scmp.ne.s32.totalorder %s69, %s83
      %p85 = scmp.eq.s32.totalorder %s24, 0
      %p86 = por %p84, %p85
      %s88 = sadd.s32 %s87, 1
      %p91 = scmp.eq.s32.totalorder %s18, 2
      %p92 = scmp.ne.s32.totalorder %s87, %s89
      %p93 = scmp.eq.s32.totalorder %s18, 0
      %p94 = por %p92, %p93
      %p95 = scmp.ne.s32.totalorder %s87, %s89
      %p96 = scmp.eq.s32.totalorder %s23, 2
      %p97 = por %p95, %p96
      %p98 = scmp.ne.s32.totalorder %s89, %s90
      %p99 = scmp.eq.s32.totalorder %s23, 0
      %p100 = por %p98, %p99
      %p101 = scmp.ne.s32.totalorder %s89, %s90
      %p102 = scmp.eq.s32.totalorder %s24, 2
      %p103 = por %p101, %p102
      %p105 = scmp.ne.s32.totalorder %s90, %s104
      %p106 = scmp.eq.s32.totalorder %s24, 0
      %p107 = por %p105, %p106
      %s109 = sadd.s32 %s108, 1
      %p112 = scmp.eq.s32.totalorder %s18, 2
      %p113 = scmp.ne.s32.totalorder %s108, %s110
      %p114 = scmp.eq.s32.totalorder %s18, 0
      %p115 = por %p113, %p114
      %p116 = scmp.ne.s32.totalorder %s108, %s110
      %p117 = scmp.eq.s32.totalorder %s23, 2
      %p118 = por %p116, %p117
      %p119 = scmp.ne.s32.totalorder %s110, %s111
      %p120 = scmp.eq.s32.totalorder %s23, 0
      %p121 = por %p119, %p120
      %p122 = scmp.ne.s32.totalorder %s110, %s111
      %p123 = scmp.eq.s32.totalorder %s24, 2
      %p124 = por %p122, %p123
      %p126 = scmp.ne.s32.totalorder %s111, %s125
      %p127 = scmp.eq.s32.totalorder %s24, 0
      %p128 = por %p126, %p127
      %s130 = sadd.s32 %s129, 1
      %p133 = scmp.eq.s32.totalorder %s18, 2
      %p134 = scmp.ne.s32.totalorder %s129, %s131
      %p135 = scmp.eq.s32.totalorder %s18, 0
      %p136 = por %p134, %p135
      %p137 = scmp.ne.s32.totalorder %s129, %s131
      %p138 = scmp.eq.s32.totalorder %s23, 2
      %p139 = por %p137, %p138
      %p140 = scmp.ne.s32.totalorder %s131, %s132
      %p141 = scmp.eq.s32.totalorder %s23, 0
      %p142 = por %p140, %p141
      %p143 = scmp.ne.s32.totalorder %s131, %s132
      %p144 = scmp.eq.s32.totalorder %s24, 2
      %p145 = por %p143, %p144
      %p147 = scmp.ne.s32.totalorder %s132, %s146
      %p148 = scmp.eq.s32.totalorder %s24, 0
      %p149 = por %p147, %p148
      %s150 = ssub.s32 %s25, %s37
      %s151 = ssub.s32 %s26, %s33
      %s152 = sor.u32 %s150, %s151
      %p153 = scmp.eq.s32.totalorder %s152, 0
      %s155 = sadd.s32 %s154, 1
      %s156 = scalar_select %p153, %s154, %s155
      %p159 = pneg %p153
      %p160 = scmp.eq.s32.totalorder %s18, 2
      %p161 = por %p159, %p160
      %p162 = scmp.ne.s32.totalorder %s154, %s157
      %p163 = scmp.eq.s32.totalorder %s18, 0
      %p164 = por %p162, %p163
      %p165 = scmp.ne.s32.totalorder %s154, %s157
      %p166 = scmp.eq.s32.totalorder %s23, 2
      %p167 = por %p165, %p166
      %p168 = scmp.ne.s32.totalorder %s157, %s158
      %p169 = scmp.eq.s32.totalorder %s23, 0
      %p170 = por %p168, %p169
      %p171 = scmp.ne.s32.totalorder %s157, %s158
      %p172 = scmp.eq.s32.totalorder %s24, 2
      %p173 = por %p171, %p172
      %p175 = scmp.ne.s32.totalorder %s158, %s174
      %p176 = scmp.eq.s32.totalorder %s24, 0
      %p177 = por %p175, %p176
      %p178 = scmp.le.s32.totalorder 1, %s18
      %p179 = scmp.lt.s32.totalorder %s18, 4
      %p180 = pnand %p178, %p179
      %p181 = pneg %p180
      // Predicated region
      $region9: #{tpu_custom_call.1} parent=5 // pred_check
        _
      $region10: #{tpu_custom_call.1} parent=5 // pred_check_branch
        %183 = sbr.rel (%p180) target = $region12
      $region11: #{tpu_custom_call.1} parent=5 // pred_region
        %s184 = ssub.s32 %s18, 1
        // Predicated region
        $region13: #{tpu_custom_call.1} parent=11 // pred_check
          %p185 = pneg %p79
        $region14: #{tpu_custom_call.1} parent=11 // pred_check_branch
          %187 = sbr.rel (%p185) target = $region16
        $region15: #{tpu_custom_call.1} parent=11 // pred_region
          %s189 = ssub.s32 4096, 4096
          %190 = vsyncadd [#allocation9], %s189
          %s191 = sshll.u32 [#allocation8], 4
          %s192 = int_to_ptr.vmem [resolvable:$true] %s191
          %197 = dma.hbm_to_vmem [thread:$0]  %s1, 4096, %s192, [#allocation9], 64, 64, 4
        $region16: #{tpu_custom_call.1} parent=11 // pred_fallthru
          _
        // Predicated region
        $region17: #{tpu_custom_call.1} parent=11 // pred_check
          %p198 = pneg %p100
        $region18: #{tpu_custom_call.1} parent=11 // pred_check_branch
          %200 = sbr.rel (%p198) target = $region20
        $region19: #{tpu_custom_call.1} parent=11 // pred_region
          _
        $region20: #{tpu_custom_call.1} parent=11 // pred_fallthru
          _
        // Predicated region
        $region21: #{tpu_custom_call.1} parent=11 // pred_check
          %p201 = pneg %p121
        $region22: #{tpu_custom_call.1} parent=11 // pred_check_branch
          %203 = sbr.rel (%p201) target = $region24
        $region23: #{tpu_custom_call.1} parent=11 // pred_region
          %s205 = ssub.s32 1024, 1024
          %206 = vsyncadd [#allocation9], %s205
          %s207 = sshll.u32 [#allocation10], 4
          %s208 = int_to_ptr.vmem [resolvable:$true] %s207
          %213 = dma.hbm_to_vmem [thread:$0]  %s3, 1024, %s208, [#allocation9], 64, 64, 4
        $region24: #{tpu_custom_call.1} parent=11 // pred_fallthru
          _
        // Predicated region
        $region25: #{tpu_custom_call.1} parent=11 // pred_check
          %p214 = pneg %p142
        $region26: #{tpu_custom_call.1} parent=11 // pred_check_branch
          %216 = sbr.rel (%p214) target = $region28
        $region27: #{tpu_custom_call.1} parent=11 // pred_region
          _
        $region28: #{tpu_custom_call.1} parent=11 // pred_fallthru
          _
      $region12: #{tpu_custom_call.1} parent=5 // pred_fallthru
        _
      %p217 = scmp.lt.s32.totalorder %s18, 3
      // Predicated region
      $region29: #{tpu_custom_call.1} parent=5 // pred_check
        %p218 = pneg %p217
      $region30: #{tpu_custom_call.1} parent=5 // pred_check_branch
        %220 = sbr.rel (%p218) target = $region32
      $region31: #{tpu_custom_call.1} parent=5 // pred_region
        // Predicated region
        $region33: #{tpu_custom_call.1} parent=31 // pred_check
          %p221 = pneg %p52
        $region34: #{tpu_custom_call.1} parent=31 // pred_check_branch
          %223 = sbr.rel (%p221) target = $region36
        $region35: #{tpu_custom_call.1} parent=31 // pred_region
          %s224 = sand.u32 %s42, 1
          %s225 = scalar_lea.sflag [#allocation6], %s224
          %s226 = sand.u32 %s42, 1
          %s227 = smul.addr %s226, 64
          %s228 = scalar_lea.vmem [#allocation5], %s227
          %s229 = smul.u32 8, %s25
          %s231 = ssub.s32 1024, 1024
          %232 = vsyncadd %s225, %s231
          %s233 = smul.addr %s229, 3
          %s234 = sadd.s32 %s26, %s233
          %s235 = smul.addr %s234, 128
          %s236 = scalar_lea.hbm %s0, %s235
          %s237 = sshll.u32 %s228, 4
          %s238 = int_to_ptr.vmem [resolvable:$true] %s237
          %243 = dma.hbm_to_vmem [thread:$0]  %s236, 1024, %s238, %s225, 384, 128, 8
        $region36: #{tpu_custom_call.1} parent=31 // pred_fallthru
          _
      $region32: #{tpu_custom_call.1} parent=5 // pred_fallthru
        _
      %p244 = scmp.le.s32.totalorder 1, %s18
      %p245 = scmp.lt.s32.totalorder %s18, 4
      %p246 = pnand %p244, %p245
      %p247 = pneg %p246
      // Predicated region
      $region37: #{tpu_custom_call.1} parent=5 // pred_check
        _
      $region38: #{tpu_custom_call.1} parent=5 // pred_check_branch
        %249 = sbr.rel (%p246) target = $region40
      $region39: #{tpu_custom_call.1} parent=5 // pred_region
        %s250 = ssub.s32 %s18, 1
        %s251 = sand.u32 %s45, 1
        %s252 = scalar_lea.sflag [#allocation6], %s251
        %s253 = sand.u32 %s45, 1
        %s254 = smul.addr %s253, 64
        %s255 = scalar_lea.vmem [#allocation5], %s254
        // Predicated region
        $region41: #{tpu_custom_call.1} parent=39 // pred_check
          %p256 = pneg %p58
        $region42: #{tpu_custom_call.1} parent=39 // pred_check_branch
          %258 = sbr.rel (%p256) target = $region44
        $region43: #{tpu_custom_call.1} parent=39 // pred_region
          %259 = dma.done %s252, 1024
        $region44: #{tpu_custom_call.1} parent=39 // pred_fallthru
          _
        // Predicated region
        $region45: #{tpu_custom_call.1} parent=39 // pred_check
          %p260 = pneg %p79
        $region46: #{tpu_custom_call.1} parent=39 // pred_check_branch
          %262 = sbr.rel (%p260) target = $region48
        $region47: #{tpu_custom_call.1} parent=39 // pred_region
          %263 = dma.done [#allocation9], 4096
        $region48: #{tpu_custom_call.1} parent=39 // pred_fallthru
          _
        // Predicated region
        $region49: #{tpu_custom_call.1} parent=39 // pred_check
          %p264 = pneg %p121
        $region50: #{tpu_custom_call.1} parent=39 // pred_check_branch
          %266 = sbr.rel (%p264) target = $region52
        $region51: #{tpu_custom_call.1} parent=39 // pred_region
          %267 = dma.done [#allocation9], 1024
        $region52: #{tpu_custom_call.1} parent=39 // pred_fallthru
          _
        %s268 = sand.u32 %s45, 1
        %s269 = scalar_lea.sflag [#allocation6], %s268
        %s270 = sand.u32 %s45, 1
        %s271 = smul.addr %s270, 64
        %s272 = scalar_lea.vmem [#allocation5], %s271
        %p273 = pneg %p58
        %p274 = pneg %p55
        %p275 = pneg %p79
        %p276 = pneg %p76
        %p277 = pneg %p100
        %p278 = pneg %p97
        %p279 = pneg %p121
        %p280 = pneg %p118
        %p281 = pneg %p142
        %p282 = pneg %p139
        %p283 = pneg %p170
        %p284 = pneg %p167
        %s285 = sand.u32 %s157, 1
        %s286 = scalar_lea.sflag [#allocation7], %s285
        %s287 = sand.u32 %s157, 1
        %s288 = smul.addr %s287, 64
        %s289 = scalar_lea.vmem [#allocation11], %s288
        %s290 = smul.u32 8, %s27
        %s291 = smul.u32 8, %s27
        %v293 = vld [vmem:[%s255] sm:$0xff]
        %v295 = vcombine.high %v293, %v293
        %v297 = vunpack.c.l.s4 1966171168
        %v298 = vunpack.c.0.s8 %v297
        %v299 = vlaneseq
        %v300 = vshrl.u32 %v299, 7
        %v301 = vsub.s32 %v298, %v300
        %v302 = vrot.slane %v293, %v301
        %v304 = vunpack.c.l.s4 1966171168
        %v305 = vunpack.c.0.s8 %v304
        %v306 = vlaneseq
        %v307 = vshrl.u32 %v306, 7
        %v308 = vsub.s32 %v305, %v307
        %v309 = vrot.slane %v295, %v308
        %v310 = vcombine.high %v302, %v302
        %v311 = vcombine.high %v309, %v309
        %v313 = vunpack.c.l.s4 1966171168
        %v314 = vunpack.c.0.s8 %v313
        %v315 = vlaneseq
        %v316 = vshrl.u32 %v315, 7
        %v317 = vsub.s32 %v314, %v316
        %v318 = vrot.slane %v302, %v317
        %v320 = vunpack.c.l.s4 1966171168
        %v321 = vunpack.c.0.s8 %v320
        %v322 = vlaneseq
        %v323 = vshrl.u32 %v322, 7
        %v324 = vsub.s32 %v321, %v323
        %v325 = vrot.slane %v309, %v324
        %v327 = vunpack.c.l.s4 1966171168
        %v328 = vunpack.c.0.s8 %v327
        %v329 = vlaneseq
        %v330 = vshrl.u32 %v329, 7
        %v331 = vsub.s32 %v328, %v330
        %v332 = vrot.slane %v310, %v331
        %v334 = vunpack.c.l.s4 1966171168
        %v335 = vunpack.c.0.s8 %v334
        %v336 = vlaneseq
        %v337 = vshrl.u32 %v336, 7
        %v338 = vsub.s32 %v335, %v337
        %v339 = vrot.slane %v311, %v338
        %v340 = vcombine.high %v318, %v318
        %v341 = vcombine.high %v325, %v325
        %v342 = vcombine.high %v332, %v332
        %v343 = vcombine.high %v339, %v339
        %352 = vst [vmem:[#allocation3] sm:$0x1] %v318
        %353 = vst [vmem:[#allocation3 + $0x8] sm:$0x1] %v332
        %354 = vst [vmem:[#allocation3 + $0x10] sm:$0x1] %v340
        %355 = vst [vmem:[#allocation3 + $0x18] sm:$0x1] %v342
        %356 = vst [vmem:[#allocation3 + $0x20] sm:$0x1] %v325
        %357 = vst [vmem:[#allocation3 + $0x28] sm:$0x1] %v339
        %358 = vst [vmem:[#allocation3 + $0x30] sm:$0x1] %v341
        %359 = vst [vmem:[#allocation3 + $0x38] sm:$0x1] %v343
        %s360 = scalar_lea.vmem %s255, 8 [#allocation5]
        %v361 = vld [vmem:[%s360] sm:$0xff]
        %v363 = vcombine.high %v361, %v361
        %v365 = vunpack.c.l.s4 1966171168
        %v366 = vunpack.c.0.s8 %v365
        %v367 = vlaneseq
        %v368 = vshrl.u32 %v367, 7
        %v369 = vsub.s32 %v366, %v368
        %v370 = vrot.slane %v361, %v369
        %v372 = vunpack.c.l.s4 1966171168
        %v373 = vunpack.c.0.s8 %v372
        %v374 = vlaneseq
        %v375 = vshrl.u32 %v374, 7
        %v376 = vsub.s32 %v373, %v375
        %v377 = vrot.slane %v363, %v376
        %v378 = vcombine.high %v370, %v370
        %v379 = vcombine.high %v377, %v377
        %v381 = vunpack.c.l.s4 1966171168
        %v382 = vunpack.c.0.s8 %v381
        %v383 = vlaneseq
        %v384 = vshrl.u32 %v383, 7
        %v385 = vsub.s32 %v382, %v384
        %v386 = vrot.slane %v370, %v385
        %v388 = vunpack.c.l.s4 1966171168
        %v389 = vunpack.c.0.s8 %v388
        %v390 = vlaneseq
        %v391 = vshrl.u32 %v390, 7
        %v392 = vsub.s32 %v389, %v391
        %v393 = vrot.slane %v377, %v392
        %v395 = vunpack.c.l.s4 1966171168
        %v396 = vunpack.c.0.s8 %v395
        %v397 = vlaneseq
        %v398 = vshrl.u32 %v397, 7
        %v399 = vsub.s32 %v396, %v398
        %v400 = vrot.slane %v378, %v399
        %v402 = vunpack.c.l.s4 1966171168
        %v403 = vunpack.c.0.s8 %v402
        %v404 = vlaneseq
        %v405 = vshrl.u32 %v404, 7
        %v406 = vsub.s32 %v403, %v405
        %v407 = vrot.slane %v379, %v406
        %v408 = vcombine.high %v386, %v386
        %v409 = vcombine.high %v393, %v393
        %v410 = vcombine.high %v400, %v400
        %v411 = vcombine.high %v407, %v407
        %420 = vst [vmem:[#allocation3 + $0x1] sm:$0x1] %v386
        %421 = vst [vmem:[#allocation3 + $0x9] sm:$0x1] %v400
        %422 = vst [vmem:[#allocation3 + $0x11] sm:$0x1] %v408
        %423 = vst [vmem:[#allocation3 + $0x19] sm:$0x1] %v410
        %424 = vst [vmem:[#allocation3 + $0x21] sm:$0x1] %v393
        %425 = vst [vmem:[#allocation3 + $0x29] sm:$0x1] %v407
        %426 = vst [vmem:[#allocation3 + $0x31] sm:$0x1] %v409
        %427 = vst [vmem:[#allocation3 + $0x39] sm:$0x1] %v411
        %s428 = scalar_lea.vmem %s255, 16 [#allocation5]
        %v429 = vld [vmem:[%s428] sm:$0xff]
        %v431 = vcombine.high %v429, %v429
        %v433 = vunpack.c.l.s4 1966171168
        %v434 = vunpack.c.0.s8 %v433
        %v435 = vlaneseq
        %v436 = vshrl.u32 %v435, 7
        %v437 = vsub.s32 %v434, %v436
        %v438 = vrot.slane %v429, %v437
        %v440 = vunpack.c.l.s4 1966171168
        %v441 = vunpack.c.0.s8 %v440
        %v442 = vlaneseq
        %v443 = vshrl.u32 %v442, 7
        %v444 = vsub.s32 %v441, %v443
        %v445 = vrot.slane %v431, %v444
        %v446 = vcombine.high %v438, %v438
        %v447 = vcombine.high %v445, %v445
        %v449 = vunpack.c.l.s4 1966171168
        %v450 = vunpack.c.0.s8 %v449
        %v451 = vlaneseq
        %v452 = vshrl.u32 %v451, 7
        %v453 = vsub.s32 %v450, %v452
        %v454 = vrot.slane %v438, %v453
        %v456 = vunpack.c.l.s4 1966171168
        %v457 = vunpack.c.0.s8 %v456
        %v458 = vlaneseq
        %v459 = vshrl.u32 %v458, 7
        %v460 = vsub.s32 %v457, %v459
        %v461 = vrot.slane %v445, %v460
        %v463 = vunpack.c.l.s4 1966171168
        %v464 = vunpack.c.0.s8 %v463
        %v465 = vlaneseq
        %v466 = vshrl.u32 %v465, 7
        %v467 = vsub.s32 %v464, %v466
        %v468 = vrot.slane %v446, %v467
        %v470 = vunpack.c.l.s4 1966171168
        %v471 = vunpack.c.0.s8 %v470
        %v472 = vlaneseq
        %v473 = vshrl.u32 %v472, 7
        %v474 = vsub.s32 %v471, %v473
        %v475 = vrot.slane %v447, %v474
        %v476 = vcombine.high %v454, %v454
        %v477 = vcombine.high %v461, %v461
        %v478 = vcombine.high %v468, %v468
        %v479 = vcombine.high %v475, %v475
        %488 = vst [vmem:[#allocation3 + $0x2] sm:$0x1] %v454
        %489 = vst [vmem:[#allocation3 + $0xa] sm:$0x1] %v468
        %490 = vst [vmem:[#allocation3 + $0x12] sm:$0x1] %v476
        %491 = vst [vmem:[#allocation3 + $0x1a] sm:$0x1] %v478
        %492 = vst [vmem:[#allocation3 + $0x22] sm:$0x1] %v461
        %493 = vst [vmem:[#allocation3 + $0x2a] sm:$0x1] %v475
        %494 = vst [vmem:[#allocation3 + $0x32] sm:$0x1] %v477
        %495 = vst [vmem:[#allocation3 + $0x3a] sm:$0x1] %v479
        %s496 = scalar_lea.vmem %s255, 24 [#allocation5]
        %v497 = vld [vmem:[%s496] sm:$0xff]
        %v499 = vcombine.high %v497, %v497
        %v501 = vunpack.c.l.s4 1966171168
        %v502 = vunpack.c.0.s8 %v501
        %v503 = vlaneseq
        %v504 = vshrl.u32 %v503, 7
        %v505 = vsub.s32 %v502, %v504
        %v506 = vrot.slane %v497, %v505
        %v508 = vunpack.c.l.s4 1966171168
        %v509 = vunpack.c.0.s8 %v508
        %v510 = vlaneseq
        %v511 = vshrl.u32 %v510, 7
        %v512 = vsub.s32 %v509, %v511
        %v513 = vrot.slane %v499, %v512
        %v514 = vcombine.high %v506, %v506
        %v515 = vcombine.high %v513, %v513
        %v517 = vunpack.c.l.s4 1966171168
        %v518 = vunpack.c.0.s8 %v517
        %v519 = vlaneseq
        %v520 = vshrl.u32 %v519, 7
        %v521 = vsub.s32 %v518, %v520
        %v522 = vrot.slane %v506, %v521
        %v524 = vunpack.c.l.s4 1966171168
        %v525 = vunpack.c.0.s8 %v524
        %v526 = vlaneseq
        %v527 = vshrl.u32 %v526, 7
        %v528 = vsub.s32 %v525, %v527
        %v529 = vrot.slane %v513, %v528
        %v531 = vunpack.c.l.s4 1966171168
        %v532 = vunpack.c.0.s8 %v531
        %v533 = vlaneseq
        %v534 = vshrl.u32 %v533, 7
        %v535 = vsub.s32 %v532, %v534
        %v536 = vrot.slane %v514, %v535
        %v538 = vunpack.c.l.s4 1966171168
        %v539 = vunpack.c.0.s8 %v538
        %v540 = vlaneseq
        %v541 = vshrl.u32 %v540, 7
        %v542 = vsub.s32 %v539, %v541
        %v543 = vrot.slane %v515, %v542
        %v544 = vcombine.high %v522, %v522
        %v545 = vcombine.high %v529, %v529
        %v546 = vcombine.high %v536, %v536
        %v547 = vcombine.high %v543, %v543
        %556 = vst [vmem:[#allocation3 + $0x3] sm:$0x1] %v522
        %557 = vst [vmem:[#allocation3 + $0xb] sm:$0x1] %v536
        %558 = vst [vmem:[#allocation3 + $0x13] sm:$0x1] %v544
        %559 = vst [vmem:[#allocation3 + $0x1b] sm:$0x1] %v546
        %560 = vst [vmem:[#allocation3 + $0x23] sm:$0x1] %v529
        %561 = vst [vmem:[#allocation3 + $0x2b] sm:$0x1] %v543
        %562 = vst [vmem:[#allocation3 + $0x33] sm:$0x1] %v545
        %563 = vst [vmem:[#allocation3 + $0x3b] sm:$0x1] %v547
        %s564 = scalar_lea.vmem %s255, 32 [#allocation5]
        %v565 = vld [vmem:[%s564] sm:$0xff]
        %v567 = vcombine.high %v565, %v565
        %v569 = vunpack.c.l.s4 1966171168
        %v570 = vunpack.c.0.s8 %v569
        %v571 = vlaneseq
        %v572 = vshrl.u32 %v571, 7
        %v573 = vsub.s32 %v570, %v572
        %v574 = vrot.slane %v565, %v573
        %v576 = vunpack.c.l.s4 1966171168
        %v577 = vunpack.c.0.s8 %v576
        %v578 = vlaneseq
        %v579 = vshrl.u32 %v578, 7
        %v580 = vsub.s32 %v577, %v579
        %v581 = vrot.slane %v567, %v580
        %v582 = vcombine.high %v574, %v574
        %v583 = vcombine.high %v581, %v581
        %v585 = vunpack.c.l.s4 1966171168
        %v586 = vunpack.c.0.s8 %v585
        %v587 = vlaneseq
        %v588 = vshrl.u32 %v587, 7
        %v589 = vsub.s32 %v586, %v588
        %v590 = vrot.slane %v574, %v589
        %v592 = vunpack.c.l.s4 1966171168
        %v593 = vunpack.c.0.s8 %v592
        %v594 = vlaneseq
        %v595 = vshrl.u32 %v594, 7
        %v596 = vsub.s32 %v593, %v595
        %v597 = vrot.slane %v581, %v596
        %v599 = vunpack.c.l.s4 1966171168
        %v600 = vunpack.c.0.s8 %v599
        %v601 = vlaneseq
        %v602 = vshrl.u32 %v601, 7
        %v603 = vsub.s32 %v600, %v602
        %v604 = vrot.slane %v582, %v603
        %v606 = vunpack.c.l.s4 1966171168
        %v607 = vunpack.c.0.s8 %v606
        %v608 = vlaneseq
        %v609 = vshrl.u32 %v608, 7
        %v610 = vsub.s32 %v607, %v609
        %v611 = vrot.slane %v583, %v610
        %v612 = vcombine.high %v590, %v590
        %v613 = vcombine.high %v597, %v597
        %v614 = vcombine.high %v604, %v604
        %v615 = vcombine.high %v611, %v611
        %624 = vst [vmem:[#allocation3 + $0x4] sm:$0x1] %v590
        %625 = vst [vmem:[#allocation3 + $0xc] sm:$0x1] %v604
        %626 = vst [vmem:[#allocation3 + $0x14] sm:$0x1] %v612
        %627 = vst [vmem:[#allocation3 + $0x1c] sm:$0x1] %v614
        %628 = vst [vmem:[#allocation3 + $0x24] sm:$0x1] %v597
        %629 = vst [vmem:[#allocation3 + $0x2c] sm:$0x1] %v611
        %630 = vst [vmem:[#allocation3 + $0x34] sm:$0x1] %v613
        %631 = vst [vmem:[#allocation3 + $0x3c] sm:$0x1] %v615
        %s632 = scalar_lea.vmem %s255, 40 [#allocation5]
        %v633 = vld [vmem:[%s632] sm:$0xff]
        %v635 = vcombine.high %v633, %v633
        %v637 = vunpack.c.l.s4 1966171168
        %v638 = vunpack.c.0.s8 %v637
        %v639 = vlaneseq
        %v640 = vshrl.u32 %v639, 7
        %v641 = vsub.s32 %v638, %v640
        %v642 = vrot.slane %v633, %v641
        %v644 = vunpack.c.l.s4 1966171168
        %v645 = vunpack.c.0.s8 %v644
        %v646 = vlaneseq
        %v647 = vshrl.u32 %v646, 7
        %v648 = vsub.s32 %v645, %v647
        %v649 = vrot.slane %v635, %v648
        %v650 = vcombine.high %v642, %v642
        %v651 = vcombine.high %v649, %v649
        %v653 = vunpack.c.l.s4 1966171168
        %v654 = vunpack.c.0.s8 %v653
        %v655 = vlaneseq
        %v656 = vshrl.u32 %v655, 7
        %v657 = vsub.s32 %v654, %v656
        %v658 = vrot.slane %v642, %v657
        %v660 = vunpack.c.l.s4 1966171168
        %v661 = vunpack.c.0.s8 %v660
        %v662 = vlaneseq
        %v663 = vshrl.u32 %v662, 7
        %v664 = vsub.s32 %v661, %v663
        %v665 = vrot.slane %v649, %v664
        %v667 = vunpack.c.l.s4 1966171168
        %v668 = vunpack.c.0.s8 %v667
        %v669 = vlaneseq
        %v670 = vshrl.u32 %v669, 7
        %v671 = vsub.s32 %v668, %v670
        %v672 = vrot.slane %v650, %v671
        %v674 = vunpack.c.l.s4 1966171168
        %v675 = vunpack.c.0.s8 %v674
        %v676 = vlaneseq
        %v677 = vshrl.u32 %v676, 7
        %v678 = vsub.s32 %v675, %v677
        %v679 = vrot.slane %v651, %v678
        %v680 = vcombine.high %v658, %v658
        %v681 = vcombine.high %v665, %v665
        %v682 = vcombine.high %v672, %v672
        %v683 = vcombine.high %v679, %v679
        %692 = vst [vmem:[#allocation3 + $0x5] sm:$0x1] %v658
        %693 = vst [vmem:[#allocation3 + $0xd] sm:$0x1] %v672
        %694 = vst [vmem:[#allocation3 + $0x15] sm:$0x1] %v680
        %695 = vst [vmem:[#allocation3 + $0x1d] sm:$0x1] %v682
        %696 = vst [vmem:[#allocation3 + $0x25] sm:$0x1] %v665
        %697 = vst [vmem:[#allocation3 + $0x2d] sm:$0x1] %v679
        %698 = vst [vmem:[#allocation3 + $0x35] sm:$0x1] %v681
        %699 = vst [vmem:[#allocation3 + $0x3d] sm:$0x1] %v683
        %s700 = scalar_lea.vmem %s255, 48 [#allocation5]
        %v701 = vld [vmem:[%s700] sm:$0xff]
        %v703 = vcombine.high %v701, %v701
        %v705 = vunpack.c.l.s4 1966171168
        %v706 = vunpack.c.0.s8 %v705
        %v707 = vlaneseq
        %v708 = vshrl.u32 %v707, 7
        %v709 = vsub.s32 %v706, %v708
        %v710 = vrot.slane %v701, %v709
        %v712 = vunpack.c.l.s4 1966171168
        %v713 = vunpack.c.0.s8 %v712
        %v714 = vlaneseq
        %v715 = vshrl.u32 %v714, 7
        %v716 = vsub.s32 %v713, %v715
        %v717 = vrot.slane %v703, %v716
        %v718 = vcombine.high %v710, %v710
        %v719 = vcombine.high %v717, %v717
        %v721 = vunpack.c.l.s4 1966171168
        %v722 = vunpack.c.0.s8 %v721
        %v723 = vlaneseq
        %v724 = vshrl.u32 %v723, 7
        %v725 = vsub.s32 %v722, %v724
        %v726 = vrot.slane %v710, %v725
        %v728 = vunpack.c.l.s4 1966171168
        %v729 = vunpack.c.0.s8 %v728
        %v730 = vlaneseq
        %v731 = vshrl.u32 %v730, 7
        %v732 = vsub.s32 %v729, %v731
        %v733 = vrot.slane %v717, %v732
        %v735 = vunpack.c.l.s4 1966171168
        %v736 = vunpack.c.0.s8 %v735
        %v737 = vlaneseq
        %v738 = vshrl.u32 %v737, 7
        %v739 = vsub.s32 %v736, %v738
        %v740 = vrot.slane %v718, %v739
        %v742 = vunpack.c.l.s4 1966171168
        %v743 = vunpack.c.0.s8 %v742
        %v744 = vlaneseq
        %v745 = vshrl.u32 %v744, 7
        %v746 = vsub.s32 %v743, %v745
        %v747 = vrot.slane %v719, %v746
        %v748 = vcombine.high %v726, %v726
        %v749 = vcombine.high %v733, %v733
        %v750 = vcombine.high %v740, %v740
        %v751 = vcombine.high %v747, %v747
        %760 = vst [vmem:[#allocation3 + $0x6] sm:$0x1] %v726
        %761 = vst [vmem:[#allocation3 + $0xe] sm:$0x1] %v740
        %762 = vst [vmem:[#allocation3 + $0x16] sm:$0x1] %v748
        %763 = vst [vmem:[#allocation3 + $0x1e] sm:$0x1] %v750
        %764 = vst [vmem:[#allocation3 + $0x26] sm:$0x1] %v733
        %765 = vst [vmem:[#allocation3 + $0x2e] sm:$0x1] %v747
        %766 = vst [vmem:[#allocation3 + $0x36] sm:$0x1] %v749
        %767 = vst [vmem:[#allocation3 + $0x3e] sm:$0x1] %v751
        %s768 = scalar_lea.vmem %s255, 56 [#allocation5]
        %v769 = vld [vmem:[%s768] sm:$0xff]
        %v771 = vcombine.high %v769, %v769
        %v773 = vunpack.c.l.s4 1966171168
        %v774 = vunpack.c.0.s8 %v773
        %v775 = vlaneseq
        %v776 = vshrl.u32 %v775, 7
        %v777 = vsub.s32 %v774, %v776
        %v778 = vrot.slane %v769, %v777
        %v780 = vunpack.c.l.s4 1966171168
        %v781 = vunpack.c.0.s8 %v780
        %v782 = vlaneseq
        %v783 = vshrl.u32 %v782, 7
        %v784 = vsub.s32 %v781, %v783
        %v785 = vrot.slane %v771, %v784
        %v786 = vcombine.high %v778, %v778
        %v787 = vcombine.high %v785, %v785
        %v789 = vunpack.c.l.s4 1966171168
        %v790 = vunpack.c.0.s8 %v789
        %v791 = vlaneseq
        %v792 = vshrl.u32 %v791, 7
        %v793 = vsub.s32 %v790, %v792
        %v794 = vrot.slane %v778, %v793
        %v796 = vunpack.c.l.s4 1966171168
        %v797 = vunpack.c.0.s8 %v796
        %v798 = vlaneseq
        %v799 = vshrl.u32 %v798, 7
        %v800 = vsub.s32 %v797, %v799
        %v801 = vrot.slane %v785, %v800
        %v803 = vunpack.c.l.s4 1966171168
        %v804 = vunpack.c.0.s8 %v803
        %v805 = vlaneseq
        %v806 = vshrl.u32 %v805, 7
        %v807 = vsub.s32 %v804, %v806
        %v808 = vrot.slane %v786, %v807
        %v810 = vunpack.c.l.s4 1966171168
        %v811 = vunpack.c.0.s8 %v810
        %v812 = vlaneseq
        %v813 = vshrl.u32 %v812, 7
        %v814 = vsub.s32 %v811, %v813
        %v815 = vrot.slane %v787, %v814
        %v816 = vcombine.high %v794, %v794
        %v817 = vcombine.high %v801, %v801
        %v818 = vcombine.high %v808, %v808
        %v819 = vcombine.high %v815, %v815
        %828 = vst [vmem:[#allocation3 + $0x7] sm:$0x1] %v794
        %829 = vst [vmem:[#allocation3 + $0xf] sm:$0x1] %v808
        %830 = vst [vmem:[#allocation3 + $0x17] sm:$0x1] %v816
        %831 = vst [vmem:[#allocation3 + $0x1f] sm:$0x1] %v818
        %832 = vst [vmem:[#allocation3 + $0x27] sm:$0x1] %v801
        %833 = vst [vmem:[#allocation3 + $0x2f] sm:$0x1] %v815
        %834 = vst [vmem:[#allocation3 + $0x37] sm:$0x1] %v817
        %835 = vst [vmem:[#allocation3 + $0x3f] sm:$0x1] %v819
        %p836 = scmp.eq.s32.totalorder %s28, 0
        // Predicated region
        $region53: #{tpu_custom_call.1} parent=39 // pred_check
          %p837 = pneg %p836
        $region54: #{tpu_custom_call.1} parent=39 // pred_check_branch
          %839 = sbr.rel (%p837) target = $region56
        $region55: #{tpu_custom_call.1} parent=39 // pred_region
          %840 = vst [vmem:[#allocation2] sm:$0xff] -1.0
          %841 = vst [vmem:[#allocation2 + $0x8] sm:$0xff] -1.0
          %842 = vst [vmem:[#allocation2 + $0x10] sm:$0xff] -1.0
          %843 = vst [vmem:[#allocation2 + $0x18] sm:$0xff] -1.0
        $region56: #{tpu_custom_call.1} parent=39 // pred_fallthru
          _
        %v844 = vld [vmem:[#allocation8] sm:$0xf]
        %v845 = vld [vmem:[#allocation8 + $0x4] sm:$0xf]
        %v846 = vld [vmem:[#allocation8 + $0x8] sm:$0xf]
        %v847 = vld [vmem:[#allocation8 + $0xc] sm:$0xf]
        %v848 = vld [vmem:[#allocation8 + $0x10] sm:$0xf]
        %v849 = vld [vmem:[#allocation8 + $0x14] sm:$0xf]
        %v850 = vld [vmem:[#allocation8 + $0x18] sm:$0xf]
        %v851 = vld [vmem:[#allocation8 + $0x1c] sm:$0xf]
        %v852 = vld [vmem:[#allocation8 + $0x20] sm:$0xf]
        %v853 = vld [vmem:[#allocation8 + $0x24] sm:$0xf]
        %v854 = vld [vmem:[#allocation8 + $0x28] sm:$0xf]
        %v855 = vld [vmem:[#allocation8 + $0x2c] sm:$0xf]
        %v856 = vld [vmem:[#allocation8 + $0x30] sm:$0xf]
        %v857 = vld [vmem:[#allocation8 + $0x34] sm:$0xf]
        %v858 = vld [vmem:[#allocation8 + $0x38] sm:$0xf]
        %v859 = vld [vmem:[#allocation8 + $0x3c] sm:$0xf]
        %v860 = vld [vmem:[#allocation8 + $0x40] sm:$0xf]
        %v861 = vld [vmem:[#allocation8 + $0x44] sm:$0xf]
        %v862 = vld [vmem:[#allocation8 + $0x48] sm:$0xf]
        %v863 = vld [vmem:[#allocation8 + $0x4c] sm:$0xf]
        %v864 = vld [vmem:[#allocation8 + $0x50] sm:$0xf]
        %v865 = vld [vmem:[#allocation8 + $0x54] sm:$0xf]
        %v866 = vld [vmem:[#allocation8 + $0x58] sm:$0xf]
        %v867 = vld [vmem:[#allocation8 + $0x5c] sm:$0xf]
        %v868 = vld [vmem:[#allocation8 + $0x60] sm:$0xf]
        %v869 = vld [vmem:[#allocation8 + $0x64] sm:$0xf]
        %v870 = vld [vmem:[#allocation8 + $0x68] sm:$0xf]
        %v871 = vld [vmem:[#allocation8 + $0x6c] sm:$0xf]
        %v872 = vld [vmem:[#allocation8 + $0x70] sm:$0xf]
        %v873 = vld [vmem:[#allocation8 + $0x74] sm:$0xf]
        %v874 = vld [vmem:[#allocation8 + $0x78] sm:$0xf]
        %v875 = vld [vmem:[#allocation8 + $0x7c] sm:$0xf]
        %v876 = vld [vmem:[#allocation8 + $0x80] sm:$0xf]
        %v877 = vld [vmem:[#allocation8 + $0x84] sm:$0xf]
        %v878 = vld [vmem:[#allocation8 + $0x88] sm:$0xf]
        %v879 = vld [vmem:[#allocation8 + $0x8c] sm:$0xf]
        %v880 = vld [vmem:[#allocation8 + $0x90] sm:$0xf]
        %v881 = vld [vmem:[#allocation8 + $0x94] sm:$0xf]
        %v882 = vld [vmem:[#allocation8 + $0x98] sm:$0xf]
        %v883 = vld [vmem:[#allocation8 + $0x9c] sm:$0xf]
        %v884 = vld [vmem:[#allocation8 + $0xa0] sm:$0xf]
        %v885 = vld [vmem:[#allocation8 + $0xa4] sm:$0xf]
        %v886 = vld [vmem:[#allocation8 + $0xa8] sm:$0xf]
        %v887 = vld [vmem:[#allocation8 + $0xac] sm:$0xf]
        %v888 = vld [vmem:[#allocation8 + $0xb0] sm:$0xf]
        %v889 = vld [vmem:[#allocation8 + $0xb4] sm:$0xf]
        %v890 = vld [vmem:[#allocation8 + $0xb8] sm:$0xf]
        %v891 = vld [vmem:[#allocation8 + $0xbc] sm:$0xf]
        %v892 = vld [vmem:[#allocation8 + $0xc0] sm:$0xf]
        %v893 = vld [vmem:[#allocation8 + $0xc4] sm:$0xf]
        %v894 = vld [vmem:[#allocation8 + $0xc8] sm:$0xf]
        %v895 = vld [vmem:[#allocation8 + $0xcc] sm:$0xf]
        %v896 = vld [vmem:[#allocation8 + $0xd0] sm:$0xf]
        %v897 = vld [vmem:[#allocation8 + $0xd4] sm:$0xf]
        %v898 = vld [vmem:[#allocation8 + $0xd8] sm:$0xf]
        %v899 = vld [vmem:[#allocation8 + $0xdc] sm:$0xf]
        %v900 = vld [vmem:[#allocation8 + $0xe0] sm:$0xf]
        %v901 = vld [vmem:[#allocation8 + $0xe4] sm:$0xf]
        %v902 = vld [vmem:[#allocation8 + $0xe8] sm:$0xf]
        %v903 = vld [vmem:[#allocation8 + $0xec] sm:$0xf]
        %v904 = vld [vmem:[#allocation8 + $0xf0] sm:$0xf]
        %v905 = vld [vmem:[#allocation8 + $0xf4] sm:$0xf]
        %v906 = vld [vmem:[#allocation8 + $0xf8] sm:$0xf]
        %v907 = vld [vmem:[#allocation8 + $0xfc] sm:$0xf]
        %v908 = vld [vmem:[#allocation10] sm:$0xf]
        %v909 = vld [vmem:[#allocation10 + $0x4] sm:$0xf]
        %v910 = vld [vmem:[#allocation10 + $0x8] sm:$0xf]
        %v911 = vld [vmem:[#allocation10 + $0xc] sm:$0xf]
        %v912 = vld [vmem:[#allocation10 + $0x10] sm:$0xf]
        %v913 = vld [vmem:[#allocation10 + $0x14] sm:$0xf]
        %v914 = vld [vmem:[#allocation10 + $0x18] sm:$0xf]
        %v915 = vld [vmem:[#allocation10 + $0x1c] sm:$0xf]
        %v916 = vld [vmem:[#allocation10 + $0x20] sm:$0xf]
        %v917 = vld [vmem:[#allocation10 + $0x24] sm:$0xf]
        %v918 = vld [vmem:[#allocation10 + $0x28] sm:$0xf]
        %v919 = vld [vmem:[#allocation10 + $0x2c] sm:$0xf]
        %v920 = vld [vmem:[#allocation10 + $0x30] sm:$0xf]
        %v921 = vld [vmem:[#allocation10 + $0x34] sm:$0xf]
        %v922 = vld [vmem:[#allocation10 + $0x38] sm:$0xf]
        %v923 = vld [vmem:[#allocation10 + $0x3c] sm:$0xf]
        %v924 = vld [vmem:[%s2] sm:$0x1]
        %v926 = vlaneseq
        %v927 = vshrl.u32 %v926, 7
        %v928 = vsub.s32 0, %v927
        %v929 = vrot.slane %v924, %v928
        %v931 = vld [vmem:[%s4] sm:$0x1]
        %v933 = vlaneseq
        %v934 = vshrl.u32 %v933, 7
        %v935 = vsub.s32 0, %v934
        %v936 = vrot.slane %v931, %v935
        %v938 = vld [vmem:[#allocation2] sm:$0xff]
        %v939 = vld [vmem:[#allocation2 + $0x8] sm:$0xff]
        %v940 = vld [vmem:[#allocation2 + $0x10] sm:$0xff]
        %v941 = vld [vmem:[#allocation2 + $0x18] sm:$0xff]
        %v942 = vpack.c.bf16 %v938, %v938
        %v943 = vpack.c.bf16 %v939, %v939
        %v944 = vpack.c.bf16 %v940, %v940
        %v945 = vpack.c.bf16 %v941, %v941
        %v962 = vunpack.c.l.b16 %v892
        %v963 = vunpack.c.l.b16 %v893
        %v964 = vunpack.c.l.b16 %v894
        %v965 = vunpack.c.l.b16 %v895
        %v966 = vunpack.c.l.b16 %v896
        %v967 = vunpack.c.l.b16 %v897
        %v968 = vunpack.c.l.b16 %v898
        %v969 = vunpack.c.l.b16 %v899
        %v970 = vunpack.c.l.b16 %v900
        %v971 = vunpack.c.l.b16 %v901
        %v972 = vunpack.c.l.b16 %v902
        %v973 = vunpack.c.l.b16 %v903
        %v974 = vunpack.c.l.b16 %v904
        %v975 = vunpack.c.l.b16 %v905
        %v976 = vunpack.c.l.b16 %v906
        %v977 = vunpack.c.l.b16 %v907
        %v978 = vpack.c.b16 %v963, %v962
        %v979 = vpack.c.b16 %v965, %v964
        %v980 = vpack.c.b16 %v967, %v966
        %v981 = vpack.c.b16 %v969, %v968
        %v982 = vpack.c.b16 %v971, %v970
        %v983 = vpack.c.b16 %v973, %v972
        %v984 = vpack.c.b16 %v975, %v974
        %v985 = vpack.c.b16 %v977, %v976
        %994 = vmatprep.subr.bf16.mxu0 0
        %995 = vmatpush1.bf16.msra.mxu0 %v978
        %996 = vmatprep.subr.bf16.mxu0 0
        %997 = vmatpush1.bf16.msra.mxu0 %v979
        %998 = vmatprep.subr.bf16.mxu0 0
        %999 = vmatpush1.bf16.msra.mxu0 %v980
        %1000 = vmatprep.subr.bf16.mxu0 0
        %1001 = vmatpush1.bf16.msra.mxu0 %v981
        %1002 = vmatprep.subr.bf16.mxu0 0
        %1003 = vmatpush1.bf16.msra.mxu0 %v982
        %1004 = vmatprep.subr.bf16.mxu0 0
        %1005 = vmatpush1.bf16.msra.mxu0 %v983
        %1006 = vmatprep.subr.bf16.mxu0 0
        %1007 = vmatpush1.bf16.msra.mxu0 %v984
        %1008 = vmatprep.subr.bf16.mxu0 0
        %1009 = vmatpush1.bf16.msra.mxu0 %v985
        %1010 = vmatprep.subr.bf16.mxu0 0
        %1011 = vmatpush1.bf16.msra.mxu0 0
        %1012 = vmatprep.subr.bf16.mxu0 0
        %1013 = vmatpush1.bf16.msra.mxu0 0
        %1014 = vmatprep.subr.bf16.mxu0 0
        %1015 = vmatpush1.bf16.msra.mxu0 0
        %1016 = vmatprep.subr.bf16.mxu0 0
        %1017 = vmatpush1.bf16.msra.mxu0 0
        %1018 = vmatprep.subr.bf16.mxu0 0
        %1019 = vmatpush1.bf16.msra.mxu0 0
        %1020 = vmatprep.subr.bf16.mxu0 0
        %1021 = vmatpush1.bf16.msra.mxu0 0
        %1022 = vmatprep.subr.bf16.mxu0 0
        %1023 = vmatpush1.bf16.msra.mxu0 0
        %1024 = vmatprep.subr.bf16.mxu0 0
        %1025 = vmatpush1.bf16.msra.mxu0 0
        %1026 = vmatprep.mubr.bf16.mxu0 0
        %1027 = vmatmul.mubr.bf16.gmra.mrb[0].mxu0 %v945
        %v1028 = vpop.f32.mrb[0].mxu0
        %v1029 = vadd.f32 0.0, %v1028
        %v1030 = vpop.f32.mrb[0].mxu0
        %v1031 = vpop.f32.mrb[0].mxu0
        %v1032 = vpop.f32.mrb[0].mxu0
        %1033 = vdwg.mxu0
        %v1082 = vunpack.c.l.b16 %v844
        %v1083 = vunpack.c.l.b16 %v845
        %v1084 = vunpack.c.l.b16 %v846
        %v1085 = vunpack.c.l.b16 %v847
        %v1086 = vunpack.c.l.b16 %v848
        %v1087 = vunpack.c.l.b16 %v849
        %v1088 = vunpack.c.l.b16 %v850
        %v1089 = vunpack.c.l.b16 %v851
        %v1090 = vunpack.c.l.b16 %v852
        %v1091 = vunpack.c.l.b16 %v853
        %v1092 = vunpack.c.l.b16 %v854
        %v1093 = vunpack.c.l.b16 %v855
        %v1094 = vunpack.c.l.b16 %v856
        %v1095 = vunpack.c.l.b16 %v857
        %v1096 = vunpack.c.l.b16 %v858
        %v1097 = vunpack.c.l.b16 %v859
        %v1098 = vunpack.c.l.b16 %v860
        %v1099 = vunpack.c.l.b16 %v861
        %v1100 = vunpack.c.l.b16 %v862
        %v1101 = vunpack.c.l.b16 %v863
        %v1102 = vunpack.c.l.b16 %v864
        %v1103 = vunpack.c.l.b16 %v865
        %v1104 = vunpack.c.l.b16 %v866
        %v1105 = vunpack.c.l.b16 %v867
        %v1106 = vunpack.c.l.b16 %v868
        %v1107 = vunpack.c.l.b16 %v869
        %v1108 = vunpack.c.l.b16 %v870
        %v1109 = vunpack.c.l.b16 %v871
        %v1110 = vunpack.c.l.b16 %v872
        %v1111 = vunpack.c.l.b16 %v873
        %v1112 = vunpack.c.l.b16 %v874
        %v1113 = vunpack.c.l.b16 %v875
        %v1114 = vunpack.c.l.b16 %v876
        %v1115 = vunpack.c.l.b16 %v877
        %v1116 = vunpack.c.l.b16 %v878
        %v1117 = vunpack.c.l.b16 %v879
        %v1118 = vunpack.c.l.b16 %v880
        %v1119 = vunpack.c.l.b16 %v881
        %v1120 = vunpack.c.l.b16 %v882
        %v1121 = vunpack.c.l.b16 %v883
        %v1122 = vunpack.c.l.b16 %v884
        %v1123 = vunpack.c.l.b16 %v885
        %v1124 = vunpack.c.l.b16 %v886
        %v1125 = vunpack.c.l.b16 %v887
        %v1126 = vunpack.c.l.b16 %v888
        %v1127 = vunpack.c.l.b16 %v889
        %v1128 = vunpack.c.l.b16 %v890
        %v1129 = vunpack.c.l.b16 %v891
        %v1130 = vpack.c.b16 %v1083, %v1082
        %v1131 = vpack.c.b16 %v1085, %v1084
        %v1132 = vpack.c.b16 %v1087, %v1086
        %v1133 = vpack.c.b16 %v1089, %v1088
        %v1134 = vpack.c.b16 %v1091, %v1090
        %v1135 = vpack.c.b16 %v1093, %v1092
        %v1136 = vpack.c.b16 %v1095, %v1094
        %v1137 = vpack.c.b16 %v1097, %v1096
        %v1138 = vpack.c.b16 %v1099, %v1098
        %v1139 = vpack.c.b16 %v1101, %v1100
        %v1140 = vpack.c.b16 %v1103, %v1102
        %v1141 = vpack.c.b16 %v1105, %v1104
        %v1142 = vpack.c.b16 %v1107, %v1106
        %v1143 = vpack.c.b16 %v1109, %v1108
        %v1144 = vpack.c.b16 %v1111, %v1110
        %v1145 = vpack.c.b16 %v1113, %v1112
        %v1146 = vpack.c.b16 %v1115, %v1114
        %v1147 = vpack.c.b16 %v1117, %v1116
        %v1148 = vpack.c.b16 %v1119, %v1118
        %v1149 = vpack.c.b16 %v1121, %v1120
        %v1150 = vpack.c.b16 %v1123, %v1122
        %v1151 = vpack.c.b16 %v1125, %v1124
        %v1152 = vpack.c.b16 %v1127, %v1126
        %v1153 = vpack.c.b16 %v1129, %v1128
        %1178 = vmatprep.subr.bf16.mxu0 0
        %1179 = vmatpush1.bf16.msra.mxu0 %v1130
        %1180 = vmatprep.subr.bf16.mxu0 0
        %1181 = vmatpush1.bf16.msra.mxu0 %v1131
        %1182 = vmatprep.subr.bf16.mxu0 0
        %1183 = vmatpush1.bf16.msra.mxu0 %v1132
        %1184 = vmatprep.subr.bf16.mxu0 0
        %1185 = vmatpush1.bf16.msra.mxu0 %v1133
        %1186 = vmatprep.subr.bf16.mxu0 0
        %1187 = vmatpush1.bf16.msra.mxu0 %v1134
        %1188 = vmatprep.subr.bf16.mxu0 0
        %1189 = vmatpush1.bf16.msra.mxu0 %v1135
        %1190 = vmatprep.subr.bf16.mxu0 0
        %1191 = vmatpush1.bf16.msra.mxu0 %v1136
        %1192 = vmatprep.subr.bf16.mxu0 0
        %1193 = vmatpush1.bf16.msra.mxu0 %v1137
        %1194 = vmatprep.subr.bf16.mxu0 0
        %1195 = vmatpush1.bf16.msra.mxu0 %v1138
        %1196 = vmatprep.subr.bf16.mxu0 0
        %1197 = vmatpush1.bf16.msra.mxu0 %v1139
        %1198 = vmatprep.subr.bf16.mxu0 0
        %1199 = vmatpush1.bf16.msra.mxu0 %v1140
        %1200 = vmatprep.subr.bf16.mxu0 0
        %1201 = vmatpush1.bf16.msra.mxu0 %v1141
        %1202 = vmatprep.subr.bf16.mxu0 0
        %1203 = vmatpush1.bf16.msra.mxu0 %v1142
        %1204 = vmatprep.subr.bf16.mxu0 0
        %1205 = vmatpush1.bf16.msra.mxu0 %v1143
        %1206 = vmatprep.subr.bf16.mxu0 0
        %1207 = vmatpush1.bf16.msra.mxu0 %v1144
        %1208 = vmatprep.subr.bf16.mxu0 0
        %1209 = vmatpush1.bf16.msra.mxu0 %v1145
        %1210 = vmatprep.mubr.bf16.mxu0 %v943
        %1211 = vmatmul.mubr.bf16.gmra.mrb[0].mxu0 %v942
        %v1212 = vpop.f32.mrb[0].mxu0
        %v1213 = vadd.f32 %v1029, %v1212
        %v1214 = vpop.f32.mrb[0].mxu0
        %v1215 = vpop.f32.mrb[0].mxu0
        %v1216 = vpop.f32.mrb[0].mxu0
        %1217 = vdwg.mxu0
        %1218 = vmatprep.subr.bf16.mxu0 0
        %1219 = vmatpush1.bf16.msra.mxu0 %v1146
        %1220 = vmatprep.subr.bf16.mxu0 0
        %1221 = vmatpush1.bf16.msra.mxu0 %v1147
        %1222 = vmatprep.subr.bf16.mxu0 0
        %1223 = vmatpush1.bf16.msra.mxu0 %v1148
        %1224 = vmatprep.subr.bf16.mxu0 0
        %1225 = vmatpush1.bf16.msra.mxu0 %v1149
        %1226 = vmatprep.subr.bf16.mxu0 0
        %1227 = vmatpush1.bf16.msra.mxu0 %v1150
        %1228 = vmatprep.subr.bf16.mxu0 0
        %1229 = vmatpush1.bf16.msra.mxu0 %v1151
        %1230 = vmatprep.subr.bf16.mxu0 0
        %1231 = vmatpush1.bf16.msra.mxu0 %v1152
        %1232 = vmatprep.subr.bf16.mxu0 0
        %1233 = vmatpush1.bf16.msra.mxu0 %v1153
        %1234 = vmatprep.subr.bf16.mxu0 0
        %1235 = vmatpush1.bf16.msra.mxu0 0
        %1236 = vmatprep.subr.bf16.mxu0 0
        %1237 = vmatpush1.bf16.msra.mxu0 0
        %1238 = vmatprep.subr.bf16.mxu0 0
        %1239 = vmatpush1.bf16.msra.mxu0 0
        %1240 = vmatprep.subr.bf16.mxu0 0
        %1241 = vmatpush1.bf16.msra.mxu0 0
        %1242 = vmatprep.subr.bf16.mxu0 0
        %1243 = vmatpush1.bf16.msra.mxu0 0
        %1244 = vmatprep.subr.bf16.mxu0 0
        %1245 = vmatpush1.bf16.msra.mxu0 0
        %1246 = vmatprep.subr.bf16.mxu0 0
        %1247 = vmatpush1.bf16.msra.mxu0 0
        %1248 = vmatprep.subr.bf16.mxu0 0
        %1249 = vmatpush1.bf16.msra.mxu0 0
        %1250 = vmatprep.mubr.bf16.mxu0 0
        %1251 = vmatmul.mubr.bf16.gmra.mrb[0].mxu0 %v944
        %v1252 = vpop.f32.mrb[0].mxu0
        %v1253 = vadd.f32 %v1213, %v1252
        %v1254 = vpop.f32.mrb[0].mxu0
        %v1255 = vpop.f32.mrb[0].mxu0
        %v1256 = vpop.f32.mrb[0].mxu0
        %1257 = vdwg.mxu0
        %v1258 = vadd.f32 %v1253, %v929
        %v1259 = vtanh.pop %v1258
        %v1260 = vpack.c.bf16 %v1259, %v1259
        %v1277 = vunpack.c.l.b16 %v908
        %v1278 = vunpack.c.l.b16 %v909
        %v1279 = vunpack.c.l.b16 %v910
        %v1280 = vunpack.c.l.b16 %v911
        %v1281 = vunpack.c.l.b16 %v912
        %v1282 = vunpack.c.l.b16 %v913
        %v1283 = vunpack.c.l.b16 %v914
        %v1284 = vunpack.c.l.b16 %v915
        %v1285 = vunpack.c.l.b16 %v916
        %v1286 = vunpack.c.l.b16 %v917
        %v1287 = vunpack.c.l.b16 %v918
        %v1288 = vunpack.c.l.b16 %v919
        %v1289 = vunpack.c.l.b16 %v920
        %v1290 = vunpack.c.l.b16 %v921
        %v1291 = vunpack.c.l.b16 %v922
        %v1292 = vunpack.c.l.b16 %v923
        %v1293 = vpack.c.b16 %v1278, %v1277
        %v1294 = vpack.c.b16 %v1280, %v1279
        %v1295 = vpack.c.b16 %v1282, %v1281
        %v1296 = vpack.c.b16 %v1284, %v1283
        %v1297 = vpack.c.b16 %v1286, %v1285
        %v1298 = vpack.c.b16 %v1288, %v1287
        %v1299 = vpack.c.b16 %v1290, %v1289
        %v1300 = vpack.c.b16 %v1292, %v1291
        %1309 = vmatprep.subr.bf16.mxu0 0
        %1310 = vmatpush1.bf16.msra.mxu0 %v1293
        %1311 = vmatprep.subr.bf16.mxu0 0
        %1312 = vmatpush1.bf16.msra.mxu0 %v1294
        %1313 = vmatprep.subr.bf16.mxu0 0
        %1314 = vmatpush1.bf16.msra.mxu0 %v1295
        %1315 = vmatprep.subr.bf16.mxu0 0
        %1316 = vmatpush1.bf16.msra.mxu0 %v1296
        %1317 = vmatprep.subr.bf16.mxu0 0
        %1318 = vmatpush1.bf16.msra.mxu0 %v1297
        %1319 = vmatprep.subr.bf16.mxu0 0
        %1320 = vmatpush1.bf16.msra.mxu0 %v1298
        %1321 = vmatprep.subr.bf16.mxu0 0
        %1322 = vmatpush1.bf16.msra.mxu0 %v1299
        %1323 = vmatprep.subr.bf16.mxu0 0
        %1324 = vmatpush1.bf16.msra.mxu0 %v1300
        %1325 = vmatprep.subr.bf16.mxu0 0
        %1326 = vmatpush1.bf16.msra.mxu0 0
        %1327 = vmatprep.subr.bf16.mxu0 0
        %1328 = vmatpush1.bf16.msra.mxu0 0
        %1329 = vmatprep.subr.bf16.mxu0 0
        %1330 = vmatpush1.bf16.msra.mxu0 0
        %1331 = vmatprep.subr.bf16.mxu0 0
        %1332 = vmatpush1.bf16.msra.mxu0 0
        %1333 = vmatprep.subr.bf16.mxu0 0
        %1334 = vmatpush1.bf16.msra.mxu0 0
        %1335 = vmatprep.subr.bf16.mxu0 0
        %1336 = vmatpush1.bf16.msra.mxu0 0
        %1337 = vmatprep.subr.bf16.mxu0 0
        %1338 = vmatpush1.bf16.msra.mxu0 0
        %1339 = vmatprep.subr.bf16.mxu0 0
        %1340 = vmatpush1.bf16.msra.mxu0 0
        %1341 = vmatprep.mubr.bf16.mxu0 0
        %1342 = vmatmul.mubr.bf16.gmra.mrb[0].mxu0 %v1260
        %v1343 = vpop.f32.mrb[0].mxu0
        %v1344 = vadd.f32 %v936, %v1343
        %v1345 = vpop.f32.mrb[0].mxu0
        %v1346 = vpop.f32.mrb[0].mxu0
        %v1347 = vpop.f32.mrb[0].mxu0
        %1348 = vdwg.mxu0
        %v1349 = vld [vmem:[#allocation3] sm:$0xff]
        %vm1350 = vcmp.ne.f32.partialorder %v1349, %v1349
        %v1351 = vsel %vm1350, %v1344, %v1349
        %1352 = vst [vmem:[#allocation4] sm:$0xff] %v1351
        %v1353 = vpack.c.bf16 %v1351, %v1351
        %1354 = vmatprep.subr.bf16.mxu0 0
        %1355 = vmatpush1.bf16.msra.mxu0 %v978
        %1356 = vmatprep.subr.bf16.mxu0 0
        %1357 = vmatpush1.bf16.msra.mxu0 %v979
        %1358 = vmatprep.subr.bf16.mxu0 0
        %1359 = vmatpush1.bf16.msra.mxu0 %v980
        %1360 = vmatprep.subr.bf16.mxu0 0
        %1361 = vmatpush1.bf16.msra.mxu0 %v981
        %1362 = vmatprep.subr.bf16.mxu0 0
        %1363 = vmatpush1.bf16.msra.mxu0 %v982
        %1364 = vmatprep.subr.bf16.mxu0 0
        %1365 = vmatpush1.bf16.msra.mxu0 %v983
        %1366 = vmatprep.subr.bf16.mxu0 0
        %1367 = vmatpush1.bf16.msra.mxu0 %v984
        %1368 = vmatprep.subr.bf16.mxu0 0
        %1369 = vmatpush1.bf16.msra.mxu0 %v985
        %1370 = vmatprep.subr.bf16.mxu0 0
        %1371 = vmatpush1.bf16.msra.mxu0 0
        %1372 = vmatprep.subr.bf16.mxu0 0
        %1373 = vmatpush1.bf16.msra.mxu0 0
        %1374 = vmatprep.subr.bf16.mxu0 0
        %1375 = vmatpush1.bf16.msra.mxu0 0
        %1376 = vmatprep.subr.bf16.mxu0 0
        %1377 = vmatpush1.bf16.msra.mxu0 0
        %1378 = vmatprep.subr.bf16.mxu0 0
        %1379 = vmatpush1.bf16.msra.mxu0 0
        %1380 = vmatprep.subr.bf16.mxu0 0
        %1381 = vmatpush1.bf16.msra.mxu0 0
        %1382 = vmatprep.subr.bf16.mxu0 0
        %1383 = vmatpush1.bf16.msra.mxu0 0
        %1384 = vmatprep.subr.bf16.mxu0 0
        %1385 = vmatpush1.bf16.msra.mxu0 0
        %1386 = vmatprep.mubr.bf16.mxu0 0
        %1387 = vmatmul.mubr.bf16.gmra.mrb[0].mxu0 %v1353
        %v1388 = vpop.f32.mrb[0].mxu0
        %v1389 = vadd.f32 0.0, %v1388
        %v1390 = vpop.f32.mrb[0].mxu0
        %v1391 = vpop.f32.mrb[0].mxu0
        %v1392 = vpop.f32.mrb[0].mxu0
        %1393 = vdwg.mxu0
        %1394 = vmatprep.subr.bf16.mxu0 0
        %1395 = vmatpush1.bf16.msra.mxu0 %v1130
        %1396 = vmatprep.subr.bf16.mxu0 0
        %1397 = vmatpush1.bf16.msra.mxu0 %v1131
        %1398 = vmatprep.subr.bf16.mxu0 0
        %1399 = vmatpush1.bf16.msra.mxu0 %v1132
        %1400 = vmatprep.subr.bf16.mxu0 0
        %1401 = vmatpush1.bf16.msra.mxu0 %v1133
        %1402 = vmatprep.subr.bf16.mxu0 0
        %1403 = vmatpush1.bf16.msra.mxu0 %v1134
        %1404 = vmatprep.subr.bf16.mxu0 0
        %1405 = vmatpush1.bf16.msra.mxu0 %v1135
        %1406 = vmatprep.subr.bf16.mxu0 0
        %1407 = vmatpush1.bf16.msra.mxu0 %v1136
        %1408 = vmatprep.subr.bf16.mxu0 0
        %1409 = vmatpush1.bf16.msra.mxu0 %v1137
        %1410 = vmatprep.subr.bf16.mxu0 0
        %1411 = vmatpush1.bf16.msra.mxu0 %v1138
        %1412 = vmatprep.subr.bf16.mxu0 0
        %1413 = vmatpush1.bf16.msra.mxu0 %v1139
        %1414 = vmatprep.subr.bf16.mxu0 0
        %1415 = vmatpush1.bf16.msra.mxu0 %v1140
        %1416 = vmatprep.subr.bf16.mxu0 0
        %1417 = vmatpush1.bf16.msra.mxu0 %v1141
        %1418 = vmatprep.subr.bf16.mxu0 0
        %1419 = vmatpush1.bf16.msra.mxu0 %v1142
        %1420 = vmatprep.subr.bf16.mxu0 0
        %1421 = vmatpush1.bf16.msra.mxu0 %v1143
        %1422 = vmatprep.subr.bf16.mxu0 0
        %1423 = vmatpush1.bf16.msra.mxu0 %v1144
        %1424 = vmatprep.subr.bf16.mxu0 0
        %1425 = vmatpush1.bf16.msra.mxu0 %v1145
        %1426 = vmatprep.mubr.bf16.mxu0 %v944
        %1427 = vmatmul.mubr.bf16.gmra.mrb[0].mxu0 %v943
        %v1428 = vpop.f32.mrb[0].mxu0
        %v1429 = vadd.f32 %v1389, %v1428
        %v1430 = vpop.f32.mrb[0].mxu0
        %v1431 = vpop.f32.mrb[0].mxu0
        %v1432 = vpop.f32.mrb[0].mxu0
        %1433 = vdwg.mxu0
        %1434 = vmatprep.subr.bf16.mxu0 0
        %1435 = vmatpush1.bf16.msra.mxu0 %v1146
        %1436 = vmatprep.subr.bf16.mxu0 0
        %1437 = vmatpush1.bf16.msra.mxu0 %v1147
        %1438 = vmatprep.subr.bf16.mxu0 0
        %1439 = vmatpush1.bf16.msra.mxu0 %v1148
        %1440 = vmatprep.subr.bf16.mxu0 0
        %1441 = vmatpush1.bf16.msra.mxu0 %v1149
        %1442 = vmatprep.subr.bf16.mxu0 0
        %1443 = vmatpush1.bf16.msra.mxu0 %v1150
        %1444 = vmatprep.subr.bf16.mxu0 0
        %1445 = vmatpush1.bf16.msra.mxu0 %v1151
        %1446 = vmatprep.subr.bf16.mxu0 0
        %1447 = vmatpush1.bf16.msra.mxu0 %v1152
        %1448 = vmatprep.subr.bf16.mxu0 0
        %1449 = vmatpush1.bf16.msra.mxu0 %v1153
        %1450 = vmatprep.subr.bf16.mxu0 0
        %1451 = vmatpush1.bf16.msra.mxu0 0
        %1452 = vmatprep.subr.bf16.mxu0 0
        %1453 = vmatpush1.bf16.msra.mxu0 0
        %1454 = vmatprep.subr.bf16.mxu0 0
        %1455 = vmatpush1.bf16.msra.mxu0 0
        %1456 = vmatprep.subr.bf16.mxu0 0
        %1457 = vmatpush1.bf16.msra.mxu0 0
        %1458 = vmatprep.subr.bf16.mxu0 0
        %1459 = vmatpush1.bf16.msra.mxu0 0
        %1460 = vmatprep.subr.bf16.mxu0 0
        %1461 = vmatpush1.bf16.msra.mxu0 0
        %1462 = vmatprep.subr.bf16.mxu0 0
        %1463 = vmatpush1.bf16.msra.mxu0 0
        %1464 = vmatprep.subr.bf16.mxu0 0
        %1465 = vmatpush1.bf16.msra.mxu0 0
        %1466 = vmatprep.mubr.bf16.mxu0 0
        %1467 = vmatmul.mubr.bf16.gmra.mrb[0].mxu0 %v945
        %v1468 = vpop.f32.mrb[0].mxu0
        %v1469 = vadd.f32 %v1429, %v1468
        %v1470 = vpop.f32.mrb[0].mxu0
        %v1471 = vpop.f32.mrb[0].mxu0
        %v1472 = vpop.f32.mrb[0].mxu0
        %1473 = vdwg.mxu0
        %v1474 = vadd.f32 %v1469, %v929
        %v1475 = vtanh.pop %v1474
        %v1476 = vpack.c.bf16 %v1475, %v1475
        %1477 = vmatprep.subr.bf16.mxu0 0
        %1478 = vmatpush1.bf16.msra.mxu0 %v1293
        %1479 = vmatprep.subr.bf16.mxu0 0
        %1480 = vmatpush1.bf16.msra.mxu0 %v1294
        %1481 = vmatprep.subr.bf16.mxu0 0
        %1482 = vmatpush1.bf16.msra.mxu0 %v1295
        %1483 = vmatprep.subr.bf16.mxu0 0
        %1484 = vmatpush1.bf16.msra.mxu0 %v1296
        %1485 = vmatprep.subr.bf16.mxu0 0
        %1486 = vmatpush1.bf16.msra.mxu0 %v1297
        %1487 = vmatprep.subr.bf16.mxu0 0
        %1488 = vmatpush1.bf16.msra.mxu0 %v1298
        %1489 = vmatprep.subr.bf16.mxu0 0
        %1490 = vmatpush1.bf16.msra.mxu0 %v1299
        %1491 = vmatprep.subr.bf16.mxu0 0
        %1492 = vmatpush1.bf16.msra.mxu0 %v1300
        %1493 = vmatprep.subr.bf16.mxu0 0
        %1494 = vmatpush1.bf16.msra.mxu0 0
        %1495 = vmatprep.subr.bf16.mxu0 0
        %1496 = vmatpush1.bf16.msra.mxu0 0
        %1497 = vmatprep.subr.bf16.mxu0 0
        %1498 = vmatpush1.bf16.msra.mxu0 0
        %1499 = vmatprep.subr.bf16.mxu0 0
        %1500 = vmatpush1.bf16.msra.mxu0 0
        %1501 = vmatprep.subr.bf16.mxu0 0
        %1502 = vmatpush1.bf16.msra.mxu0 0
        %1503 = vmatprep.subr.bf16.mxu0 0
        %1504 = vmatpush1.bf16.msra.mxu0 0
        %1505 = vmatprep.subr.bf16.mxu0 0
        %1506 = vmatpush1.bf16.msra.mxu0 0
        %1507 = vmatprep.subr.bf16.mxu0 0
        %1508 = vmatpush1.bf16.msra.mxu0 0
        %1509 = vmatprep.mubr.bf16.mxu0 0
        %1510 = vmatmul.mubr.bf16.gmra.mrb[0].mxu0 %v1476
        %v1511 = vpop.f32.mrb[0].mxu0
        %v1512 = vadd.f32 %v936, %v1511
        %v1513 = vpop.f32.mrb[0].mxu0
        %v1514 = vpop.f32.mrb[0].mxu0
        %v1515 = vpop.f32.mrb[0].mxu0
        %1516 = vdwg.mxu0
        %s1517 = scalar_lea.vmem [#allocation3], 8
        %v1518 = vld [vmem:[%s1517] sm:$0xff]
        %vm1519 = vcmp.ne.f32.partialorder %v1518, %v1518
        %v1520 = vsel %vm1519, %v1512, %v1518
        %s1521 = scalar_lea.vmem [#allocation4], 8
        %1522 = vst [vmem:[%s1521] sm:$0xff] %v1520
        %v1523 = vpack.c.bf16 %v1520, %v1520
        %1524 = vmatprep.subr.bf16.mxu0 0
        %1525 = vmatpush1.bf16.msra.mxu0 %v978
        %1526 = vmatprep.subr.bf16.mxu0 0
        %1527 = vmatpush1.bf16.msra.mxu0 %v979
        %1528 = vmatprep.subr.bf16.mxu0 0
        %1529 = vmatpush1.bf16.msra.mxu0 %v980
        %1530 = vmatprep.subr.bf16.mxu0 0
        %1531 = vmatpush1.bf16.msra.mxu0 %v981
        %1532 = vmatprep.subr.bf16.mxu0 0
        %1533 = vmatpush1.bf16.msra.mxu0 %v982
        %1534 = vmatprep.subr.bf16.mxu0 0
        %1535 = vmatpush1.bf16.msra.mxu0 %v983
        %1536 = vmatprep.subr.bf16.mxu0 0
        %1537 = vmatpush1.bf16.msra.mxu0 %v984
        %1538 = vmatprep.subr.bf16.mxu0 0
        %1539 = vmatpush1.bf16.msra.mxu0 %v985
        %1540 = vmatprep.subr.bf16.mxu0 0
        %1541 = vmatpush1.bf16.msra.mxu0 0
        %1542 = vmatprep.subr.bf16.mxu0 0
        %1543 = vmatpush1.bf16.msra.mxu0 0
        %1544 = vmatprep.subr.bf16.mxu0 0
        %1545 = vmatpush1.bf16.msra.mxu0 0
        %1546 = vmatprep.subr.bf16.mxu0 0
        %1547 = vmatpush1.bf16.msra.mxu0 0
        %1548 = vmatprep.subr.bf16.mxu0 0
        %1549 = vmatpush1.bf16.msra.mxu0 0
        %1550 = vmatprep.subr.bf16.mxu0 0
        %1551 = vmatpush1.bf16.msra.mxu0 0
        %1552 = vmatprep.subr.bf16.mxu0 0
        %1553 = vmatpush1.bf16.msra.mxu0 0
        %1554 = vmatprep.subr.bf16.mxu0 0
        %1555 = vmatpush1.bf16.msra.mxu0 0
        %1556 = vmatprep.mubr.bf16.mxu0 0
        %1557 = vmatmul.mubr.bf16.gmra.mrb[0].mxu0 %v1523
        %v1558 = vpop.f32.mrb[0].mxu0
        %v1559 = vadd.f32 0.0, %v1558
        %v1560 = vpop.f32.mrb[0].mxu0
        %v1561 = vpop.f32.mrb[0].mxu0
        %v1562 = vpop.f32.mrb[0].mxu0
        %1563 = vdwg.mxu0
        %1564 = vmatprep.subr.bf16.mxu0 0
        %1565 = vmatpush1.bf16.msra.mxu0 %v1130
        %1566 = vmatprep.subr.bf16.mxu0 0
        %1567 = vmatpush1.bf16.msra.mxu0 %v1131
        %1568 = vmatprep.subr.bf16.mxu0 0
        %1569 = vmatpush1.bf16.msra.mxu0 %v1132
        %1570 = vmatprep.subr.bf16.mxu0 0
        %1571 = vmatpush1.bf16.msra.mxu0 %v1133
        %1572 = vmatprep.subr.bf16.mxu0 0
        %1573 = vmatpush1.bf16.msra.mxu0 %v1134
        %1574 = vmatprep.subr.bf16.mxu0 0
        %1575 = vmatpush1.bf16.msra.mxu0 %v1135
        %1576 = vmatprep.subr.bf16.mxu0 0
        %1577 = vmatpush1.bf16.msra.mxu0 %v1136
        %1578 = vmatprep.subr.bf16.mxu0 0
        %1579 = vmatpush1.bf16.msra.mxu0 %v1137
        %1580 = vmatprep.subr.bf16.mxu0 0
        %1581 = vmatpush1.bf16.msra.mxu0 %v1138
        %1582 = vmatprep.subr.bf16.mxu0 0
        %1583 = vmatpush1.bf16.msra.mxu0 %v1139
        %1584 = vmatprep.subr.bf16.mxu0 0
        %1585 = vmatpush1.bf16.msra.mxu0 %v1140
        %1586 = vmatprep.subr.bf16.mxu0 0
        %1587 = vmatpush1.bf16.msra.mxu0 %v1141
        %1588 = vmatprep.subr.bf16.mxu0 0
        %1589 = vmatpush1.bf16.msra.mxu0 %v1142
        %1590 = vmatprep.subr.bf16.mxu0 0
        %1591 = vmatpush1.bf16.msra.mxu0 %v1143
        %1592 = vmatprep.subr.bf16.mxu0 0
        %1593 = vmatpush1.bf16.msra.mxu0 %v1144
        %1594 = vmatprep.subr.bf16.mxu0 0
        %1595 = vmatpush1.bf16.msra.mxu0 %v1145
        %1596 = vmatprep.mubr.bf16.mxu0 %v945
        %1597 = vmatmul.mubr.bf16.gmra.mrb[0].mxu0 %v944
        %v1598 = vpop.f32.mrb[0].mxu0
        %v1599 = vadd.f32 %v1559, %v1598
        %v1600 = vpop.f32.mrb[0].mxu0
        %v1601 = vpop.f32.mrb[0].mxu0
        %v1602 = vpop.f32.mrb[0].mxu0
        %1603 = vdwg.mxu0
        %1604 = vmatprep.subr.bf16.mxu0 0
        %1605 = vmatpush1.bf16.msra.mxu0 %v1146
        %1606 = vmatprep.subr.bf16.mxu0 0
        %1607 = vmatpush1.bf16.msra.mxu0 %v1147
        %1608 = vmatprep.subr.bf16.mxu0 0
        %1609 = vmatpush1.bf16.msra.mxu0 %v1148
        %1610 = vmatprep.subr.bf16.mxu0 0
        %1611 = vmatpush1.bf16.msra.mxu0 %v1149
        %1612 = vmatprep.subr.bf16.mxu0 0
        %1613 = vmatpush1.bf16.msra.mxu0 %v1150
        %1614 = vmatprep.subr.bf16.mxu0 0
        %1615 = vmatpush1.bf16.msra.mxu0 %v1151
        %1616 = vmatprep.subr.bf16.mxu0 0
        %1617 = vmatpush1.bf16.msra.mxu0 %v1152
        %1618 = vmatprep.subr.bf16.mxu0 0
        %1619 = vmatpush1.bf16.msra.mxu0 %v1153
        %1620 = vmatprep.subr.bf16.mxu0 0
        %1621 = vmatpush1.bf16.msra.mxu0 0
        %1622 = vmatprep.subr.bf16.mxu0 0
        %1623 = vmatpush1.bf16.msra.mxu0 0
        %1624 = vmatprep.subr.bf16.mxu0 0
        %1625 = vmatpush1.bf16.msra.mxu0 0
        %1626 = vmatprep.subr.bf16.mxu0 0
        %1627 = vmatpush1.bf16.msra.mxu0 0
        %1628 = vmatprep.subr.bf16.mxu0 0
        %1629 = vmatpush1.bf16.msra.mxu0 0
        %1630 = vmatprep.subr.bf16.mxu0 0
        %1631 = vmatpush1.bf16.msra.mxu0 0
        %1632 = vmatprep.subr.bf16.mxu0 0
        %1633 = vmatpush1.bf16.msra.mxu0 0
        %1634 = vmatprep.subr.bf16.mxu0 0
        %1635 = vmatpush1.bf16.msra.mxu0 0
        %1636 = vmatprep.mubr.bf16.mxu0 0
        %1637 = vmatmul.mubr.bf16.gmra.mrb[0].mxu0 %v1353
        %v1638 = vpop.f32.mrb[0].mxu0
        %v1639 = vadd.f32 %v1599, %v1638
        %v1640 = vpop.f32.mrb[0].mxu0
        %v1641 = vpop.f32.mrb[0].mxu0
        %v1642 = vpop.f32.mrb[0].mxu0
        %1643 = vdwg.mxu0
        %v1644 = vadd.f32 %v1639, %v929
        %v1645 = vtanh.pop %v1644
        %v1646 = vpack.c.bf16 %v1645, %v1645
        %1647 = vmatprep.subr.bf16.mxu0 0
        %1648 = vmatpush1.bf16.msra.mxu0 %v1293
        %1649 = vmatprep.subr.bf16.mxu0 0
        %1650 = vmatpush1.bf16.msra.mxu0 %v1294
        %1651 = vmatprep.subr.bf16.mxu0 0
        %1652 = vmatpush1.bf16.msra.mxu0 %v1295
        %1653 = vmatprep.subr.bf16.mxu0 0
        %1654 = vmatpush1.bf16.msra.mxu0 %v1296
        %1655 = vmatprep.subr.bf16.mxu0 0
        %1656 = vmatpush1.bf16.msra.mxu0 %v1297
        %1657 = vmatprep.subr.bf16.mxu0 0
        %1658 = vmatpush1.bf16.msra.mxu0 %v1298
        %1659 = vmatprep.subr.bf16.mxu0 0
        %1660 = vmatpush1.bf16.msra.mxu0 %v1299
        %1661 = vmatprep.subr.bf16.mxu0 0
        %1662 = vmatpush1.bf16.msra.mxu0 %v1300
        %1663 = vmatprep.subr.bf16.mxu0 0
        %1664 = vmatpush1.bf16.msra.mxu0 0
        %1665 = vmatprep.subr.bf16.mxu0 0
        %1666 = vmatpush1.bf16.msra.mxu0 0
        %1667 = vmatprep.subr.bf16.mxu0 0
        %1668 = vmatpush1.bf16.msra.mxu0 0
        %1669 = vmatprep.subr.bf16.mxu0 0
        %1670 = vmatpush1.bf16.msra.mxu0 0
        %1671 = vmatprep.subr.bf16.mxu0 0
        %1672 = vmatpush1.bf16.msra.mxu0 0
        %1673 = vmatprep.subr.bf16.mxu0 0
        %1674 = vmatpush1.bf16.msra.mxu0 0
        %1675 = vmatprep.subr.bf16.mxu0 0
        %1676 = vmatpush1.bf16.msra.mxu0 0
        %1677 = vmatprep.subr.bf16.mxu0 0
        %1678 = vmatpush1.bf16.msra.mxu0 0
        %1679 = vmatprep.mubr.bf16.mxu0 0
        %1680 = vmatmul.mubr.bf16.gmra.mrb[0].mxu0 %v1646
        %v1681 = vpop.f32.mrb[0].mxu0
        %v1682 = vadd.f32 %v936, %v1681
        %v1683 = vpop.f32.mrb[0].mxu0
        %v1684 = vpop.f32.mrb[0].mxu0
        %v1685 = vpop.f32.mrb[0].mxu0
        %1686 = vdwg.mxu0
        %s1687 = scalar_lea.vmem [#allocation3], 16
        %v1688 = vld [vmem:[%s1687] sm:$0xff]
        %vm1689 = vcmp.ne.f32.partialorder %v1688, %v1688
        %v1690 = vsel %vm1689, %v1682, %v1688
        %s1691 = scalar_lea.vmem [#allocation4], 16
        %1692 = vst [vmem:[%s1691] sm:$0xff] %v1690
        %v1693 = vpack.c.bf16 %v1690, %v1690
        %1694 = vmatprep.subr.bf16.mxu0 0
        %1695 = vmatpush1.bf16.msra.mxu0 %v978
        %1696 = vmatprep.subr.bf16.mxu0 0
        %1697 = vmatpush1.bf16.msra.mxu0 %v979
        %1698 = vmatprep.subr.bf16.mxu0 0
        %1699 = vmatpush1.bf16.msra.mxu0 %v980
        %1700 = vmatprep.subr.bf16.mxu0 0
        %1701 = vmatpush1.bf16.msra.mxu0 %v981
        %1702 = vmatprep.subr.bf16.mxu0 0
        %1703 = vmatpush1.bf16.msra.mxu0 %v982
        %1704 = vmatprep.subr.bf16.mxu0 0
        %1705 = vmatpush1.bf16.msra.mxu0 %v983
        %1706 = vmatprep.subr.bf16.mxu0 0
        %1707 = vmatpush1.bf16.msra.mxu0 %v984
        %1708 = vmatprep.subr.bf16.mxu0 0
        %1709 = vmatpush1.bf16.msra.mxu0 %v985
        %1710 = vmatprep.subr.bf16.mxu0 0
        %1711 = vmatpush1.bf16.msra.mxu0 0
        %1712 = vmatprep.subr.bf16.mxu0 0
        %1713 = vmatpush1.bf16.msra.mxu0 0
        %1714 = vmatprep.subr.bf16.mxu0 0
        %1715 = vmatpush1.bf16.msra.mxu0 0
        %1716 = vmatprep.subr.bf16.mxu0 0
        %1717 = vmatpush1.bf16.msra.mxu0 0
        %1718 = vmatprep.subr.bf16.mxu0 0
        %1719 = vmatpush1.bf16.msra.mxu0 0
        %1720 = vmatprep.subr.bf16.mxu0 0
        %1721 = vmatpush1.bf16.msra.mxu0 0
        %1722 = vmatprep.subr.bf16.mxu0 0
        %1723 = vmatpush1.bf16.msra.mxu0 0
        %1724 = vmatprep.subr.bf16.mxu0 0
        %1725 = vmatpush1.bf16.msra.mxu0 0
        %1726 = vmatprep.mubr.bf16.mxu0 0
        %1727 = vmatmul.mubr.bf16.gmra.mrb[0].mxu0 %v1693
        %v1728 = vpop.f32.mrb[0].mxu0
        %v1729 = vadd.f32 0.0, %v1728
        %v1730 = vpop.f32.mrb[0].mxu0
        %v1731 = vpop.f32.mrb[0].mxu0
        %v1732 = vpop.f32.mrb[0].mxu0
        %1733 = vdwg.mxu0
        %1734 = vmatprep.subr.bf16.mxu0 0
        %1735 = vmatpush1.bf16.msra.mxu0 %v1130
        %1736 = vmatprep.subr.bf16.mxu0 0
        %1737 = vmatpush1.bf16.msra.mxu0 %v1131
        %1738 = vmatprep.subr.bf16.mxu0 0
        %1739 = vmatpush1.bf16.msra.mxu0 %v1132
        %1740 = vmatprep.subr.bf16.mxu0 0
        %1741 = vmatpush1.bf16.msra.mxu0 %v1133
        %1742 = vmatprep.subr.bf16.mxu0 0
        %1743 = vmatpush1.bf16.msra.mxu0 %v1134
        %1744 = vmatprep.subr.bf16.mxu0 0
        %1745 = vmatpush1.bf16.msra.mxu0 %v1135
        %1746 = vmatprep.subr.bf16.mxu0 0
        %1747 = vmatpush1.bf16.msra.mxu0 %v1136
        %1748 = vmatprep.subr.bf16.mxu0 0
        %1749 = vmatpush1.bf16.msra.mxu0 %v1137
        %1750 = vmatprep.subr.bf16.mxu0 0
        %1751 = vmatpush1.bf16.msra.mxu0 %v1138
        %1752 = vmatprep.subr.bf16.mxu0 0
        %1753 = vmatpush1.bf16.msra.mxu0 %v1139
        %1754 = vmatprep.subr.bf16.mxu0 0
        %1755 = vmatpush1.bf16.msra.mxu0 %v1140
        %1756 = vmatprep.subr.bf16.mxu0 0
        %1757 = vmatpush1.bf16.msra.mxu0 %v1141
        %1758 = vmatprep.subr.bf16.mxu0 0
        %1759 = vmatpush1.bf16.msra.mxu0 %v1142
        %1760 = vmatprep.subr.bf16.mxu0 0
        %1761 = vmatpush1.bf16.msra.mxu0 %v1143
        %1762 = vmatprep.subr.bf16.mxu0 0
        %1763 = vmatpush1.bf16.msra.mxu0 %v1144
        %1764 = vmatprep.subr.bf16.mxu0 0
        %1765 = vmatpush1.bf16.msra.mxu0 %v1145
        %1766 = vmatprep.mubr.bf16.mxu0 %v1353
        %1767 = vmatmul.mubr.bf16.gmra.mrb[0].mxu0 %v945
        %v1768 = vpop.f32.mrb[0].mxu0
        %v1769 = vadd.f32 %v1729, %v1768
        %v1770 = vpop.f32.mrb[0].mxu0
        %v1771 = vpop.f32.mrb[0].mxu0
        %v1772 = vpop.f32.mrb[0].mxu0
        %1773 = vdwg.mxu0
        %1774 = vmatprep.subr.bf16.mxu0 0
        %1775 = vmatpush1.bf16.msra.mxu0 %v1146
        %1776 = vmatprep.subr.bf16.mxu0 0
        %1777 = vmatpush1.bf16.msra.mxu0 %v1147
        %1778 = vmatprep.subr.bf16.mxu0 0
        %1779 = vmatpush1.bf16.msra.mxu0 %v1148
        %1780 = vmatprep.subr.bf16.mxu0 0
        %1781 = vmatpush1.bf16.msra.mxu0 %v1149
        %1782 = vmatprep.subr.bf16.mxu0 0
        %1783 = vmatpush1.bf16.msra.mxu0 %v1150
        %1784 = vmatprep.subr.bf16.mxu0 0
        %1785 = vmatpush1.bf16.msra.mxu0 %v1151
        %1786 = vmatprep.subr.bf16.mxu0 0
        %1787 = vmatpush1.bf16.msra.mxu0 %v1152
        %1788 = vmatprep.subr.bf16.mxu0 0
        %1789 = vmatpush1.bf16.msra.mxu0 %v1153
        %1790 = vmatprep.subr.bf16.mxu0 0
        %1791 = vmatpush1.bf16.msra.mxu0 0
        %1792 = vmatprep.subr.bf16.mxu0 0
        %1793 = vmatpush1.bf16.msra.mxu0 0
        %1794 = vmatprep.subr.bf16.mxu0 0
        %1795 = vmatpush1.bf16.msra.mxu0 0
        %1796 = vmatprep.subr.bf16.mxu0 0
        %1797 = vmatpush1.bf16.msra.mxu0 0
        %1798 = vmatprep.subr.bf16.mxu0 0
        %1799 = vmatpush1.bf16.msra.mxu0 0
        %1800 = vmatprep.subr.bf16.mxu0 0
        %1801 = vmatpush1.bf16.msra.mxu0 0
        %1802 = vmatprep.subr.bf16.mxu0 0
        %1803 = vmatpush1.bf16.msra.mxu0 0
        %1804 = vmatprep.subr.bf16.mxu0 0
        %1805 = vmatpush1.bf16.msra.mxu0 0
        %1806 = vmatprep.mubr.bf16.mxu0 0
        %1807 = vmatmul.mubr.bf16.gmra.mrb[0].mxu0 %v1523
        %v1808 = vpop.f32.mrb[0].mxu0
        %v1809 = vadd.f32 %v1769, %v1808
        %v1810 = vpop.f32.mrb[0].mxu0
        %v1811 = vpop.f32.mrb[0].mxu0
        %v1812 = vpop.f32.mrb[0].mxu0
        %1813 = vdwg.mxu0
        %v1814 = vadd.f32 %v1809, %v929
        %v1815 = vtanh.pop %v1814
        %v1816 = vpack.c.bf16 %v1815, %v1815
        %1817 = vmatprep.subr.bf16.mxu0 0
        %1818 = vmatpush1.bf16.msra.mxu0 %v1293
        %1819 = vmatprep.subr.bf16.mxu0 0
        %1820 = vmatpush1.bf16.msra.mxu0 %v1294
        %1821 = vmatprep.subr.bf16.mxu0 0
        %1822 = vmatpush1.bf16.msra.mxu0 %v1295
        %1823 = vmatprep.subr.bf16.mxu0 0
        %1824 = vmatpush1.bf16.msra.mxu0 %v1296
        %1825 = vmatprep.subr.bf16.mxu0 0
        %1826 = vmatpush1.bf16.msra.mxu0 %v1297
        %1827 = vmatprep.subr.bf16.mxu0 0
        %1828 = vmatpush1.bf16.msra.mxu0 %v1298
        %1829 = vmatprep.subr.bf16.mxu0 0
        %1830 = vmatpush1.bf16.msra.mxu0 %v1299
        %1831 = vmatprep.subr.bf16.mxu0 0
        %1832 = vmatpush1.bf16.msra.mxu0 %v1300
        %1833 = vmatprep.subr.bf16.mxu0 0
        %1834 = vmatpush1.bf16.msra.mxu0 0
        %1835 = vmatprep.subr.bf16.mxu0 0
        %1836 = vmatpush1.bf16.msra.mxu0 0
        %1837 = vmatprep.subr.bf16.mxu0 0
        %1838 = vmatpush1.bf16.msra.mxu0 0
        %1839 = vmatprep.subr.bf16.mxu0 0
        %1840 = vmatpush1.bf16.msra.mxu0 0
        %1841 = vmatprep.subr.bf16.mxu0 0
        %1842 = vmatpush1.bf16.msra.mxu0 0
        %1843 = vmatprep.subr.bf16.mxu0 0
        %1844 = vmatpush1.bf16.msra.mxu0 0
        %1845 = vmatprep.subr.bf16.mxu0 0
        %1846 = vmatpush1.bf16.msra.mxu0 0
        %1847 = vmatprep.subr.bf16.mxu0 0
        %1848 = vmatpush1.bf16.msra.mxu0 0
        %1849 = vmatprep.mubr.bf16.mxu0 0
        %1850 = vmatmul.mubr.bf16.gmra.mrb[0].mxu0 %v1816
        %v1851 = vpop.f32.mrb[0].mxu0
        %v1852 = vadd.f32 %v936, %v1851
        %v1853 = vpop.f32.mrb[0].mxu0
        %v1854 = vpop.f32.mrb[0].mxu0
        %v1855 = vpop.f32.mrb[0].mxu0
        %1856 = vdwg.mxu0
        %s1857 = scalar_lea.vmem [#allocation3], 24
        %v1858 = vld [vmem:[%s1857] sm:$0xff]
        %vm1859 = vcmp.ne.f32.partialorder %v1858, %v1858
        %v1860 = vsel %vm1859, %v1852, %v1858
        %s1861 = scalar_lea.vmem [#allocation4], 24
        %1862 = vst [vmem:[%s1861] sm:$0xff] %v1860
        %v1863 = vpack.c.bf16 %v1860, %v1860
        %1864 = vmatprep.subr.bf16.mxu0 0
        %1865 = vmatpush1.bf16.msra.mxu0 %v978
        %1866 = vmatprep.subr.bf16.mxu0 0
        %1867 = vmatpush1.bf16.msra.mxu0 %v979
        %1868 = vmatprep.subr.bf16.mxu0 0
        %1869 = vmatpush1.bf16.msra.mxu0 %v980
        %1870 = vmatprep.subr.bf16.mxu0 0
        %1871 = vmatpush1.bf16.msra.mxu0 %v981
        %1872 = vmatprep.subr.bf16.mxu0 0
        %1873 = vmatpush1.bf16.msra.mxu0 %v982
        %1874 = vmatprep.subr.bf16.mxu0 0
        %1875 = vmatpush1.bf16.msra.mxu0 %v983
        %1876 = vmatprep.subr.bf16.mxu0 0
        %1877 = vmatpush1.bf16.msra.mxu0 %v984
        %1878 = vmatprep.subr.bf16.mxu0 0
        %1879 = vmatpush1.bf16.msra.mxu0 %v985
        %1880 = vmatprep.subr.bf16.mxu0 0
        %1881 = vmatpush1.bf16.msra.mxu0 0
        %1882 = vmatprep.subr.bf16.mxu0 0
        %1883 = vmatpush1.bf16.msra.mxu0 0
        %1884 = vmatprep.subr.bf16.mxu0 0
        %1885 = vmatpush1.bf16.msra.mxu0 0
        %1886 = vmatprep.subr.bf16.mxu0 0
        %1887 = vmatpush1.bf16.msra.mxu0 0
        %1888 = vmatprep.subr.bf16.mxu0 0
        %1889 = vmatpush1.bf16.msra.mxu0 0
        %1890 = vmatprep.subr.bf16.mxu0 0
        %1891 = vmatpush1.bf16.msra.mxu0 0
        %1892 = vmatprep.subr.bf16.mxu0 0
        %1893 = vmatpush1.bf16.msra.mxu0 0
        %1894 = vmatprep.subr.bf16.mxu0 0
        %1895 = vmatpush1.bf16.msra.mxu0 0
        %1896 = vmatprep.mubr.bf16.mxu0 0
        %1897 = vmatmul.mubr.bf16.gmra.mrb[0].mxu0 %v1863
        %v1898 = vpop.f32.mrb[0].mxu0
        %v1899 = vadd.f32 0.0, %v1898
        %v1900 = vpop.f32.mrb[0].mxu0
        %v1901 = vpop.f32.mrb[0].mxu0
        %v1902 = vpop.f32.mrb[0].mxu0
        %1903 = vdwg.mxu0
        %1904 = vmatprep.subr.bf16.mxu0 0
        %1905 = vmatpush1.bf16.msra.mxu0 %v1130
        %1906 = vmatprep.subr.bf16.mxu0 0
        %1907 = vmatpush1.bf16.msra.mxu0 %v1131
        %1908 = vmatprep.subr.bf16.mxu0 0
        %1909 = vmatpush1.bf16.msra.mxu0 %v1132
        %1910 = vmatprep.subr.bf16.mxu0 0
        %1911 = vmatpush1.bf16.msra.mxu0 %v1133
        %1912 = vmatprep.subr.bf16.mxu0 0
        %1913 = vmatpush1.bf16.msra.mxu0 %v1134
        %1914 = vmatprep.subr.bf16.mxu0 0
        %1915 = vmatpush1.bf16.msra.mxu0 %v1135
        %1916 = vmatprep.subr.bf16.mxu0 0
        %1917 = vmatpush1.bf16.msra.mxu0 %v1136
        %1918 = vmatprep.subr.bf16.mxu0 0
        %1919 = vmatpush1.bf16.msra.mxu0 %v1137
        %1920 = vmatprep.subr.bf16.mxu0 0
        %1921 = vmatpush1.bf16.msra.mxu0 %v1138
        %1922 = vmatprep.subr.bf16.mxu0 0
        %1923 = vmatpush1.bf16.msra.mxu0 %v1139
        %1924 = vmatprep.subr.bf16.mxu0 0
        %1925 = vmatpush1.bf16.msra.mxu0 %v1140
        %1926 = vmatprep.subr.bf16.mxu0 0
        %1927 = vmatpush1.bf16.msra.mxu0 %v1141
        %1928 = vmatprep.subr.bf16.mxu0 0
        %1929 = vmatpush1.bf16.msra.mxu0 %v1142
        %1930 = vmatprep.subr.bf16.mxu0 0
        %1931 = vmatpush1.bf16.msra.mxu0 %v1143
        %1932 = vmatprep.subr.bf16.mxu0 0
        %1933 = vmatpush1.bf16.msra.mxu0 %v1144
        %1934 = vmatprep.subr.bf16.mxu0 0
        %1935 = vmatpush1.bf16.msra.mxu0 %v1145
        %1936 = vmatprep.mubr.bf16.mxu0 %v1523
        %1937 = vmatmul.mubr.bf16.gmra.mrb[0].mxu0 %v1353
        %v1938 = vpop.f32.mrb[0].mxu0
        %v1939 = vadd.f32 %v1899, %v1938
        %v1940 = vpop.f32.mrb[0].mxu0
        %v1941 = vpop.f32.mrb[0].mxu0
        %v1942 = vpop.f32.mrb[0].mxu0
        %1943 = vdwg.mxu0
        %1944 = vmatprep.subr.bf16.mxu0 0
        %1945 = vmatpush1.bf16.msra.mxu0 %v1146
        %1946 = vmatprep.subr.bf16.mxu0 0
        %1947 = vmatpush1.bf16.msra.mxu0 %v1147
        %1948 = vmatprep.subr.bf16.mxu0 0
        %1949 = vmatpush1.bf16.msra.mxu0 %v1148
        %1950 = vmatprep.subr.bf16.mxu0 0
        %1951 = vmatpush1.bf16.msra.mxu0 %v1149
        %1952 = vmatprep.subr.bf16.mxu0 0
        %1953 = vmatpush1.bf16.msra.mxu0 %v1150
        %1954 = vmatprep.subr.bf16.mxu0 0
        %1955 = vmatpush1.bf16.msra.mxu0 %v1151
        %1956 = vmatprep.subr.bf16.mxu0 0
        %1957 = vmatpush1.bf16.msra.mxu0 %v1152
        %1958 = vmatprep.subr.bf16.mxu0 0
        %1959 = vmatpush1.bf16.msra.mxu0 %v1153
        %1960 = vmatprep.subr.bf16.mxu0 0
        %1961 = vmatpush1.bf16.msra.mxu0 0
        %1962 = vmatprep.subr.bf16.mxu0 0
        %1963 = vmatpush1.bf16.msra.mxu0 0
        %1964 = vmatprep.subr.bf16.mxu0 0
        %1965 = vmatpush1.bf16.msra.mxu0 0
        %1966 = vmatprep.subr.bf16.mxu0 0
        %1967 = vmatpush1.bf16.msra.mxu0 0
        %1968 = vmatprep.subr.bf16.mxu0 0
        %1969 = vmatpush1.bf16.msra.mxu0 0
        %1970 = vmatprep.subr.bf16.mxu0 0
        %1971 = vmatpush1.bf16.msra.mxu0 0
        %1972 = vmatprep.subr.bf16.mxu0 0
        %1973 = vmatpush1.bf16.msra.mxu0 0
        %1974 = vmatprep.subr.bf16.mxu0 0
        %1975 = vmatpush1.bf16.msra.mxu0 0
        %1976 = vmatprep.mubr.bf16.mxu0 0
        %1977 = vmatmul.mubr.bf16.gmra.mrb[0].mxu0 %v1693
        %v1978 = vpop.f32.mrb[0].mxu0
        %v1979 = vadd.f32 %v1939, %v1978
        %v1980 = vpop.f32.mrb[0].mxu0
        %v1981 = vpop.f32.mrb[0].mxu0
        %v1982 = vpop.f32.mrb[0].mxu0
        %1983 = vdwg.mxu0
        %v1984 = vadd.f32 %v1979, %v929
        %v1985 = vtanh.pop %v1984
        %v1986 = vpack.c.bf16 %v1985, %v1985
        %1987 = vmatprep.subr.bf16.mxu0 0
        %1988 = vmatpush1.bf16.msra.mxu0 %v1293
        %1989 = vmatprep.subr.bf16.mxu0 0
        %1990 = vmatpush1.bf16.msra.mxu0 %v1294
        %1991 = vmatprep.subr.bf16.mxu0 0
        %1992 = vmatpush1.bf16.msra.mxu0 %v1295
        %1993 = vmatprep.subr.bf16.mxu0 0
        %1994 = vmatpush1.bf16.msra.mxu0 %v1296
        %1995 = vmatprep.subr.bf16.mxu0 0
        %1996 = vmatpush1.bf16.msra.mxu0 %v1297
        %1997 = vmatprep.subr.bf16.mxu0 0
        %1998 = vmatpush1.bf16.msra.mxu0 %v1298
        %1999 = vmatprep.subr.bf16.mxu0 0
        %2000 = vmatpush1.bf16.msra.mxu0 %v1299
        %2001 = vmatprep.subr.bf16.mxu0 0
        %2002 = vmatpush1.bf16.msra.mxu0 %v1300
        %2003 = vmatprep.subr.bf16.mxu0 0
        %2004 = vmatpush1.bf16.msra.mxu0 0
        %2005 = vmatprep.subr.bf16.mxu0 0
        %2006 = vmatpush1.bf16.msra.mxu0 0
        %2007 = vmatprep.subr.bf16.mxu0 0
        %2008 = vmatpush1.bf16.msra.mxu0 0
        %2009 = vmatprep.subr.bf16.mxu0 0
        %2010 = vmatpush1.bf16.msra.mxu0 0
        %2011 = vmatprep.subr.bf16.mxu0 0
        %2012 = vmatpush1.bf16.msra.mxu0 0
        %2013 = vmatprep.subr.bf16.mxu0 0
        %2014 = vmatpush1.bf16.msra.mxu0 0
        %2015 = vmatprep.subr.bf16.mxu0 0
        %2016 = vmatpush1.bf16.msra.mxu0 0
        %2017 = vmatprep.subr.bf16.mxu0 0
        %2018 = vmatpush1.bf16.msra.mxu0 0
        %2019 = vmatprep.mubr.bf16.mxu0 0
        %2020 = vmatmul.mubr.bf16.gmra.mrb[0].mxu0 %v1986
        %v2021 = vpop.f32.mrb[0].mxu0
        %v2022 = vadd.f32 %v936, %v2021
        %v2023 = vpop.f32.mrb[0].mxu0
        %v2024 = vpop.f32.mrb[0].mxu0
        %v2025 = vpop.f32.mrb[0].mxu0
        %2026 = vdwg.mxu0
        %s2027 = scalar_lea.vmem [#allocation3], 32
        %v2028 = vld [vmem:[%s2027] sm:$0xff]
        %vm2029 = vcmp.ne.f32.partialorder %v2028, %v2028
        %v2030 = vsel %vm2029, %v2022, %v2028
        %s2031 = scalar_lea.vmem [#allocation4], 32
        %2032 = vst [vmem:[%s2031] sm:$0xff] %v2030
        %v2033 = vpack.c.bf16 %v2030, %v2030
        %2034 = vmatprep.subr.bf16.mxu0 0
        %2035 = vmatpush1.bf16.msra.mxu0 %v978
        %2036 = vmatprep.subr.bf16.mxu0 0
        %2037 = vmatpush1.bf16.msra.mxu0 %v979
        %2038 = vmatprep.subr.bf16.mxu0 0
        %2039 = vmatpush1.bf16.msra.mxu0 %v980
        %2040 = vmatprep.subr.bf16.mxu0 0
        %2041 = vmatpush1.bf16.msra.mxu0 %v981
        %2042 = vmatprep.subr.bf16.mxu0 0
        %2043 = vmatpush1.bf16.msra.mxu0 %v982
        %2044 = vmatprep.subr.bf16.mxu0 0
        %2045 = vmatpush1.bf16.msra.mxu0 %v983
        %2046 = vmatprep.subr.bf16.mxu0 0
        %2047 = vmatpush1.bf16.msra.mxu0 %v984
        %2048 = vmatprep.subr.bf16.mxu0 0
        %2049 = vmatpush1.bf16.msra.mxu0 %v985
        %2050 = vmatprep.subr.bf16.mxu0 0
        %2051 = vmatpush1.bf16.msra.mxu0 0
        %2052 = vmatprep.subr.bf16.mxu0 0
        %2053 = vmatpush1.bf16.msra.mxu0 0
        %2054 = vmatprep.subr.bf16.mxu0 0
        %2055 = vmatpush1.bf16.msra.mxu0 0
        %2056 = vmatprep.subr.bf16.mxu0 0
        %2057 = vmatpush1.bf16.msra.mxu0 0
        %2058 = vmatprep.subr.bf16.mxu0 0
        %2059 = vmatpush1.bf16.msra.mxu0 0
        %2060 = vmatprep.subr.bf16.mxu0 0
        %2061 = vmatpush1.bf16.msra.mxu0 0
        %2062 = vmatprep.subr.bf16.mxu0 0
        %2063 = vmatpush1.bf16.msra.mxu0 0
        %2064 = vmatprep.subr.bf16.mxu0 0
        %2065 = vmatpush1.bf16.msra.mxu0 0
        %2066 = vmatprep.mubr.bf16.mxu0 0
        %2067 = vmatmul.mubr.bf16.gmra.mrb[0].mxu0 %v2033
        %v2068 = vpop.f32.mrb[0].mxu0
        %v2069 = vadd.f32 0.0, %v2068
        %v2070 = vpop.f32.mrb[0].mxu0
        %v2071 = vpop.f32.mrb[0].mxu0
        %v2072 = vpop.f32.mrb[0].mxu0
        %2073 = vdwg.mxu0
        %2074 = vmatprep.subr.bf16.mxu0 0
        %2075 = vmatpush1.bf16.msra.mxu0 %v1130
        %2076 = vmatprep.subr.bf16.mxu0 0
        %2077 = vmatpush1.bf16.msra.mxu0 %v1131
        %2078 = vmatprep.subr.bf16.mxu0 0
        %2079 = vmatpush1.bf16.msra.mxu0 %v1132
        %2080 = vmatprep.subr.bf16.mxu0 0
        %2081 = vmatpush1.bf16.msra.mxu0 %v1133
        %2082 = vmatprep.subr.bf16.mxu0 0
        %2083 = vmatpush1.bf16.msra.mxu0 %v1134
        %2084 = vmatprep.subr.bf16.mxu0 0
        %2085 = vmatpush1.bf16.msra.mxu0 %v1135
        %2086 = vmatprep.subr.bf16.mxu0 0
        %2087 = vmatpush1.bf16.msra.mxu0 %v1136
        %2088 = vmatprep.subr.bf16.mxu0 0
        %2089 = vmatpush1.bf16.msra.mxu0 %v1137
        %2090 = vmatprep.subr.bf16.mxu0 0
        %2091 = vmatpush1.bf16.msra.mxu0 %v1138
        %2092 = vmatprep.subr.bf16.mxu0 0
        %2093 = vmatpush1.bf16.msra.mxu0 %v1139
        %2094 = vmatprep.subr.bf16.mxu0 0
        %2095 = vmatpush1.bf16.msra.mxu0 %v1140
        %2096 = vmatprep.subr.bf16.mxu0 0
        %2097 = vmatpush1.bf16.msra.mxu0 %v1141
        %2098 = vmatprep.subr.bf16.mxu0 0
        %2099 = vmatpush1.bf16.msra.mxu0 %v1142
        %2100 = vmatprep.subr.bf16.mxu0 0
        %2101 = vmatpush1.bf16.msra.mxu0 %v1143
        %2102 = vmatprep.subr.bf16.mxu0 0
        %2103 = vmatpush1.bf16.msra.mxu0 %v1144
        %2104 = vmatprep.subr.bf16.mxu0 0
        %2105 = vmatpush1.bf16.msra.mxu0 %v1145
        %2106 = vmatprep.mubr.bf16.mxu0 %v1693
        %2107 = vmatmul.mubr.bf16.gmra.mrb[0].mxu0 %v1523
        %v2108 = vpop.f32.mrb[0].mxu0
        %v2109 = vadd.f32 %v2069, %v2108
        %v2110 = vpop.f32.mrb[0].mxu0
        %v2111 = vpop.f32.mrb[0].mxu0
        %v2112 = vpop.f32.mrb[0].mxu0
        %2113 = vdwg.mxu0
        %2114 = vmatprep.subr.bf16.mxu0 0
        %2115 = vmatpush1.bf16.msra.mxu0 %v1146
        %2116 = vmatprep.subr.bf16.mxu0 0
        %2117 = vmatpush1.bf16.msra.mxu0 %v1147
        %2118 = vmatprep.subr.bf16.mxu0 0
        %2119 = vmatpush1.bf16.msra.mxu0 %v1148
        %2120 = vmatprep.subr.bf16.mxu0 0
        %2121 = vmatpush1.bf16.msra.mxu0 %v1149
        %2122 = vmatprep.subr.bf16.mxu0 0
        %2123 = vmatpush1.bf16.msra.mxu0 %v1150
        %2124 = vmatprep.subr.bf16.mxu0 0
        %2125 = vmatpush1.bf16.msra.mxu0 %v1151
        %2126 = vmatprep.subr.bf16.mxu0 0
        %2127 = vmatpush1.bf16.msra.mxu0 %v1152
        %2128 = vmatprep.subr.bf16.mxu0 0
        %2129 = vmatpush1.bf16.msra.mxu0 %v1153
        %2130 = vmatprep.subr.bf16.mxu0 0
        %2131 = vmatpush1.bf16.msra.mxu0 0
        %2132 = vmatprep.subr.bf16.mxu0 0
        %2133 = vmatpush1.bf16.msra.mxu0 0
        %2134 = vmatprep.subr.bf16.mxu0 0
        %2135 = vmatpush1.bf16.msra.mxu0 0
        %2136 = vmatprep.subr.bf16.mxu0 0
        %2137 = vmatpush1.bf16.msra.mxu0 0
        %2138 = vmatprep.subr.bf16.mxu0 0
        %2139 = vmatpush1.bf16.msra.mxu0 0
        %2140 = vmatprep.subr.bf16.mxu0 0
        %2141 = vmatpush1.bf16.msra.mxu0 0
        %2142 = vmatprep.subr.bf16.mxu0 0
        %2143 = vmatpush1.bf16.msra.mxu0 0
        %2144 = vmatprep.subr.bf16.mxu0 0
        %2145 = vmatpush1.bf16.msra.mxu0 0
        %2146 = vmatprep.mubr.bf16.mxu0 0
        %2147 = vmatmul.mubr.bf16.gmra.mrb[0].mxu0 %v1863
        %v2148 = vpop.f32.mrb[0].mxu0
        %v2149 = vadd.f32 %v2109, %v2148
        %v2150 = vpop.f32.mrb[0].mxu0
        %v2151 = vpop.f32.mrb[0].mxu0
        %v2152 = vpop.f32.mrb[0].mxu0
        %2153 = vdwg.mxu0
        %v2154 = vadd.f32 %v2149, %v929
        %v2155 = vtanh.pop %v2154
        %v2156 = vpack.c.bf16 %v2155, %v2155
        %2157 = vmatprep.subr.bf16.mxu0 0
        %2158 = vmatpush1.bf16.msra.mxu0 %v1293
        %2159 = vmatprep.subr.bf16.mxu0 0
        %2160 = vmatpush1.bf16.msra.mxu0 %v1294
        %2161 = vmatprep.subr.bf16.mxu0 0
        %2162 = vmatpush1.bf16.msra.mxu0 %v1295
        %2163 = vmatprep.subr.bf16.mxu0 0
        %2164 = vmatpush1.bf16.msra.mxu0 %v1296
        %2165 = vmatprep.subr.bf16.mxu0 0
        %2166 = vmatpush1.bf16.msra.mxu0 %v1297
        %2167 = vmatprep.subr.bf16.mxu0 0
        %2168 = vmatpush1.bf16.msra.mxu0 %v1298
        %2169 = vmatprep.subr.bf16.mxu0 0
        %2170 = vmatpush1.bf16.msra.mxu0 %v1299
        %2171 = vmatprep.subr.bf16.mxu0 0
        %2172 = vmatpush1.bf16.msra.mxu0 %v1300
        %2173 = vmatprep.subr.bf16.mxu0 0
        %2174 = vmatpush1.bf16.msra.mxu0 0
        %2175 = vmatprep.subr.bf16.mxu0 0
        %2176 = vmatpush1.bf16.msra.mxu0 0
        %2177 = vmatprep.subr.bf16.mxu0 0
        %2178 = vmatpush1.bf16.msra.mxu0 0
        %2179 = vmatprep.subr.bf16.mxu0 0
        %2180 = vmatpush1.bf16.msra.mxu0 0
        %2181 = vmatprep.subr.bf16.mxu0 0
        %2182 = vmatpush1.bf16.msra.mxu0 0
        %2183 = vmatprep.subr.bf16.mxu0 0
        %2184 = vmatpush1.bf16.msra.mxu0 0
        %2185 = vmatprep.subr.bf16.mxu0 0
        %2186 = vmatpush1.bf16.msra.mxu0 0
        %2187 = vmatprep.subr.bf16.mxu0 0
        %2188 = vmatpush1.bf16.msra.mxu0 0
        %2189 = vmatprep.mubr.bf16.mxu0 0
        %2190 = vmatmul.mubr.bf16.gmra.mrb[0].mxu0 %v2156
        %v2191 = vpop.f32.mrb[0].mxu0
        %v2192 = vadd.f32 %v936, %v2191
        %v2193 = vpop.f32.mrb[0].mxu0
        %v2194 = vpop.f32.mrb[0].mxu0
        %v2195 = vpop.f32.mrb[0].mxu0
        %2196 = vdwg.mxu0
        %s2197 = scalar_lea.vmem [#allocation3], 40
        %v2198 = vld [vmem:[%s2197] sm:$0xff]
        %vm2199 = vcmp.ne.f32.partialorder %v2198, %v2198
        %v2200 = vsel %vm2199, %v2192, %v2198
        %s2201 = scalar_lea.vmem [#allocation4], 40
        %2202 = vst [vmem:[%s2201] sm:$0xff] %v2200
        %v2203 = vpack.c.bf16 %v2200, %v2200
        %2204 = vmatprep.subr.bf16.mxu0 0
        %2205 = vmatpush1.bf16.msra.mxu0 %v978
        %2206 = vmatprep.subr.bf16.mxu0 0
        %2207 = vmatpush1.bf16.msra.mxu0 %v979
        %2208 = vmatprep.subr.bf16.mxu0 0
        %2209 = vmatpush1.bf16.msra.mxu0 %v980
        %2210 = vmatprep.subr.bf16.mxu0 0
        %2211 = vmatpush1.bf16.msra.mxu0 %v981
        %2212 = vmatprep.subr.bf16.mxu0 0
        %2213 = vmatpush1.bf16.msra.mxu0 %v982
        %2214 = vmatprep.subr.bf16.mxu0 0
        %2215 = vmatpush1.bf16.msra.mxu0 %v983
        %2216 = vmatprep.subr.bf16.mxu0 0
        %2217 = vmatpush1.bf16.msra.mxu0 %v984
        %2218 = vmatprep.subr.bf16.mxu0 0
        %2219 = vmatpush1.bf16.msra.mxu0 %v985
        %2220 = vmatprep.subr.bf16.mxu0 0
        %2221 = vmatpush1.bf16.msra.mxu0 0
        %2222 = vmatprep.subr.bf16.mxu0 0
        %2223 = vmatpush1.bf16.msra.mxu0 0
        %2224 = vmatprep.subr.bf16.mxu0 0
        %2225 = vmatpush1.bf16.msra.mxu0 0
        %2226 = vmatprep.subr.bf16.mxu0 0
        %2227 = vmatpush1.bf16.msra.mxu0 0
        %2228 = vmatprep.subr.bf16.mxu0 0
        %2229 = vmatpush1.bf16.msra.mxu0 0
        %2230 = vmatprep.subr.bf16.mxu0 0
        %2231 = vmatpush1.bf16.msra.mxu0 0
        %2232 = vmatprep.subr.bf16.mxu0 0
        %2233 = vmatpush1.bf16.msra.mxu0 0
        %2234 = vmatprep.subr.bf16.mxu0 0
        %2235 = vmatpush1.bf16.msra.mxu0 0
        %2236 = vmatprep.mubr.bf16.mxu0 0
        %2237 = vmatmul.mubr.bf16.gmra.mrb[0].mxu0 %v2203
        %v2238 = vpop.f32.mrb[0].mxu0
        %v2239 = vadd.f32 0.0, %v2238
        %v2240 = vpop.f32.mrb[0].mxu0
        %v2241 = vpop.f32.mrb[0].mxu0
        %v2242 = vpop.f32.mrb[0].mxu0
        %2243 = vdwg.mxu0
        %2244 = vmatprep.subr.bf16.mxu0 0
        %2245 = vmatpush1.bf16.msra.mxu0 %v1130
        %2246 = vmatprep.subr.bf16.mxu0 0
        %2247 = vmatpush1.bf16.msra.mxu0 %v1131
        %2248 = vmatprep.subr.bf16.mxu0 0
        %2249 = vmatpush1.bf16.msra.mxu0 %v1132
        %2250 = vmatprep.subr.bf16.mxu0 0
        %2251 = vmatpush1.bf16.msra.mxu0 %v1133
        %2252 = vmatprep.subr.bf16.mxu0 0
        %2253 = vmatpush1.bf16.msra.mxu0 %v1134
        %2254 = vmatprep.subr.bf16.mxu0 0
        %2255 = vmatpush1.bf16.msra.mxu0 %v1135
        %2256 = vmatprep.subr.bf16.mxu0 0
        %2257 = vmatpush1.bf16.msra.mxu0 %v1136
        %2258 = vmatprep.subr.bf16.mxu0 0
        %2259 = vmatpush1.bf16.msra.mxu0 %v1137
        %2260 = vmatprep.subr.bf16.mxu0 0
        %2261 = vmatpush1.bf16.msra.mxu0 %v1138
        %2262 = vmatprep.subr.bf16.mxu0 0
        %2263 = vmatpush1.bf16.msra.mxu0 %v1139
        %2264 = vmatprep.subr.bf16.mxu0 0
        %2265 = vmatpush1.bf16.msra.mxu0 %v1140
        %2266 = vmatprep.subr.bf16.mxu0 0
        %2267 = vmatpush1.bf16.msra.mxu0 %v1141
        %2268 = vmatprep.subr.bf16.mxu0 0
        %2269 = vmatpush1.bf16.msra.mxu0 %v1142
        %2270 = vmatprep.subr.bf16.mxu0 0
        %2271 = vmatpush1.bf16.msra.mxu0 %v1143
        %2272 = vmatprep.subr.bf16.mxu0 0
        %2273 = vmatpush1.bf16.msra.mxu0 %v1144
        %2274 = vmatprep.subr.bf16.mxu0 0
        %2275 = vmatpush1.bf16.msra.mxu0 %v1145
        %2276 = vmatprep.mubr.bf16.mxu0 %v1863
        %2277 = vmatmul.mubr.bf16.gmra.mrb[0].mxu0 %v1693
        %v2278 = vpop.f32.mrb[0].mxu0
        %v2279 = vadd.f32 %v2239, %v2278
        %v2280 = vpop.f32.mrb[0].mxu0
        %v2281 = vpop.f32.mrb[0].mxu0
        %v2282 = vpop.f32.mrb[0].mxu0
        %2283 = vdwg.mxu0
        %2284 = vmatprep.subr.bf16.mxu0 0
        %2285 = vmatpush1.bf16.msra.mxu0 %v1146
        %2286 = vmatprep.subr.bf16.mxu0 0
        %2287 = vmatpush1.bf16.msra.mxu0 %v1147
        %2288 = vmatprep.subr.bf16.mxu0 0
        %2289 = vmatpush1.bf16.msra.mxu0 %v1148
        %2290 = vmatprep.subr.bf16.mxu0 0
        %2291 = vmatpush1.bf16.msra.mxu0 %v1149
        %2292 = vmatprep.subr.bf16.mxu0 0
        %2293 = vmatpush1.bf16.msra.mxu0 %v1150
        %2294 = vmatprep.subr.bf16.mxu0 0
        %2295 = vmatpush1.bf16.msra.mxu0 %v1151
        %2296 = vmatprep.subr.bf16.mxu0 0
        %2297 = vmatpush1.bf16.msra.mxu0 %v1152
        %2298 = vmatprep.subr.bf16.mxu0 0
        %2299 = vmatpush1.bf16.msra.mxu0 %v1153
        %2300 = vmatprep.subr.bf16.mxu0 0
        %2301 = vmatpush1.bf16.msra.mxu0 0
        %2302 = vmatprep.subr.bf16.mxu0 0
        %2303 = vmatpush1.bf16.msra.mxu0 0
        %2304 = vmatprep.subr.bf16.mxu0 0
        %2305 = vmatpush1.bf16.msra.mxu0 0
        %2306 = vmatprep.subr.bf16.mxu0 0
        %2307 = vmatpush1.bf16.msra.mxu0 0
        %2308 = vmatprep.subr.bf16.mxu0 0
        %2309 = vmatpush1.bf16.msra.mxu0 0
        %2310 = vmatprep.subr.bf16.mxu0 0
        %2311 = vmatpush1.bf16.msra.mxu0 0
        %2312 = vmatprep.subr.bf16.mxu0 0
        %2313 = vmatpush1.bf16.msra.mxu0 0
        %2314 = vmatprep.subr.bf16.mxu0 0
        %2315 = vmatpush1.bf16.msra.mxu0 0
        %2316 = vmatprep.mubr.bf16.mxu0 0
        %2317 = vmatmul.mubr.bf16.gmra.mrb[0].mxu0 %v2033
        %v2318 = vpop.f32.mrb[0].mxu0
        %v2319 = vadd.f32 %v2279, %v2318
        %v2320 = vpop.f32.mrb[0].mxu0
        %v2321 = vpop.f32.mrb[0].mxu0
        %v2322 = vpop.f32.mrb[0].mxu0
        %2323 = vdwg.mxu0
        %v2324 = vadd.f32 %v2319, %v929
        %v2325 = vtanh.pop %v2324
        %v2326 = vpack.c.bf16 %v2325, %v2325
        %2327 = vmatprep.subr.bf16.mxu0 0
        %2328 = vmatpush1.bf16.msra.mxu0 %v1293
        %2329 = vmatprep.subr.bf16.mxu0 0
        %2330 = vmatpush1.bf16.msra.mxu0 %v1294
        %2331 = vmatprep.subr.bf16.mxu0 0
        %2332 = vmatpush1.bf16.msra.mxu0 %v1295
        %2333 = vmatprep.subr.bf16.mxu0 0
        %2334 = vmatpush1.bf16.msra.mxu0 %v1296
        %2335 = vmatprep.subr.bf16.mxu0 0
        %2336 = vmatpush1.bf16.msra.mxu0 %v1297
        %2337 = vmatprep.subr.bf16.mxu0 0
        %2338 = vmatpush1.bf16.msra.mxu0 %v1298
        %2339 = vmatprep.subr.bf16.mxu0 0
        %2340 = vmatpush1.bf16.msra.mxu0 %v1299
        %2341 = vmatprep.subr.bf16.mxu0 0
        %2342 = vmatpush1.bf16.msra.mxu0 %v1300
        %2343 = vmatprep.subr.bf16.mxu0 0
        %2344 = vmatpush1.bf16.msra.mxu0 0
        %2345 = vmatprep.subr.bf16.mxu0 0
        %2346 = vmatpush1.bf16.msra.mxu0 0
        %2347 = vmatprep.subr.bf16.mxu0 0
        %2348 = vmatpush1.bf16.msra.mxu0 0
        %2349 = vmatprep.subr.bf16.mxu0 0
        %2350 = vmatpush1.bf16.msra.mxu0 0
        %2351 = vmatprep.subr.bf16.mxu0 0
        %2352 = vmatpush1.bf16.msra.mxu0 0
        %2353 = vmatprep.subr.bf16.mxu0 0
        %2354 = vmatpush1.bf16.msra.mxu0 0
        %2355 = vmatprep.subr.bf16.mxu0 0
        %2356 = vmatpush1.bf16.msra.mxu0 0
        %2357 = vmatprep.subr.bf16.mxu0 0
        %2358 = vmatpush1.bf16.msra.mxu0 0
        %2359 = vmatprep.mubr.bf16.mxu0 0
        %2360 = vmatmul.mubr.bf16.gmra.mrb[0].mxu0 %v2326
        %v2361 = vpop.f32.mrb[0].mxu0
        %v2362 = vadd.f32 %v936, %v2361
        %v2363 = vpop.f32.mrb[0].mxu0
        %v2364 = vpop.f32.mrb[0].mxu0
        %v2365 = vpop.f32.mrb[0].mxu0
        %2366 = vdwg.mxu0
        %s2367 = scalar_lea.vmem [#allocation3], 48
        %v2368 = vld [vmem:[%s2367] sm:$0xff]
        %vm2369 = vcmp.ne.f32.partialorder %v2368, %v2368
        %v2370 = vsel %vm2369, %v2362, %v2368
        %s2371 = scalar_lea.vmem [#allocation4], 48
        %2372 = vst [vmem:[%s2371] sm:$0xff] %v2370
        %v2373 = vpack.c.bf16 %v2370, %v2370
        %2374 = vmatprep.subr.bf16.mxu0 0
        %2375 = vmatpush1.bf16.msra.mxu0 %v978
        %2376 = vmatprep.subr.bf16.mxu0 0
        %2377 = vmatpush1.bf16.msra.mxu0 %v979
        %2378 = vmatprep.subr.bf16.mxu0 0
        %2379 = vmatpush1.bf16.msra.mxu0 %v980
        %2380 = vmatprep.subr.bf16.mxu0 0
        %2381 = vmatpush1.bf16.msra.mxu0 %v981
        %2382 = vmatprep.subr.bf16.mxu0 0
        %2383 = vmatpush1.bf16.msra.mxu0 %v982
        %2384 = vmatprep.subr.bf16.mxu0 0
        %2385 = vmatpush1.bf16.msra.mxu0 %v983
        %2386 = vmatprep.subr.bf16.mxu0 0
        %2387 = vmatpush1.bf16.msra.mxu0 %v984
        %2388 = vmatprep.subr.bf16.mxu0 0
        %2389 = vmatpush1.bf16.msra.mxu0 %v985
        %2390 = vmatprep.subr.bf16.mxu0 0
        %2391 = vmatpush1.bf16.msra.mxu0 0
        %2392 = vmatprep.subr.bf16.mxu0 0
        %2393 = vmatpush1.bf16.msra.mxu0 0
        %2394 = vmatprep.subr.bf16.mxu0 0
        %2395 = vmatpush1.bf16.msra.mxu0 0
        %2396 = vmatprep.subr.bf16.mxu0 0
        %2397 = vmatpush1.bf16.msra.mxu0 0
        %2398 = vmatprep.subr.bf16.mxu0 0
        %2399 = vmatpush1.bf16.msra.mxu0 0
        %2400 = vmatprep.subr.bf16.mxu0 0
        %2401 = vmatpush1.bf16.msra.mxu0 0
        %2402 = vmatprep.subr.bf16.mxu0 0
        %2403 = vmatpush1.bf16.msra.mxu0 0
        %2404 = vmatprep.subr.bf16.mxu0 0
        %2405 = vmatpush1.bf16.msra.mxu0 0
        %2406 = vmatprep.mubr.bf16.mxu0 0
        %2407 = vmatmul.mubr.bf16.gmra.mrb[0].mxu0 %v2373
        %v2408 = vpop.f32.mrb[0].mxu0
        %v2409 = vadd.f32 0.0, %v2408
        %v2410 = vpop.f32.mrb[0].mxu0
        %v2411 = vpop.f32.mrb[0].mxu0
        %v2412 = vpop.f32.mrb[0].mxu0
        %2413 = vdwg.mxu0
        %2414 = vmatprep.subr.bf16.mxu0 0
        %2415 = vmatpush1.bf16.msra.mxu0 %v1130
        %2416 = vmatprep.subr.bf16.mxu0 0
        %2417 = vmatpush1.bf16.msra.mxu0 %v1131
        %2418 = vmatprep.subr.bf16.mxu0 0
        %2419 = vmatpush1.bf16.msra.mxu0 %v1132
        %2420 = vmatprep.subr.bf16.mxu0 0
        %2421 = vmatpush1.bf16.msra.mxu0 %v1133
        %2422 = vmatprep.subr.bf16.mxu0 0
        %2423 = vmatpush1.bf16.msra.mxu0 %v1134
        %2424 = vmatprep.subr.bf16.mxu0 0
        %2425 = vmatpush1.bf16.msra.mxu0 %v1135
        %2426 = vmatprep.subr.bf16.mxu0 0
        %2427 = vmatpush1.bf16.msra.mxu0 %v1136
        %2428 = vmatprep.subr.bf16.mxu0 0
        %2429 = vmatpush1.bf16.msra.mxu0 %v1137
        %2430 = vmatprep.subr.bf16.mxu0 0
        %2431 = vmatpush1.bf16.msra.mxu0 %v1138
        %2432 = vmatprep.subr.bf16.mxu0 0
        %2433 = vmatpush1.bf16.msra.mxu0 %v1139
        %2434 = vmatprep.subr.bf16.mxu0 0
        %2435 = vmatpush1.bf16.msra.mxu0 %v1140
        %2436 = vmatprep.subr.bf16.mxu0 0
        %2437 = vmatpush1.bf16.msra.mxu0 %v1141
        %2438 = vmatprep.subr.bf16.mxu0 0
        %2439 = vmatpush1.bf16.msra.mxu0 %v1142
        %2440 = vmatprep.subr.bf16.mxu0 0
        %2441 = vmatpush1.bf16.msra.mxu0 %v1143
        %2442 = vmatprep.subr.bf16.mxu0 0
        %2443 = vmatpush1.bf16.msra.mxu0 %v1144
        %2444 = vmatprep.subr.bf16.mxu0 0
        %2445 = vmatpush1.bf16.msra.mxu0 %v1145
        %2446 = vmatprep.mubr.bf16.mxu0 %v2033
        %2447 = vmatmul.mubr.bf16.gmra.mrb[0].mxu0 %v1863
        %v2448 = vpop.f32.mrb[0].mxu0
        %v2449 = vadd.f32 %v2409, %v2448
        %v2450 = vpop.f32.mrb[0].mxu0
        %v2451 = vpop.f32.mrb[0].mxu0
        %v2452 = vpop.f32.mrb[0].mxu0
        %2453 = vdwg.mxu0
        %2454 = vmatprep.subr.bf16.mxu0 0
        %2455 = vmatpush1.bf16.msra.mxu0 %v1146
        %2456 = vmatprep.subr.bf16.mxu0 0
        %2457 = vmatpush1.bf16.msra.mxu0 %v1147
        %2458 = vmatprep.subr.bf16.mxu0 0
        %2459 = vmatpush1.bf16.msra.mxu0 %v1148
        %2460 = vmatprep.subr.bf16.mxu0 0
        %2461 = vmatpush1.bf16.msra.mxu0 %v1149
        %2462 = vmatprep.subr.bf16.mxu0 0
        %2463 = vmatpush1.bf16.msra.mxu0 %v1150
        %2464 = vmatprep.subr.bf16.mxu0 0
        %2465 = vmatpush1.bf16.msra.mxu0 %v1151
        %2466 = vmatprep.subr.bf16.mxu0 0
        %2467 = vmatpush1.bf16.msra.mxu0 %v1152
        %2468 = vmatprep.subr.bf16.mxu0 0
        %2469 = vmatpush1.bf16.msra.mxu0 %v1153
        %2470 = vmatprep.subr.bf16.mxu0 0
        %2471 = vmatpush1.bf16.msra.mxu0 0
        %2472 = vmatprep.subr.bf16.mxu0 0
        %2473 = vmatpush1.bf16.msra.mxu0 0
        %2474 = vmatprep.subr.bf16.mxu0 0
        %2475 = vmatpush1.bf16.msra.mxu0 0
        %2476 = vmatprep.subr.bf16.mxu0 0
        %2477 = vmatpush1.bf16.msra.mxu0 0
        %2478 = vmatprep.subr.bf16.mxu0 0
        %2479 = vmatpush1.bf16.msra.mxu0 0
        %2480 = vmatprep.subr.bf16.mxu0 0
        %2481 = vmatpush1.bf16.msra.mxu0 0
        %2482 = vmatprep.subr.bf16.mxu0 0
        %2483 = vmatpush1.bf16.msra.mxu0 0
        %2484 = vmatprep.subr.bf16.mxu0 0
        %2485 = vmatpush1.bf16.msra.mxu0 0
        %2486 = vmatprep.mubr.bf16.mxu0 0
        %2487 = vmatmul.mubr.bf16.gmra.mrb[0].mxu0 %v2203
        %v2488 = vpop.f32.mrb[0].mxu0
        %v2489 = vadd.f32 %v2449, %v2488
        %v2490 = vpop.f32.mrb[0].mxu0
        %v2491 = vpop.f32.mrb[0].mxu0
        %v2492 = vpop.f32.mrb[0].mxu0
        %2493 = vdwg.mxu0
        %v2494 = vadd.f32 %v2489, %v929
        %v2495 = vtanh.pop %v2494
        %v2496 = vpack.c.bf16 %v2495, %v2495
        %2497 = vmatprep.subr.bf16.mxu0 0
        %2498 = vmatpush1.bf16.msra.mxu0 %v1293
        %2499 = vmatprep.subr.bf16.mxu0 0
        %2500 = vmatpush1.bf16.msra.mxu0 %v1294
        %2501 = vmatprep.subr.bf16.mxu0 0
        %2502 = vmatpush1.bf16.msra.mxu0 %v1295
        %2503 = vmatprep.subr.bf16.mxu0 0
        %2504 = vmatpush1.bf16.msra.mxu0 %v1296
        %2505 = vmatprep.subr.bf16.mxu0 0
        %2506 = vmatpush1.bf16.msra.mxu0 %v1297
        %2507 = vmatprep.subr.bf16.mxu0 0
        %2508 = vmatpush1.bf16.msra.mxu0 %v1298
        %2509 = vmatprep.subr.bf16.mxu0 0
        %2510 = vmatpush1.bf16.msra.mxu0 %v1299
        %2511 = vmatprep.subr.bf16.mxu0 0
        %2512 = vmatpush1.bf16.msra.mxu0 %v1300
        %2513 = vmatprep.subr.bf16.mxu0 0
        %2514 = vmatpush1.bf16.msra.mxu0 0
        %2515 = vmatprep.subr.bf16.mxu0 0
        %2516 = vmatpush1.bf16.msra.mxu0 0
        %2517 = vmatprep.subr.bf16.mxu0 0
        %2518 = vmatpush1.bf16.msra.mxu0 0
        %2519 = vmatprep.subr.bf16.mxu0 0
        %2520 = vmatpush1.bf16.msra.mxu0 0
        %2521 = vmatprep.subr.bf16.mxu0 0
        %2522 = vmatpush1.bf16.msra.mxu0 0
        %2523 = vmatprep.subr.bf16.mxu0 0
        %2524 = vmatpush1.bf16.msra.mxu0 0
        %2525 = vmatprep.subr.bf16.mxu0 0
        %2526 = vmatpush1.bf16.msra.mxu0 0
        %2527 = vmatprep.subr.bf16.mxu0 0
        %2528 = vmatpush1.bf16.msra.mxu0 0
        %2529 = vmatprep.mubr.bf16.mxu0 0
        %2530 = vmatmul.mubr.bf16.gmra.mrb[0].mxu0 %v2496
        %v2531 = vpop.f32.mrb[0].mxu0
        %v2532 = vadd.f32 %v936, %v2531
        %v2533 = vpop.f32.mrb[0].mxu0
        %v2534 = vpop.f32.mrb[0].mxu0
        %v2535 = vpop.f32.mrb[0].mxu0
        %2536 = vdwg.mxu0
        %s2537 = scalar_lea.vmem [#allocation3], 56
        %v2538 = vld [vmem:[%s2537] sm:$0xff]
        %vm2539 = vcmp.ne.f32.partialorder %v2538, %v2538
        %v2540 = vsel %vm2539, %v2532, %v2538
        %s2541 = scalar_lea.vmem [#allocation4], 56
        %2542 = vst [vmem:[%s2541] sm:$0xff] %v2540
        %2543 = vst [vmem:[#allocation2] sm:$0xff] %v2030
        %2544 = vst [vmem:[#allocation2 + $0x8] sm:$0xff] %v2200
        %2545 = vst [vmem:[#allocation2 + $0x10] sm:$0xff] %v2370
        %2546 = vst [vmem:[#allocation2 + $0x18] sm:$0xff] %v2540
        %v2547 = vld [vmem:[#allocation4] sm:$0x1]
        %v2548 = vld [vmem:[#allocation4 + $0x8] sm:$0x1]
        %v2549 = vld [vmem:[#allocation4 + $0x10] sm:$0x1]
        %v2550 = vld [vmem:[#allocation4 + $0x18] sm:$0x1]
        %v2551 = vld [vmem:[#allocation4 + $0x20] sm:$0x1]
        %v2552 = vld [vmem:[#allocation4 + $0x28] sm:$0x1]
        %v2553 = vld [vmem:[#allocation4 + $0x30] sm:$0x1]
        %v2554 = vld [vmem:[#allocation4 + $0x38] sm:$0x1]
        %v2563 = vrot.slane %v2548, 7
        %vm2564 = vcmask 1041409
        %v2565 = vsel %vm2564, %v2563, %v2547
        %v2566 = vrot.slane %v2549, 6
        %vm2567 = vcmask 1042434
        %v2568 = vsel %vm2567, %v2566, %v2565
        %v2569 = vrot.slane %v2550, 5
        %vm2570 = vcmask 1043459
        %v2571 = vsel %vm2570, %v2569, %v2568
        %v2572 = vrot.slane %v2551, 4
        %vm2573 = vcmask 1044484
        %v2574 = vsel %vm2573, %v2572, %v2571
        %v2575 = vrot.slane %v2552, 3
        %vm2576 = vcmask 1045509
        %v2577 = vsel %vm2576, %v2575, %v2574
        %v2578 = vrot.slane %v2553, 2
        %vm2579 = vcmask 1046534
        %v2580 = vsel %vm2579, %v2578, %v2577
        %v2581 = vrot.slane %v2554, 1
        %vm2582 = vcmask 1047559
        %v2583 = vsel %vm2582, %v2581, %v2580
        %2585 = vst [vmem:[%s289] sm:$0xff] %v2583
        %v2586 = vld [vmem:[#allocation4 + $0x1] sm:$0x1]
        %v2587 = vld [vmem:[#allocation4 + $0x9] sm:$0x1]
        %v2588 = vld [vmem:[#allocation4 + $0x11] sm:$0x1]
        %v2589 = vld [vmem:[#allocation4 + $0x19] sm:$0x1]
        %v2590 = vld [vmem:[#allocation4 + $0x21] sm:$0x1]
        %v2591 = vld [vmem:[#allocation4 + $0x29] sm:$0x1]
        %v2592 = vld [vmem:[#allocation4 + $0x31] sm:$0x1]
        %v2593 = vld [vmem:[#allocation4 + $0x39] sm:$0x1]
        %v2602 = vrot.slane %v2587, 7
        %v2603 = vsel %vm2564, %v2602, %v2586
        %v2604 = vrot.slane %v2588, 6
        %v2605 = vsel %vm2567, %v2604, %v2603
        %v2606 = vrot.slane %v2589, 5
        %v2607 = vsel %vm2570, %v2606, %v2605
        %v2608 = vrot.slane %v2590, 4
        %v2609 = vsel %vm2573, %v2608, %v2607
        %v2610 = vrot.slane %v2591, 3
        %v2611 = vsel %vm2576, %v2610, %v2609
        %v2612 = vrot.slane %v2592, 2
        %v2613 = vsel %vm2579, %v2612, %v2611
        %v2614 = vrot.slane %v2593, 1
        %v2615 = vsel %vm2582, %v2614, %v2613
        %s2617 = scalar_lea.vmem %s289, 8 [#allocation11]
        %2618 = vst [vmem:[%s2617] sm:$0xff] %v2615
        %v2619 = vld [vmem:[#allocation4 + $0x2] sm:$0x1]
        %v2620 = vld [vmem:[#allocation4 + $0xa] sm:$0x1]
        %v2621 = vld [vmem:[#allocation4 + $0x12] sm:$0x1]
        %v2622 = vld [vmem:[#allocation4 + $0x1a] sm:$0x1]
        %v2623 = vld [vmem:[#allocation4 + $0x22] sm:$0x1]
        %v2624 = vld [vmem:[#allocation4 + $0x2a] sm:$0x1]
        %v2625 = vld [vmem:[#allocation4 + $0x32] sm:$0x1]
        %v2626 = vld [vmem:[#allocation4 + $0x3a] sm:$0x1]
        %v2635 = vrot.slane %v2620, 7
        %v2636 = vsel %vm2564, %v2635, %v2619
        %v2637 = vrot.slane %v2621, 6
        %v2638 = vsel %vm2567, %v2637, %v2636
        %v2639 = vrot.slane %v2622, 5
        %v2640 = vsel %vm2570, %v2639, %v2638
        %v2641 = vrot.slane %v2623, 4
        %v2642 = vsel %vm2573, %v2641, %v2640
        %v2643 = vrot.slane %v2624, 3
        %v2644 = vsel %vm2576, %v2643, %v2642
        %v2645 = vrot.slane %v2625, 2
        %v2646 = vsel %vm2579, %v2645, %v2644
        %v2647 = vrot.slane %v2626, 1
        %v2648 = vsel %vm2582, %v2647, %v2646
        %s2650 = scalar_lea.vmem %s289, 16 [#allocation11]
        %2651 = vst [vmem:[%s2650] sm:$0xff] %v2648
        %v2652 = vld [vmem:[#allocation4 + $0x3] sm:$0x1]
        %v2653 = vld [vmem:[#allocation4 + $0xb] sm:$0x1]
        %v2654 = vld [vmem:[#allocation4 + $0x13] sm:$0x1]
        %v2655 = vld [vmem:[#allocation4 + $0x1b] sm:$0x1]
        %v2656 = vld [vmem:[#allocation4 + $0x23] sm:$0x1]
        %v2657 = vld [vmem:[#allocation4 + $0x2b] sm:$0x1]
        %v2658 = vld [vmem:[#allocation4 + $0x33] sm:$0x1]
        %v2659 = vld [vmem:[#allocation4 + $0x3b] sm:$0x1]
        %v2668 = vrot.slane %v2653, 7
        %v2669 = vsel %vm2564, %v2668, %v2652
        %v2670 = vrot.slane %v2654, 6
        %v2671 = vsel %vm2567, %v2670, %v2669
        %v2672 = vrot.slane %v2655, 5
        %v2673 = vsel %vm2570, %v2672, %v2671
        %v2674 = vrot.slane %v2656, 4
        %v2675 = vsel %vm2573, %v2674, %v2673
        %v2676 = vrot.slane %v2657, 3
        %v2677 = vsel %vm2576, %v2676, %v2675
        %v2678 = vrot.slane %v2658, 2
        %v2679 = vsel %vm2579, %v2678, %v2677
        %v2680 = vrot.slane %v2659, 1
        %v2681 = vsel %vm2582, %v2680, %v2679
        %s2683 = scalar_lea.vmem %s289, 24 [#allocation11]
        %2684 = vst [vmem:[%s2683] sm:$0xff] %v2681
        %v2685 = vld [vmem:[#allocation4 + $0x4] sm:$0x1]
        %v2686 = vld [vmem:[#allocation4 + $0xc] sm:$0x1]
        %v2687 = vld [vmem:[#allocation4 + $0x14] sm:$0x1]
        %v2688 = vld [vmem:[#allocation4 + $0x1c] sm:$0x1]
        %v2689 = vld [vmem:[#allocation4 + $0x24] sm:$0x1]
        %v2690 = vld [vmem:[#allocation4 + $0x2c] sm:$0x1]
        %v2691 = vld [vmem:[#allocation4 + $0x34] sm:$0x1]
        %v2692 = vld [vmem:[#allocation4 + $0x3c] sm:$0x1]
        %v2701 = vrot.slane %v2686, 7
        %v2702 = vsel %vm2564, %v2701, %v2685
        %v2703 = vrot.slane %v2687, 6
        %v2704 = vsel %vm2567, %v2703, %v2702
        %v2705 = vrot.slane %v2688, 5
        %v2706 = vsel %vm2570, %v2705, %v2704
        %v2707 = vrot.slane %v2689, 4
        %v2708 = vsel %vm2573, %v2707, %v2706
        %v2709 = vrot.slane %v2690, 3
        %v2710 = vsel %vm2576, %v2709, %v2708
        %v2711 = vrot.slane %v2691, 2
        %v2712 = vsel %vm2579, %v2711, %v2710
        %v2713 = vrot.slane %v2692, 1
        %v2714 = vsel %vm2582, %v2713, %v2712
        %s2716 = scalar_lea.vmem %s289, 32 [#allocation11]
        %2717 = vst [vmem:[%s2716] sm:$0xff] %v2714
        %v2718 = vld [vmem:[#allocation4 + $0x5] sm:$0x1]
        %v2719 = vld [vmem:[#allocation4 + $0xd] sm:$0x1]
        %v2720 = vld [vmem:[#allocation4 + $0x15] sm:$0x1]
        %v2721 = vld [vmem:[#allocation4 + $0x1d] sm:$0x1]
        %v2722 = vld [vmem:[#allocation4 + $0x25] sm:$0x1]
        %v2723 = vld [vmem:[#allocation4 + $0x2d] sm:$0x1]
        %v2724 = vld [vmem:[#allocation4 + $0x35] sm:$0x1]
        %v2725 = vld [vmem:[#allocation4 + $0x3d] sm:$0x1]
        %v2734 = vrot.slane %v2719, 7
        %v2735 = vsel %vm2564, %v2734, %v2718
        %v2736 = vrot.slane %v2720, 6
        %v2737 = vsel %vm2567, %v2736, %v2735
        %v2738 = vrot.slane %v2721, 5
        %v2739 = vsel %vm2570, %v2738, %v2737
        %v2740 = vrot.slane %v2722, 4
        %v2741 = vsel %vm2573, %v2740, %v2739
        %v2742 = vrot.slane %v2723, 3
        %v2743 = vsel %vm2576, %v2742, %v2741
        %v2744 = vrot.slane %v2724, 2
        %v2745 = vsel %vm2579, %v2744, %v2743
        %v2746 = vrot.slane %v2725, 1
        %v2747 = vsel %vm2582, %v2746, %v2745
        %s2749 = scalar_lea.vmem %s289, 40 [#allocation11]
        %2750 = vst [vmem:[%s2749] sm:$0xff] %v2747
        %v2751 = vld [vmem:[#allocation4 + $0x6] sm:$0x1]
        %v2752 = vld [vmem:[#allocation4 + $0xe] sm:$0x1]
        %v2753 = vld [vmem:[#allocation4 + $0x16] sm:$0x1]
        %v2754 = vld [vmem:[#allocation4 + $0x1e] sm:$0x1]
        %v2755 = vld [vmem:[#allocation4 + $0x26] sm:$0x1]
        %v2756 = vld [vmem:[#allocation4 + $0x2e] sm:$0x1]
        %v2757 = vld [vmem:[#allocation4 + $0x36] sm:$0x1]
        %v2758 = vld [vmem:[#allocation4 + $0x3e] sm:$0x1]
        %v2767 = vrot.slane %v2752, 7
        %v2768 = vsel %vm2564, %v2767, %v2751
        %v2769 = vrot.slane %v2753, 6
        %v2770 = vsel %vm2567, %v2769, %v2768
        %v2771 = vrot.slane %v2754, 5
        %v2772 = vsel %vm2570, %v2771, %v2770
        %v2773 = vrot.slane %v2755, 4
        %v2774 = vsel %vm2573, %v2773, %v2772
        %v2775 = vrot.slane %v2756, 3
        %v2776 = vsel %vm2576, %v2775, %v2774
        %v2777 = vrot.slane %v2757, 2
        %v2778 = vsel %vm2579, %v2777, %v2776
        %v2779 = vrot.slane %v2758, 1
        %v2780 = vsel %vm2582, %v2779, %v2778
        %s2782 = scalar_lea.vmem %s289, 48 [#allocation11]
        %2783 = vst [vmem:[%s2782] sm:$0xff] %v2780
        %v2784 = vld [vmem:[#allocation4 + $0x7] sm:$0x1]
        %v2785 = vld [vmem:[#allocation4 + $0xf] sm:$0x1]
        %v2786 = vld [vmem:[#allocation4 + $0x17] sm:$0x1]
        %v2787 = vld [vmem:[#allocation4 + $0x1f] sm:$0x1]
        %v2788 = vld [vmem:[#allocation4 + $0x27] sm:$0x1]
        %v2789 = vld [vmem:[#allocation4 + $0x2f] sm:$0x1]
        %v2790 = vld [vmem:[#allocation4 + $0x37] sm:$0x1]
        %v2791 = vld [vmem:[#allocation4 + $0x3f] sm:$0x1]
        %v2800 = vrot.slane %v2785, 7
        %v2801 = vsel %vm2564, %v2800, %v2784
        %v2802 = vrot.slane %v2786, 6
        %v2803 = vsel %vm2567, %v2802, %v2801
        %v2804 = vrot.slane %v2787, 5
        %v2805 = vsel %vm2570, %v2804, %v2803
        %v2806 = vrot.slane %v2788, 4
        %v2807 = vsel %vm2573, %v2806, %v2805
        %v2808 = vrot.slane %v2789, 3
        %v2809 = vsel %vm2576, %v2808, %v2807
        %v2810 = vrot.slane %v2790, 2
        %v2811 = vsel %vm2579, %v2810, %v2809
        %v2812 = vrot.slane %v2791, 1
        %v2813 = vsel %vm2582, %v2812, %v2811
        %s2815 = scalar_lea.vmem %s289, 56 [#allocation11]
        %2816 = vst [vmem:[%s2815] sm:$0xff] %v2813
        %s2817 = sand.u32 %s157, 1
        %s2818 = scalar_lea.sflag [#allocation7], %s2817
        %s2819 = sand.u32 %s157, 1
        %s2820 = smul.addr %s2819, 64
        %s2821 = scalar_lea.vmem [#allocation11], %s2820
        // Predicated region
        $region57: #{tpu_custom_call.1} parent=39 // pred_check
          %p2822 = pneg %p167
        $region58: #{tpu_custom_call.1} parent=39 // pred_check_branch
          %2824 = sbr.rel (%p2822) target = $region60
        $region59: #{tpu_custom_call.1} parent=39 // pred_region
          %s2825 = smul.u32 8, %s27
          %s2827 = ssub.s32 1024, 1024
          %2828 = vsyncadd %s2818, %s2827
          %s2829 = smul.addr %s2825, 3
          %s2830 = sadd.s32 %s28, %s2829
          %s2831 = smul.addr %s2830, 128
          %s2832 = scalar_lea.hbm %s5, %s2831
          %s2833 = sshll.u32 %s2821, 4
          %s2834 = int_to_ptr.vmem [resolvable:$true] %s2833
          %2839 = dma.vmem_to_hbm [thread:$0]  %s2834, 1024, %s2832, %s2818, 128, 384, 8
        $region60: #{tpu_custom_call.1} parent=39 // pred_fallthru
          _
      $region40: #{tpu_custom_call.1} parent=5 // pred_fallthru
        _
      %p2840 = scmp.le.s32.totalorder 2, %s18
      // Predicated region
      $region61: #{tpu_custom_call.1} parent=5 // pred_check
        %p2841 = pneg %p2840
      $region62: #{tpu_custom_call.1} parent=5 // pred_check_branch
        %2843 = sbr.rel (%p2841) target = $region64
      $region63: #{tpu_custom_call.1} parent=5 // pred_region
        %s2844 = ssub.s32 %s18, 2
        // Predicated region
        $region65: #{tpu_custom_call.1} parent=63 // pred_check
          %p2845 = pneg %p173
        $region66: #{tpu_custom_call.1} parent=63 // pred_check_branch
          %2847 = sbr.rel (%p2845) target = $region68
        $region67: #{tpu_custom_call.1} parent=63 // pred_region
          %s2848 = sand.u32 %s158, 1
          %s2849 = scalar_lea.sflag [#allocation7], %s2848
          %s2850 = sand.u32 %s158, 1
          %s2851 = smul.addr %s2850, 64
          %s2852 = scalar_lea.vmem [#allocation11], %s2851
          %2853 = dma.done %s2849, 1024
        $region68: #{tpu_custom_call.1} parent=63 // pred_fallthru
          _
      $region64: #{tpu_custom_call.1} parent=5 // pred_fallthru
        _
    $region6: #{tpu_custom_call.1} parent=1 // loop_footer
      %s22 = sadd.s32 1, %s18
    $region7: #{tpu_custom_call.1} parent=1 // loop_footer_branch
      %17 = sbr.rel target = $region3
    $region8: #{tpu_custom_call.1} parent=1 // loop_exit
      _
    %2854 = vsyncpa [#allocation6], 1
    %s2855 = scalar_lea.sflag [#allocation6], 1
    %2856 = vsyncpa %s2855, 1
    %2857 = vsyncpa [#allocation9], 1
    %2858 = vsyncpa [#allocation7], 1
    %s2859 = scalar_lea.sflag [#allocation7], 1
    %2860 = vsyncpa %s2859, 1

</llo_original>
